<compile_context>
chip_gen: v7x
topology: tpu7x:2x2x1
jax: 0.10.0
libtpu: 0.0.40
codegen_flags: <defaults>
</compile_context>

<pallas_src>
import functools

import jax
import jax.numpy as jnp
from jax.experimental import pallas as pl
from jax.experimental.pallas import tpu as pltpu


# ----------------------------------------------------------------------------
# Fused kernel: conv1 -> conv2 -> (torch-NCHW flatten) -> post_flatten linear.
#   patches_ref : (N*64, 36) f32   im2col of the NCHW input for conv1 (rows = n, oh, ow)
#   w1_ref/m1_ref : (36, 32) f32 / (1, 36, 32) int8     (task slab picked by BlockSpec)
#   w2_ref/m2_ref : (9, 32, 32) f32 / (1, 9, 32, 32) int8   per kernel-offset (kh,kw) blocks
#   w3_ref/m3_ref : (32, 512) f32 / (1, 32, 512) int8       w3cols[c, p*32+o] = w3[o, c*16+p]
#   out_ref : (N, 32) f32
# ----------------------------------------------------------------------------
def _fused_forward_kernel(task_ref, patches_ref, w1_ref, m1_ref, w2_ref,
                          m2_ref, w3_ref, m3_ref, out_ref, *, n_batch):
    del task_ref  # task selection already applied by the mask BlockSpec index_maps
    f32 = jnp.float32
    bf16 = jnp.bfloat16
    M1 = n_batch * 64   # conv1 output rows: (n, ih, iw) over an 8x8 map, channels-last
    M2 = n_batch * 16   # conv2 output rows: (n, oh, ow) over a 4x4 map, channels-last

    # ---------------- conv1: relu(patches @ (w1 * m1)) ----------------
    w1m = w1_ref[...] * m1_ref[0].astype(f32)                      # mask apply (VPU, f32)
    h1 = jnp.dot(patches_ref[...].astype(bf16), w1m.astype(bf16),
                 preferred_element_type=f32)                       # (M1, 32) on the MXU
    h1 = jnp.maximum(h1, 0.0)

    # ---------------- conv2 (k=3, s=2, p=1) via 0/1 selection matmuls ----------------
    # S_q[r, s] = 1 iff row s of h1 is the (kh,kw) tap feeding output row r; built from
    # 2-D iotas so no extra HBM traffic is needed for the gather.
    r_idx = jax.lax.broadcasted_iota(jnp.int32, (M2, M1), 0)
    s_idx = jax.lax.broadcasted_iota(jnp.int32, (M2, M1), 1)
    same_n = (r_idx >> 4) == (s_idx >> 6)
    oh = (r_idx & 15) >> 2
    ow = r_idx & 3
    ih = (s_idx & 63) >> 3
    iw = s_idx & 7

    w2m = (w2_ref[...] * m2_ref[0].astype(f32)).astype(bf16)       # (9, 32, 32)

    acc2 = jnp.zeros((M2, 32), dtype=f32)
    for kh in range(3):
        for kw in range(3):
            q = kh * 3 + kw
            sel = same_n & (ih == 2 * oh + (kh - 1)) & (iw == 2 * ow + (kw - 1))
            s_q = jnp.where(sel, 1.0, 0.0)                          # exact row-gather matrix
            g = jnp.dot(s_q, h1, preferred_element_type=f32)        # (M2, 32), f32 (exact)
            acc2 = acc2 + jnp.dot(g.astype(bf16), w2m[q],
                                  preferred_element_type=f32)
    h2 = jnp.maximum(acc2, 0.0)                                     # (M2, 32)

    # ---------------- post_flatten: masked linear over the torch-NCHW flatten ----------------
    # The NCHW flatten order is baked into w3cols at init; instead of reshaping h2 in-kernel,
    # compute the full (row, col-block) product, keep the diagonal block p(row) == p(col-block),
    # then collapse column blocks and sum the 16 spatial rows per sample with selection matmuls.
    w3m = (w3_ref[...] * m3_ref[0].astype(f32)).astype(bf16)        # (32, 512)
    z = jnp.dot(h2.astype(bf16), w3m, preferred_element_type=f32)   # (M2, 512)

    zr = jax.lax.broadcasted_iota(jnp.int32, (M2, 512), 0)
    zc = jax.lax.broadcasted_iota(jnp.int32, (M2, 512), 1)
    z = jnp.where((zr & 15) == (zc >> 5), z, 0.0)                   # keep block p(row) only

    kr = jax.lax.broadcasted_iota(jnp.int32, (512, 32), 0)
    kc = jax.lax.broadcasted_iota(jnp.int32, (512, 32), 1)
    csum = jnp.where((kr & 31) == kc, 1.0, 0.0)                     # fold the 16 column blocks
    g3 = jnp.dot(z, csum, preferred_element_type=f32)               # (M2, 32)

    ar = jax.lax.broadcasted_iota(jnp.int32, (n_batch, M2), 0)
    ac = jax.lax.broadcasted_iota(jnp.int32, (n_batch, M2), 1)
    asel = jnp.where(ar == (ac >> 4), 1.0, 0.0)                     # sum 16 rows per sample
    out_ref[...] = jnp.dot(asel, g3, preferred_element_type=f32).astype(out_ref.dtype)


# ----------------------------------------------------------------------------
# Wrapper glue: im2col for conv1 only (tiny NCHW input); everything else in-kernel.
# Feature order is Cin-major then (kh, kw) to match weight.reshape(Cout, Cin*3*3).
# ----------------------------------------------------------------------------
def _im2col_nchw(x, k, stride, pad):
    N, C, H, W = x.shape
    xp = jnp.pad(x, ((0, 0), (0, 0), (pad, pad), (pad, pad)))
    OH = (H + 2 * pad - k) // stride + 1
    OW = (W + 2 * pad - k) // stride + 1
    cols = []
    for kh in range(k):
        for kw in range(k):
            cols.append(xp[:, :, kh:kh + stride * OH:stride, kw:kw + stride * OW:stride])
    patches = jnp.stack(cols, axis=2)                   # (N, C, 9, OH, OW)
    patches = patches.reshape(N, C * k * k, OH, OW)
    patches = patches.transpose(0, 2, 3, 1).reshape(N * OH * OW, C * k * k)
    return patches, OH, OW


def masked_common_conv_forward(params, x, task_id):
    """x: (N, 4, 16, 16) NCHW, task_id: int scalar. Returns (N, 32) f32."""
    x = x.astype(jnp.float32)                           # x.float()
    N = x.shape[0]
    patches1, _, _ = _im2col_nchw(x, 3, 2, 1)           # (N*64, 36) -- remaining XLA glue
    task = jnp.asarray(task_id, dtype=jnp.int32).reshape((1,))

    w1t, m1t = params["w1t"], params["m1t"]
    w2b, m2b = params["w2b"], params["m2b"]
    w3c, m3c = params["w3c"], params["m3c"]
    M1, M2, C, O16 = N * 64, N * 16, 32, 512

    grid_spec = pltpu.PrefetchScalarGridSpec(
        num_scalar_prefetch=1,
        grid=(1,),
        in_specs=[
            pl.BlockSpec((M1, 36), lambda i, t: (0, 0)),
            pl.BlockSpec((36, C), lambda i, t: (0, 0)),
            pl.BlockSpec((1, 36, C), lambda i, t: (t[0], 0, 0)),        # task slab
            pl.BlockSpec((9, C, C), lambda i, t: (0, 0, 0)),
            pl.BlockSpec((1, 9, C, C), lambda i, t: (t[0], 0, 0, 0)),   # task slab
            pl.BlockSpec((C, O16), lambda i, t: (0, 0)),
            pl.BlockSpec((1, C, O16), lambda i, t: (t[0], 0, 0)),       # task slab
        ],
        out_specs=pl.BlockSpec((N, 32), lambda i, t: (0, 0)),
    )

    flops = (2 * M1 * 36 * C
             + 9 * (2 * M2 * M1 * C + 2 * M2 * C * C)
             + 2 * M2 * C * O16 + 2 * M2 * O16 * 32 + 2 * N * M2 * 32)
    bytes_accessed = (M1 * 36 * 4 + 36 * C * 4 + 36 * C
                      + 9 * C * C * 4 + 9 * C * C
                      + C * O16 * 4 + C * O16 + N * 32 * 4 + 4)

    return pl.pallas_call(
        functools.partial(_fused_forward_kernel, n_batch=N),
        out_shape=jax.ShapeDtypeStruct((N, 32), jnp.float32),
        grid_spec=grid_spec,
        compiler_params=pltpu.CompilerParams(dimension_semantics=("arbitrary",)),
        cost_estimate=pl.CostEstimate(flops=flops, transcendentals=0,
                                      bytes_accessed=bytes_accessed),
    )(task, patches1, w1t, m1t, w2b, m2b, w3c, m3c)


# ----------------------------------------------------------------------------
# Deterministic synthetic parameters, with kernel-friendly layouts built once at init.
# ----------------------------------------------------------------------------
def init_params(key, *, in_channels=4, hidden_channels=32, output_size=32, num_tasks=3):
    assert hidden_channels == 32 and output_size == 32, "kernel is specialized to 32/32"
    ks = jax.random.split(key, 6)
    w1 = 0.1 * jax.random.normal(ks[0], (hidden_channels, in_channels, 3, 3), jnp.float32)
    w2 = 0.1 * jax.random.normal(ks[1], (hidden_channels, hidden_channels, 3, 3), jnp.float32)
    w3 = 0.1 * jax.random.normal(ks[2], (output_size, hidden_channels * 4 * 4), jnp.float32)
    # per-task binary masks (score > 0), stored int8 for 4x fewer DMA bytes
    m1 = (jax.random.normal(ks[3], (num_tasks,) + w1.shape) > 0).astype(jnp.int8)
    m2 = (jax.random.normal(ks[4], (num_tasks,) + w2.shape) > 0).astype(jnp.int8)
    m3 = (jax.random.normal(ks[5], (num_tasks,) + w3.shape) > 0).astype(jnp.int8)

    Co, Ci, O, T = hidden_channels, in_channels, output_size, num_tasks
    # conv1: (K=Cin*3*3, Cout) pre-transposed
    w1t = w1.reshape(Co, Ci * 9).T
    m1t = jnp.transpose(m1.reshape(T, Co, Ci * 9), (0, 2, 1))
    # conv2: per kernel-offset (kh,kw) blocks, (9, Cin, Cout)
    w2b = jnp.transpose(w2, (2, 3, 1, 0)).reshape(9, Co, Co)
    m2b = jnp.transpose(m2, (0, 3, 4, 2, 1)).reshape(T, 9, Co, Co)
    # post_flatten: torch-NCHW flatten order baked in -> w3cols[c, p*O + o] = w3[o, c*16 + p]
    w3c = jnp.transpose(w3.reshape(O, Co, 16), (1, 2, 0)).reshape(Co, 16 * O)
    m3c = jnp.transpose(m3.reshape(T, O, Co, 16), (0, 2, 3, 1)).reshape(T, Co, 16 * O)

    return dict(w1=w1, w2=w2, w3=w3, m1=m1, m2=m2, m3=m3,
                w1t=w1t, m1t=m1t, w2b=w2b, m2b=m2b, w3c=w3c, m3c=m3c)


# Pure-JAX reference (same semantics as the PyTorch module) for a tolerance check.
def reference_forward(params, x, task_id):
    x = x.astype(jnp.float32)

    def mconv(h, w, m):
        p, OH, OW = _im2col_nchw(h, 3, 2, 1)
        y = jnp.maximum(p @ (w * m).reshape(w.shape[0], -1).T, 0.0)
        return y.reshape(h.shape[0], OH, OW, w.shape[0]).transpose(0, 3, 1, 2)

    h = mconv(x, params["w1"], params["m1"][task_id].astype(jnp.float32))
    h = mconv(h, params["w2"], params["m2"][task_id].astype(jnp.float32))
    h = h.reshape(h.shape[0], -1)                       # torch NCHW flatten
    return h @ (params["w3"] * params["m3"][task_id].astype(jnp.float32)).T


if __name__ == "__main__":
    key = jax.random.PRNGKey(0)
    k_param, k_x = jax.random.split(key)
    params = init_params(k_param, in_channels=4, output_size=32, num_tasks=3)

    x = jax.random.normal(k_x, (2, 4, 16, 16), jnp.float32)   # NCHW, batch=2
    task_id = 1

    fwd = jax.jit(masked_common_conv_forward)
    out = jax.block_until_ready(fwd(params, x, task_id))
    assert out.shape == (2, 32) and out.dtype == jnp.float32

    ref = reference_forward(params, x, task_id)
    max_err = float(jnp.max(jnp.abs(out - ref)))
    assert jnp.allclose(out, ref, rtol=5e-2, atol=5e-2), f"max abs err {max_err}"
    print("KERNEL_OK")
</pallas_src>

<mosaic_0001>
module attributes {stable_mosaic.version = 11 : i64} {
  func.func @_fused_forward_kernel(%arg0: i32, %arg1: memref<1xi32, #tpu.memory_space<smem>>, %arg2: memref<128x36xf32, #tpu.memory_space<vmem>>, %arg3: memref<36x32xf32, #tpu.memory_space<vmem>>, %arg4: memref<1x36x32xi8, #tpu.memory_space<vmem>>, %arg5: memref<9x32x32xf32, #tpu.memory_space<vmem>>, %arg6: memref<1x9x32x32xi8, #tpu.memory_space<vmem>>, %arg7: memref<32x512xf32, #tpu.memory_space<vmem>>, %arg8: memref<1x32x512xi8, #tpu.memory_space<vmem>>, %arg9: memref<2x32xf32, #tpu.memory_space<vmem>>) attributes {dimension_semantics = [#tpu.dimension_semantics<arbitrary>], iteration_bounds = array<i64: 1>, scalar_prefetch = 1 : i64, scratch_operands = 0 : i64, tpu.core_type = #tpu.core_type<tc>, window_params = [{pipeline_mode = #tpu.pipeline_mode<synchronous>, transform_indices = @transform_0, window_bounds = array<i64: 128, 36>}, {pipeline_mode = #tpu.pipeline_mode<synchronous>, transform_indices = @transform_1, window_bounds = array<i64: 36, 32>}, {transform_indices = @transform_2, window_bounds = array<i64: 1, 36, 32>}, {pipeline_mode = #tpu.pipeline_mode<synchronous>, transform_indices = @transform_3, window_bounds = array<i64: 9, 32, 32>}, {transform_indices = @transform_4, window_bounds = array<i64: 1, 9, 32, 32>}, {pipeline_mode = #tpu.pipeline_mode<synchronous>, transform_indices = @transform_5, window_bounds = array<i64: 32, 512>}, {transform_indices = @transform_6, window_bounds = array<i64: 1, 32, 512>}, {pipeline_mode = #tpu.pipeline_mode<synchronous>, transform_indices = @transform_7, window_bounds = array<i64: 2, 32>}]} {
    %c0 = arith.constant 0 : index
    %c0_0 = arith.constant 0 : index
    %0 = vector.load %arg3[%c0, %c0_0] : memref<36x32xf32, #tpu.memory_space<vmem>>, vector<36x32xf32>
    %c0_1 = arith.constant 0 : index
    %c0_2 = arith.constant 0 : index
    %c0_3 = arith.constant 0 : index
    %1 = vector.load %arg4[%c0_1, %c0_2, %c0_3] : memref<1x36x32xi8, #tpu.memory_space<vmem>>, vector<1x36x32xi8>
    %2 = vector.shape_cast %1 : vector<1x36x32xi8> to vector<36x32xi8>
    %3 = arith.sitofp %2 : vector<36x32xi8> to vector<36x32xf32>
    %4 = arith.mulf %0, %3 : vector<36x32xf32>
    %c0_4 = arith.constant 0 : index
    %c0_5 = arith.constant 0 : index
    %5 = vector.load %arg2[%c0_4, %c0_5] : memref<128x36xf32, #tpu.memory_space<vmem>>, vector<128x36xf32>
    %6 = arith.truncf %5 : vector<128x36xf32> to vector<128x36xbf16>
    %7 = arith.truncf %4 : vector<36x32xf32> to vector<36x32xbf16>
    %cst = arith.constant dense<0.000000e+00> : vector<128x32xf32>
    %8 = tpu.matmul %6, %7, %cst {dimension_numbers = #tpu.dot_dimension_numbers<[1], [0], [0], [1], [0, 0, 1, 1], [], []>} : vector<128x36xbf16>, vector<36x32xbf16>, vector<128x32xf32> -> vector<128x32xf32>
    %cst_6 = arith.constant 0.000000e+00 : f32
    %9 = vector.broadcast %cst_6 : f32 to vector<128x32xf32>
    %10 = arith.maximumf %8, %9 : vector<128x32xf32>
    %11 = tpu.iota {dimensions = array<i32: 0>} : vector<32x128xi32>
    %12 = tpu.iota {dimensions = array<i32: 1>} : vector<32x128xi32>
    %c4_i32 = arith.constant 4 : i32
    %13 = vector.broadcast %c4_i32 : i32 to vector<32x128xi32>
    %14 = arith.shrsi %11, %13 : vector<32x128xi32>
    %c6_i32 = arith.constant 6 : i32
    %15 = vector.broadcast %c6_i32 : i32 to vector<32x128xi32>
    %16 = arith.shrsi %12, %15 : vector<32x128xi32>
    %17 = arith.cmpi eq, %14, %16 : vector<32x128xi32>
    %c15_i32 = arith.constant 15 : i32
    %18 = vector.broadcast %c15_i32 : i32 to vector<32x128xi32>
    %19 = arith.andi %11, %18 : vector<32x128xi32>
    %c2_i32 = arith.constant 2 : i32
    %20 = vector.broadcast %c2_i32 : i32 to vector<32x128xi32>
    %21 = arith.shrsi %19, %20 : vector<32x128xi32>
    %c3_i32 = arith.constant 3 : i32
    %22 = vector.broadcast %c3_i32 : i32 to vector<32x128xi32>
    %23 = arith.andi %11, %22 : vector<32x128xi32>
    %c63_i32 = arith.constant 63 : i32
    %24 = vector.broadcast %c63_i32 : i32 to vector<32x128xi32>
    %25 = arith.andi %12, %24 : vector<32x128xi32>
    %c3_i32_7 = arith.constant 3 : i32
    %26 = vector.broadcast %c3_i32_7 : i32 to vector<32x128xi32>
    %27 = arith.shrsi %25, %26 : vector<32x128xi32>
    %c7_i32 = arith.constant 7 : i32
    %28 = vector.broadcast %c7_i32 : i32 to vector<32x128xi32>
    %29 = arith.andi %12, %28 : vector<32x128xi32>
    %c0_8 = arith.constant 0 : index
    %c0_9 = arith.constant 0 : index
    %c0_10 = arith.constant 0 : index
    %30 = vector.load %arg5[%c0_8, %c0_9, %c0_10] : memref<9x32x32xf32, #tpu.memory_space<vmem>>, vector<9x32x32xf32>
    %c0_11 = arith.constant 0 : index
    %c0_12 = arith.constant 0 : index
    %c0_13 = arith.constant 0 : index
    %c0_14 = arith.constant 0 : index
    %31 = vector.load %arg6[%c0_11, %c0_12, %c0_13, %c0_14] : memref<1x9x32x32xi8, #tpu.memory_space<vmem>>, vector<1x9x32x32xi8>
    %32 = vector.shape_cast %31 : vector<1x9x32x32xi8> to vector<9x32x32xi8>
    %33 = arith.sitofp %32 : vector<9x32x32xi8> to vector<9x32x32xf32>
    %34 = arith.mulf %30, %33 : vector<9x32x32xf32>
    %35 = arith.truncf %34 : vector<9x32x32xf32> to vector<9x32x32xbf16>
    %cst_15 = arith.constant 0.000000e+00 : f32
    %36 = vector.broadcast %cst_15 : f32 to vector<32x32xf32>
    %c2_i32_16 = arith.constant 2 : i32
    %37 = vector.broadcast %c2_i32_16 : i32 to vector<32x128xi32>
    %38 = arith.muli %37, %21 : vector<32x128xi32>
    %c-1_i32 = arith.constant -1 : i32
    %39 = vector.broadcast %c-1_i32 : i32 to vector<32x128xi32>
    %40 = arith.addi %38, %39 : vector<32x128xi32>
    %41 = arith.cmpi eq, %27, %40 : vector<32x128xi32>
    %42 = arith.andi %17, %41 : vector<32x128xi1>
    %c2_i32_17 = arith.constant 2 : i32
    %43 = vector.broadcast %c2_i32_17 : i32 to vector<32x128xi32>
    %44 = arith.muli %43, %23 : vector<32x128xi32>
    %c-1_i32_18 = arith.constant -1 : i32
    %45 = vector.broadcast %c-1_i32_18 : i32 to vector<32x128xi32>
    %46 = arith.addi %44, %45 : vector<32x128xi32>
    %47 = arith.cmpi eq, %29, %46 : vector<32x128xi32>
    %48 = arith.andi %42, %47 : vector<32x128xi1>
    %cst_19 = arith.constant 1.000000e+00 : f32
    %cst_20 = arith.constant 0.000000e+00 : f32
    %49 = vector.broadcast %cst_19 : f32 to vector<32x128xf32>
    %50 = vector.broadcast %cst_20 : f32 to vector<32x128xf32>
    %51 = arith.select %48, %49, %50 : vector<32x128xi1>, vector<32x128xf32>
    %cst_21 = arith.constant dense<0.000000e+00> : vector<32x32xf32>
    %52 = tpu.matmul %51, %10, %cst_21 {dimension_numbers = #tpu.dot_dimension_numbers<[1], [0], [0], [1], [0, 0, 1, 1], [], []>} : vector<32x128xf32>, vector<128x32xf32>, vector<32x32xf32> -> vector<32x32xf32>
    %53 = arith.truncf %52 : vector<32x32xf32> to vector<32x32xbf16>
    %54 = vector.extract_strided_slice %35 {offsets = [0, 0, 0], sizes = [1, 32, 32], strides = [1, 1, 1]} : vector<9x32x32xbf16> to vector<1x32x32xbf16>
    %55 = vector.shape_cast %54 : vector<1x32x32xbf16> to vector<32x32xbf16>
    %cst_22 = arith.constant dense<0.000000e+00> : vector<32x32xf32>
    %56 = tpu.matmul %53, %55, %cst_22 {dimension_numbers = #tpu.dot_dimension_numbers<[1], [0], [0], [1], [0, 0, 1, 1], [], []>} : vector<32x32xbf16>, vector<32x32xbf16>, vector<32x32xf32> -> vector<32x32xf32>
    %57 = arith.addf %36, %56 : vector<32x32xf32>
    %c2_i32_23 = arith.constant 2 : i32
    %58 = vector.broadcast %c2_i32_23 : i32 to vector<32x128xi32>
    %59 = arith.muli %58, %21 : vector<32x128xi32>
    %c-1_i32_24 = arith.constant -1 : i32
    %60 = vector.broadcast %c-1_i32_24 : i32 to vector<32x128xi32>
    %61 = arith.addi %59, %60 : vector<32x128xi32>
    %62 = arith.cmpi eq, %27, %61 : vector<32x128xi32>
    %63 = arith.andi %17, %62 : vector<32x128xi1>
    %c2_i32_25 = arith.constant 2 : i32
    %64 = vector.broadcast %c2_i32_25 : i32 to vector<32x128xi32>
    %65 = arith.muli %64, %23 : vector<32x128xi32>
    %c0_i32 = arith.constant 0 : i32
    %66 = vector.broadcast %c0_i32 : i32 to vector<32x128xi32>
    %67 = arith.addi %65, %66 : vector<32x128xi32>
    %68 = arith.cmpi eq, %29, %67 : vector<32x128xi32>
    %69 = arith.andi %63, %68 : vector<32x128xi1>
    %cst_26 = arith.constant 1.000000e+00 : f32
    %cst_27 = arith.constant 0.000000e+00 : f32
    %70 = vector.broadcast %cst_26 : f32 to vector<32x128xf32>
    %71 = vector.broadcast %cst_27 : f32 to vector<32x128xf32>
    %72 = arith.select %69, %70, %71 : vector<32x128xi1>, vector<32x128xf32>
    %cst_28 = arith.constant dense<0.000000e+00> : vector<32x32xf32>
    %73 = tpu.matmul %72, %10, %cst_28 {dimension_numbers = #tpu.dot_dimension_numbers<[1], [0], [0], [1], [0, 0, 1, 1], [], []>} : vector<32x128xf32>, vector<128x32xf32>, vector<32x32xf32> -> vector<32x32xf32>
    %74 = arith.truncf %73 : vector<32x32xf32> to vector<32x32xbf16>
    %75 = vector.extract_strided_slice %35 {offsets = [1, 0, 0], sizes = [1, 32, 32], strides = [1, 1, 1]} : vector<9x32x32xbf16> to vector<1x32x32xbf16>
    %76 = vector.shape_cast %75 : vector<1x32x32xbf16> to vector<32x32xbf16>
    %cst_29 = arith.constant dense<0.000000e+00> : vector<32x32xf32>
    %77 = tpu.matmul %74, %76, %cst_29 {dimension_numbers = #tpu.dot_dimension_numbers<[1], [0], [0], [1], [0, 0, 1, 1], [], []>} : vector<32x32xbf16>, vector<32x32xbf16>, vector<32x32xf32> -> vector<32x32xf32>
    %78 = arith.addf %57, %77 : vector<32x32xf32>
    %c2_i32_30 = arith.constant 2 : i32
    %79 = vector.broadcast %c2_i32_30 : i32 to vector<32x128xi32>
    %80 = arith.muli %79, %21 : vector<32x128xi32>
    %c-1_i32_31 = arith.constant -1 : i32
    %81 = vector.broadcast %c-1_i32_31 : i32 to vector<32x128xi32>
    %82 = arith.addi %80, %81 : vector<32x128xi32>
    %83 = arith.cmpi eq, %27, %82 : vector<32x128xi32>
    %84 = arith.andi %17, %83 : vector<32x128xi1>
    %c2_i32_32 = arith.constant 2 : i32
    %85 = vector.broadcast %c2_i32_32 : i32 to vector<32x128xi32>
    %86 = arith.muli %85, %23 : vector<32x128xi32>
    %c1_i32 = arith.constant 1 : i32
    %87 = vector.broadcast %c1_i32 : i32 to vector<32x128xi32>
    %88 = arith.addi %86, %87 : vector<32x128xi32>
    %89 = arith.cmpi eq, %29, %88 : vector<32x128xi32>
    %90 = arith.andi %84, %89 : vector<32x128xi1>
    %cst_33 = arith.constant 1.000000e+00 : f32
    %cst_34 = arith.constant 0.000000e+00 : f32
    %91 = vector.broadcast %cst_33 : f32 to vector<32x128xf32>
    %92 = vector.broadcast %cst_34 : f32 to vector<32x128xf32>
    %93 = arith.select %90, %91, %92 : vector<32x128xi1>, vector<32x128xf32>
    %cst_35 = arith.constant dense<0.000000e+00> : vector<32x32xf32>
    %94 = tpu.matmul %93, %10, %cst_35 {dimension_numbers = #tpu.dot_dimension_numbers<[1], [0], [0], [1], [0, 0, 1, 1], [], []>} : vector<32x128xf32>, vector<128x32xf32>, vector<32x32xf32> -> vector<32x32xf32>
    %95 = arith.truncf %94 : vector<32x32xf32> to vector<32x32xbf16>
    %96 = vector.extract_strided_slice %35 {offsets = [2, 0, 0], sizes = [1, 32, 32], strides = [1, 1, 1]} : vector<9x32x32xbf16> to vector<1x32x32xbf16>
    %97 = vector.shape_cast %96 : vector<1x32x32xbf16> to vector<32x32xbf16>
    %cst_36 = arith.constant dense<0.000000e+00> : vector<32x32xf32>
    %98 = tpu.matmul %95, %97, %cst_36 {dimension_numbers = #tpu.dot_dimension_numbers<[1], [0], [0], [1], [0, 0, 1, 1], [], []>} : vector<32x32xbf16>, vector<32x32xbf16>, vector<32x32xf32> -> vector<32x32xf32>
    %99 = arith.addf %78, %98 : vector<32x32xf32>
    %c2_i32_37 = arith.constant 2 : i32
    %100 = vector.broadcast %c2_i32_37 : i32 to vector<32x128xi32>
    %101 = arith.muli %100, %21 : vector<32x128xi32>
    %c0_i32_38 = arith.constant 0 : i32
    %102 = vector.broadcast %c0_i32_38 : i32 to vector<32x128xi32>
    %103 = arith.addi %101, %102 : vector<32x128xi32>
    %104 = arith.cmpi eq, %27, %103 : vector<32x128xi32>
    %105 = arith.andi %17, %104 : vector<32x128xi1>
    %c2_i32_39 = arith.constant 2 : i32
    %106 = vector.broadcast %c2_i32_39 : i32 to vector<32x128xi32>
    %107 = arith.muli %106, %23 : vector<32x128xi32>
    %c-1_i32_40 = arith.constant -1 : i32
    %108 = vector.broadcast %c-1_i32_40 : i32 to vector<32x128xi32>
    %109 = arith.addi %107, %108 : vector<32x128xi32>
    %110 = arith.cmpi eq, %29, %109 : vector<32x128xi32>
    %111 = arith.andi %105, %110 : vector<32x128xi1>
    %cst_41 = arith.constant 1.000000e+00 : f32
    %cst_42 = arith.constant 0.000000e+00 : f32
    %112 = vector.broadcast %cst_41 : f32 to vector<32x128xf32>
    %113 = vector.broadcast %cst_42 : f32 to vector<32x128xf32>
    %114 = arith.select %111, %112, %113 : vector<32x128xi1>, vector<32x128xf32>
    %cst_43 = arith.constant dense<0.000000e+00> : vector<32x32xf32>
    %115 = tpu.matmul %114, %10, %cst_43 {dimension_numbers = #tpu.dot_dimension_numbers<[1], [0], [0], [1], [0, 0, 1, 1], [], []>} : vector<32x128xf32>, vector<128x32xf32>, vector<32x32xf32> -> vector<32x32xf32>
    %116 = arith.truncf %115 : vector<32x32xf32> to vector<32x32xbf16>
    %117 = vector.extract_strided_slice %35 {offsets = [3, 0, 0], sizes = [1, 32, 32], strides = [1, 1, 1]} : vector<9x32x32xbf16> to vector<1x32x32xbf16>
    %118 = vector.shape_cast %117 : vector<1x32x32xbf16> to vector<32x32xbf16>
    %cst_44 = arith.constant dense<0.000000e+00> : vector<32x32xf32>
    %119 = tpu.matmul %116, %118, %cst_44 {dimension_numbers = #tpu.dot_dimension_numbers<[1], [0], [0], [1], [0, 0, 1, 1], [], []>} : vector<32x32xbf16>, vector<32x32xbf16>, vector<32x32xf32> -> vector<32x32xf32>
    %120 = arith.addf %99, %119 : vector<32x32xf32>
    %c2_i32_45 = arith.constant 2 : i32
    %121 = vector.broadcast %c2_i32_45 : i32 to vector<32x128xi32>
    %122 = arith.muli %121, %21 : vector<32x128xi32>
    %c0_i32_46 = arith.constant 0 : i32
    %123 = vector.broadcast %c0_i32_46 : i32 to vector<32x128xi32>
    %124 = arith.addi %122, %123 : vector<32x128xi32>
    %125 = arith.cmpi eq, %27, %124 : vector<32x128xi32>
    %126 = arith.andi %17, %125 : vector<32x128xi1>
    %c2_i32_47 = arith.constant 2 : i32
    %127 = vector.broadcast %c2_i32_47 : i32 to vector<32x128xi32>
    %128 = arith.muli %127, %23 : vector<32x128xi32>
    %c0_i32_48 = arith.constant 0 : i32
    %129 = vector.broadcast %c0_i32_48 : i32 to vector<32x128xi32>
    %130 = arith.addi %128, %129 : vector<32x128xi32>
    %131 = arith.cmpi eq, %29, %130 : vector<32x128xi32>
    %132 = arith.andi %126, %131 : vector<32x128xi1>
    %cst_49 = arith.constant 1.000000e+00 : f32
    %cst_50 = arith.constant 0.000000e+00 : f32
    %133 = vector.broadcast %cst_49 : f32 to vector<32x128xf32>
    %134 = vector.broadcast %cst_50 : f32 to vector<32x128xf32>
    %135 = arith.select %132, %133, %134 : vector<32x128xi1>, vector<32x128xf32>
    %cst_51 = arith.constant dense<0.000000e+00> : vector<32x32xf32>
    %136 = tpu.matmul %135, %10, %cst_51 {dimension_numbers = #tpu.dot_dimension_numbers<[1], [0], [0], [1], [0, 0, 1, 1], [], []>} : vector<32x128xf32>, vector<128x32xf32>, vector<32x32xf32> -> vector<32x32xf32>
    %137 = arith.truncf %136 : vector<32x32xf32> to vector<32x32xbf16>
    %138 = vector.extract_strided_slice %35 {offsets = [4, 0, 0], sizes = [1, 32, 32], strides = [1, 1, 1]} : vector<9x32x32xbf16> to vector<1x32x32xbf16>
    %139 = vector.shape_cast %138 : vector<1x32x32xbf16> to vector<32x32xbf16>
    %cst_52 = arith.constant dense<0.000000e+00> : vector<32x32xf32>
    %140 = tpu.matmul %137, %139, %cst_52 {dimension_numbers = #tpu.dot_dimension_numbers<[1], [0], [0], [1], [0, 0, 1, 1], [], []>} : vector<32x32xbf16>, vector<32x32xbf16>, vector<32x32xf32> -> vector<32x32xf32>
    %141 = arith.addf %120, %140 : vector<32x32xf32>
    %c2_i32_53 = arith.constant 2 : i32
    %142 = vector.broadcast %c2_i32_53 : i32 to vector<32x128xi32>
    %143 = arith.muli %142, %21 : vector<32x128xi32>
    %c0_i32_54 = arith.constant 0 : i32
    %144 = vector.broadcast %c0_i32_54 : i32 to vector<32x128xi32>
    %145 = arith.addi %143, %144 : vector<32x128xi32>
    %146 = arith.cmpi eq, %27, %145 : vector<32x128xi32>
    %147 = arith.andi %17, %146 : vector<32x128xi1>
    %c2_i32_55 = arith.constant 2 : i32
    %148 = vector.broadcast %c2_i32_55 : i32 to vector<32x128xi32>
    %149 = arith.muli %148, %23 : vector<32x128xi32>
    %c1_i32_56 = arith.constant 1 : i32
    %150 = vector.broadcast %c1_i32_56 : i32 to vector<32x128xi32>
    %151 = arith.addi %149, %150 : vector<32x128xi32>
    %152 = arith.cmpi eq, %29, %151 : vector<32x128xi32>
    %153 = arith.andi %147, %152 : vector<32x128xi1>
    %cst_57 = arith.constant 1.000000e+00 : f32
    %cst_58 = arith.constant 0.000000e+00 : f32
    %154 = vector.broadcast %cst_57 : f32 to vector<32x128xf32>
    %155 = vector.broadcast %cst_58 : f32 to vector<32x128xf32>
    %156 = arith.select %153, %154, %155 : vector<32x128xi1>, vector<32x128xf32>
    %cst_59 = arith.constant dense<0.000000e+00> : vector<32x32xf32>
    %157 = tpu.matmul %156, %10, %cst_59 {dimension_numbers = #tpu.dot_dimension_numbers<[1], [0], [0], [1], [0, 0, 1, 1], [], []>} : vector<32x128xf32>, vector<128x32xf32>, vector<32x32xf32> -> vector<32x32xf32>
    %158 = arith.truncf %157 : vector<32x32xf32> to vector<32x32xbf16>
    %159 = vector.extract_strided_slice %35 {offsets = [5, 0, 0], sizes = [1, 32, 32], strides = [1, 1, 1]} : vector<9x32x32xbf16> to vector<1x32x32xbf16>
    %160 = vector.shape_cast %159 : vector<1x32x32xbf16> to vector<32x32xbf16>
    %cst_60 = arith.constant dense<0.000000e+00> : vector<32x32xf32>
    %161 = tpu.matmul %158, %160, %cst_60 {dimension_numbers = #tpu.dot_dimension_numbers<[1], [0], [0], [1], [0, 0, 1, 1], [], []>} : vector<32x32xbf16>, vector<32x32xbf16>, vector<32x32xf32> -> vector<32x32xf32>
    %162 = arith.addf %141, %161 : vector<32x32xf32>
    %c2_i32_61 = arith.constant 2 : i32
    %163 = vector.broadcast %c2_i32_61 : i32 to vector<32x128xi32>
    %164 = arith.muli %163, %21 : vector<32x128xi32>
    %c1_i32_62 = arith.constant 1 : i32
    %165 = vector.broadcast %c1_i32_62 : i32 to vector<32x128xi32>
    %166 = arith.addi %164, %165 : vector<32x128xi32>
    %167 = arith.cmpi eq, %27, %166 : vector<32x128xi32>
    %168 = arith.andi %17, %167 : vector<32x128xi1>
    %c2_i32_63 = arith.constant 2 : i32
    %169 = vector.broadcast %c2_i32_63 : i32 to vector<32x128xi32>
    %170 = arith.muli %169, %23 : vector<32x128xi32>
    %c-1_i32_64 = arith.constant -1 : i32
    %171 = vector.broadcast %c-1_i32_64 : i32 to vector<32x128xi32>
    %172 = arith.addi %170, %171 : vector<32x128xi32>
    %173 = arith.cmpi eq, %29, %172 : vector<32x128xi32>
    %174 = arith.andi %168, %173 : vector<32x128xi1>
    %cst_65 = arith.constant 1.000000e+00 : f32
    %cst_66 = arith.constant 0.000000e+00 : f32
    %175 = vector.broadcast %cst_65 : f32 to vector<32x128xf32>
    %176 = vector.broadcast %cst_66 : f32 to vector<32x128xf32>
    %177 = arith.select %174, %175, %176 : vector<32x128xi1>, vector<32x128xf32>
    %cst_67 = arith.constant dense<0.000000e+00> : vector<32x32xf32>
    %178 = tpu.matmul %177, %10, %cst_67 {dimension_numbers = #tpu.dot_dimension_numbers<[1], [0], [0], [1], [0, 0, 1, 1], [], []>} : vector<32x128xf32>, vector<128x32xf32>, vector<32x32xf32> -> vector<32x32xf32>
    %179 = arith.truncf %178 : vector<32x32xf32> to vector<32x32xbf16>
    %180 = vector.extract_strided_slice %35 {offsets = [6, 0, 0], sizes = [1, 32, 32], strides = [1, 1, 1]} : vector<9x32x32xbf16> to vector<1x32x32xbf16>
    %181 = vector.shape_cast %180 : vector<1x32x32xbf16> to vector<32x32xbf16>
    %cst_68 = arith.constant dense<0.000000e+00> : vector<32x32xf32>
    %182 = tpu.matmul %179, %181, %cst_68 {dimension_numbers = #tpu.dot_dimension_numbers<[1], [0], [0], [1], [0, 0, 1, 1], [], []>} : vector<32x32xbf16>, vector<32x32xbf16>, vector<32x32xf32> -> vector<32x32xf32>
    %183 = arith.addf %162, %182 : vector<32x32xf32>
    %c2_i32_69 = arith.constant 2 : i32
    %184 = vector.broadcast %c2_i32_69 : i32 to vector<32x128xi32>
    %185 = arith.muli %184, %21 : vector<32x128xi32>
    %c1_i32_70 = arith.constant 1 : i32
    %186 = vector.broadcast %c1_i32_70 : i32 to vector<32x128xi32>
    %187 = arith.addi %185, %186 : vector<32x128xi32>
    %188 = arith.cmpi eq, %27, %187 : vector<32x128xi32>
    %189 = arith.andi %17, %188 : vector<32x128xi1>
    %c2_i32_71 = arith.constant 2 : i32
    %190 = vector.broadcast %c2_i32_71 : i32 to vector<32x128xi32>
    %191 = arith.muli %190, %23 : vector<32x128xi32>
    %c0_i32_72 = arith.constant 0 : i32
    %192 = vector.broadcast %c0_i32_72 : i32 to vector<32x128xi32>
    %193 = arith.addi %191, %192 : vector<32x128xi32>
    %194 = arith.cmpi eq, %29, %193 : vector<32x128xi32>
    %195 = arith.andi %189, %194 : vector<32x128xi1>
    %cst_73 = arith.constant 1.000000e+00 : f32
    %cst_74 = arith.constant 0.000000e+00 : f32
    %196 = vector.broadcast %cst_73 : f32 to vector<32x128xf32>
    %197 = vector.broadcast %cst_74 : f32 to vector<32x128xf32>
    %198 = arith.select %195, %196, %197 : vector<32x128xi1>, vector<32x128xf32>
    %cst_75 = arith.constant dense<0.000000e+00> : vector<32x32xf32>
    %199 = tpu.matmul %198, %10, %cst_75 {dimension_numbers = #tpu.dot_dimension_numbers<[1], [0], [0], [1], [0, 0, 1, 1], [], []>} : vector<32x128xf32>, vector<128x32xf32>, vector<32x32xf32> -> vector<32x32xf32>
    %200 = arith.truncf %199 : vector<32x32xf32> to vector<32x32xbf16>
    %201 = vector.extract_strided_slice %35 {offsets = [7, 0, 0], sizes = [1, 32, 32], strides = [1, 1, 1]} : vector<9x32x32xbf16> to vector<1x32x32xbf16>
    %202 = vector.shape_cast %201 : vector<1x32x32xbf16> to vector<32x32xbf16>
    %cst_76 = arith.constant dense<0.000000e+00> : vector<32x32xf32>
    %203 = tpu.matmul %200, %202, %cst_76 {dimension_numbers = #tpu.dot_dimension_numbers<[1], [0], [0], [1], [0, 0, 1, 1], [], []>} : vector<32x32xbf16>, vector<32x32xbf16>, vector<32x32xf32> -> vector<32x32xf32>
    %204 = arith.addf %183, %203 : vector<32x32xf32>
    %c2_i32_77 = arith.constant 2 : i32
    %205 = vector.broadcast %c2_i32_77 : i32 to vector<32x128xi32>
    %206 = arith.muli %205, %21 : vector<32x128xi32>
    %c1_i32_78 = arith.constant 1 : i32
    %207 = vector.broadcast %c1_i32_78 : i32 to vector<32x128xi32>
    %208 = arith.addi %206, %207 : vector<32x128xi32>
    %209 = arith.cmpi eq, %27, %208 : vector<32x128xi32>
    %210 = arith.andi %17, %209 : vector<32x128xi1>
    %c2_i32_79 = arith.constant 2 : i32
    %211 = vector.broadcast %c2_i32_79 : i32 to vector<32x128xi32>
    %212 = arith.muli %211, %23 : vector<32x128xi32>
    %c1_i32_80 = arith.constant 1 : i32
    %213 = vector.broadcast %c1_i32_80 : i32 to vector<32x128xi32>
    %214 = arith.addi %212, %213 : vector<32x128xi32>
    %215 = arith.cmpi eq, %29, %214 : vector<32x128xi32>
    %216 = arith.andi %210, %215 : vector<32x128xi1>
    %cst_81 = arith.constant 1.000000e+00 : f32
    %cst_82 = arith.constant 0.000000e+00 : f32
    %217 = vector.broadcast %cst_81 : f32 to vector<32x128xf32>
    %218 = vector.broadcast %cst_82 : f32 to vector<32x128xf32>
    %219 = arith.select %216, %217, %218 : vector<32x128xi1>, vector<32x128xf32>
    %cst_83 = arith.constant dense<0.000000e+00> : vector<32x32xf32>
    %220 = tpu.matmul %219, %10, %cst_83 {dimension_numbers = #tpu.dot_dimension_numbers<[1], [0], [0], [1], [0, 0, 1, 1], [], []>} : vector<32x128xf32>, vector<128x32xf32>, vector<32x32xf32> -> vector<32x32xf32>
    %221 = arith.truncf %220 : vector<32x32xf32> to vector<32x32xbf16>
    %222 = vector.extract_strided_slice %35 {offsets = [8, 0, 0], sizes = [1, 32, 32], strides = [1, 1, 1]} : vector<9x32x32xbf16> to vector<1x32x32xbf16>
    %223 = vector.shape_cast %222 : vector<1x32x32xbf16> to vector<32x32xbf16>
    %cst_84 = arith.constant dense<0.000000e+00> : vector<32x32xf32>
    %224 = tpu.matmul %221, %223, %cst_84 {dimension_numbers = #tpu.dot_dimension_numbers<[1], [0], [0], [1], [0, 0, 1, 1], [], []>} : vector<32x32xbf16>, vector<32x32xbf16>, vector<32x32xf32> -> vector<32x32xf32>
    %225 = arith.addf %204, %224 : vector<32x32xf32>
    %cst_85 = arith.constant 0.000000e+00 : f32
    %226 = vector.broadcast %cst_85 : f32 to vector<32x32xf32>
    %227 = arith.maximumf %225, %226 : vector<32x32xf32>
    %c0_86 = arith.constant 0 : index
    %c0_87 = arith.constant 0 : index
    %228 = vector.load %arg7[%c0_86, %c0_87] : memref<32x512xf32, #tpu.memory_space<vmem>>, vector<32x512xf32>
    %c0_88 = arith.constant 0 : index
    %c0_89 = arith.constant 0 : index
    %c0_90 = arith.constant 0 : index
    %229 = vector.load %arg8[%c0_88, %c0_89, %c0_90] : memref<1x32x512xi8, #tpu.memory_space<vmem>>, vector<1x32x512xi8>
    %230 = vector.shape_cast %229 : vector<1x32x512xi8> to vector<32x512xi8>
    %231 = arith.sitofp %230 : vector<32x512xi8> to vector<32x512xf32>
    %232 = arith.mulf %228, %231 : vector<32x512xf32>
    %233 = arith.truncf %232 : vector<32x512xf32> to vector<32x512xbf16>
    %234 = arith.truncf %227 : vector<32x32xf32> to vector<32x32xbf16>
    %cst_91 = arith.constant dense<0.000000e+00> : vector<32x512xf32>
    %235 = tpu.matmul %234, %233, %cst_91 {dimension_numbers = #tpu.dot_dimension_numbers<[1], [0], [0], [1], [0, 0, 1, 1], [], []>} : vector<32x32xbf16>, vector<32x512xbf16>, vector<32x512xf32> -> vector<32x512xf32>
    %236 = tpu.iota {dimensions = array<i32: 0>} : vector<32x512xi32>
    %237 = tpu.iota {dimensions = array<i32: 1>} : vector<32x512xi32>
    %c15_i32_92 = arith.constant 15 : i32
    %238 = vector.broadcast %c15_i32_92 : i32 to vector<32x512xi32>
    %239 = arith.andi %236, %238 : vector<32x512xi32>
    %c5_i32 = arith.constant 5 : i32
    %240 = vector.broadcast %c5_i32 : i32 to vector<32x512xi32>
    %241 = arith.shrsi %237, %240 : vector<32x512xi32>
    %242 = arith.cmpi eq, %239, %241 : vector<32x512xi32>
    %cst_93 = arith.constant 0.000000e+00 : f32
    %243 = vector.broadcast %cst_93 : f32 to vector<32x512xf32>
    %244 = arith.select %242, %235, %243 : vector<32x512xi1>, vector<32x512xf32>
    %245 = tpu.iota {dimensions = array<i32: 0>} : vector<512x32xi32>
    %246 = tpu.iota {dimensions = array<i32: 1>} : vector<512x32xi32>
    %c31_i32 = arith.constant 31 : i32
    %247 = vector.broadcast %c31_i32 : i32 to vector<512x32xi32>
    %248 = arith.andi %245, %247 : vector<512x32xi32>
    %249 = arith.cmpi eq, %248, %246 : vector<512x32xi32>
    %cst_94 = arith.constant 1.000000e+00 : f32
    %cst_95 = arith.constant 0.000000e+00 : f32
    %250 = vector.broadcast %cst_94 : f32 to vector<512x32xf32>
    %251 = vector.broadcast %cst_95 : f32 to vector<512x32xf32>
    %252 = arith.select %249, %250, %251 : vector<512x32xi1>, vector<512x32xf32>
    %cst_96 = arith.constant dense<0.000000e+00> : vector<32x32xf32>
    %253 = tpu.matmul %244, %252, %cst_96 {dimension_numbers = #tpu.dot_dimension_numbers<[1], [0], [0], [1], [0, 0, 1, 1], [], []>} : vector<32x512xf32>, vector<512x32xf32>, vector<32x32xf32> -> vector<32x32xf32>
    %254 = tpu.iota {dimensions = array<i32: 0>} : vector<2x32xi32>
    %255 = tpu.iota {dimensions = array<i32: 1>} : vector<2x32xi32>
    %c4_i32_97 = arith.constant 4 : i32
    %256 = vector.broadcast %c4_i32_97 : i32 to vector<2x32xi32>
    %257 = arith.shrsi %255, %256 : vector<2x32xi32>
    %258 = arith.cmpi eq, %254, %257 : vector<2x32xi32>
    %cst_98 = arith.constant 1.000000e+00 : f32
    %cst_99 = arith.constant 0.000000e+00 : f32
    %259 = vector.broadcast %cst_98 : f32 to vector<2x32xf32>
    %260 = vector.broadcast %cst_99 : f32 to vector<2x32xf32>
    %261 = arith.select %258, %259, %260 : vector<2x32xi1>, vector<2x32xf32>
    %cst_100 = arith.constant dense<0.000000e+00> : vector<2x32xf32>
    %262 = tpu.matmul %261, %253, %cst_100 {dimension_numbers = #tpu.dot_dimension_numbers<[1], [0], [0], [1], [0, 0, 1, 1], [], []>} : vector<2x32xf32>, vector<32x32xf32>, vector<2x32xf32> -> vector<2x32xf32>
    %c0_101 = arith.constant 0 : index
    %c0_102 = arith.constant 0 : index
    %263 = vector.load %arg9[%c0_101, %c0_102] : memref<2x32xf32, #tpu.memory_space<vmem>>, vector<2x32xf32>
    tpu.vector_store %arg9[%c0_101, %c0_102], %262 {strides = array<i32>} : memref<2x32xf32, #tpu.memory_space<vmem>>, vector<2x32xf32>,
    return
  }
  func.func @transform_0(%arg0: i32, %arg1: memref<1xi32, #tpu.memory_space<smem>>) -> (i32, i32) {
    %c0_i32 = arith.constant 0 : i32
    %c0_i32_0 = arith.constant 0 : i32
    %c0_i32_1 = arith.constant 0 : i32
    return %c0_i32, %c0_i32_0 : i32, i32
  }
  func.func @transform_1(%arg0: i32, %arg1: memref<1xi32, #tpu.memory_space<smem>>) -> (i32, i32) {
    %c0_i32 = arith.constant 0 : i32
    %c0_i32_0 = arith.constant 0 : i32
    %c0_i32_1 = arith.constant 0 : i32
    return %c0_i32, %c0_i32_0 : i32, i32
  }
  func.func @transform_2(%arg0: i32, %arg1: memref<1xi32, #tpu.memory_space<smem>>) -> (i32, i32, i32) {
    %c0 = arith.constant 0 : index
    %0 = memref.load %arg1[%c0] : memref<1xi32, #tpu.memory_space<smem>>
    %c0_i32 = arith.constant 0 : i32
    %c0_i32_0 = arith.constant 0 : i32
    %c0_i32_1 = arith.constant 0 : i32
    return %0, %c0_i32, %c0_i32_0 : i32, i32, i32
  }
  func.func @transform_3(%arg0: i32, %arg1: memref<1xi32, #tpu.memory_space<smem>>) -> (i32, i32, i32) {
    %c0_i32 = arith.constant 0 : i32
    %c0_i32_0 = arith.constant 0 : i32
    %c0_i32_1 = arith.constant 0 : i32
    %c0_i32_2 = arith.constant 0 : i32
    return %c0_i32, %c0_i32_0, %c0_i32_1 : i32, i32, i32
  }
  func.func @transform_4(%arg0: i32, %arg1: memref<1xi32, #tpu.memory_space<smem>>) -> (i32, i32, i32, i32) {
    %c0 = arith.constant 0 : index
    %0 = memref.load %arg1[%c0] : memref<1xi32, #tpu.memory_space<smem>>
    %c0_i32 = arith.constant 0 : i32
    %c0_i32_0 = arith.constant 0 : i32
    %c0_i32_1 = arith.constant 0 : i32
    %c0_i32_2 = arith.constant 0 : i32
    return %0, %c0_i32, %c0_i32_0, %c0_i32_1 : i32, i32, i32, i32
  }
  func.func @transform_5(%arg0: i32, %arg1: memref<1xi32, #tpu.memory_space<smem>>) -> (i32, i32) {
    %c0_i32 = arith.constant 0 : i32
    %c0_i32_0 = arith.constant 0 : i32
    %c0_i32_1 = arith.constant 0 : i32
    return %c0_i32, %c0_i32_0 : i32, i32
  }
  func.func @transform_6(%arg0: i32, %arg1: memref<1xi32, #tpu.memory_space<smem>>) -> (i32, i32, i32) {
    %c0 = arith.constant 0 : index
    %0 = memref.load %arg1[%c0] : memref<1xi32, #tpu.memory_space<smem>>
    %c0_i32 = arith.constant 0 : i32
    %c0_i32_0 = arith.constant 0 : i32
    %c0_i32_1 = arith.constant 0 : i32
    return %0, %c0_i32, %c0_i32_0 : i32, i32, i32
  }
  func.func @transform_7(%arg0: i32, %arg1: memref<1xi32, #tpu.memory_space<smem>>) -> (i32, i32) {
    %c0_i32 = arith.constant 0 : i32
    %c0_i32_0 = arith.constant 0 : i32
    %c0_i32_1 = arith.constant 0 : i32
    return %c0_i32, %c0_i32_0 : i32, i32
  }
}

</mosaic_0001>

<llo_original>
// kernel: masked_common_conv_forward.1
$region0: #{masked_common_conv_forward.1}
  #allocation0 [shape = 'u32[]', space=smem, size = 0x4, offset = 0x4, fixed_abs, tag = 'smem constant byte address 0x4 - core index']
  #allocation1 [shape = 'u32[144,128]{1,0:T(1,128)}', space=vmem, size = 0x12000, scoped, tag = 'internal scratch']
  #allocation2 [shape = 's32[1]{0}', space=sflag, size = 0x4, scoped, tag = 'scoped memory for masked_common_conv_forward.1']
  #allocation3 [shape = 's32[1]{0:T(128)S(6)}', space=smem, size = 0x200, scoped, tag = 'prefetched SMEM operand 0']
  %s0 = inlined_call_operand.<no memory space> [shape: s32[1], index: 0, kind: input, shape index: {}]
  %s1 = inlined_call_operand.vmem [shape: f32[128,36], index: 1, kind: input, shape index: {}]
  %s2 = inlined_call_operand.vmem [shape: f32[36,32], index: 2, kind: input, shape index: {}]
  %s3 = inlined_call_operand.vmem [shape: s8[3,36,32], index: 3, kind: input, shape index: {}]
  %s4 = inlined_call_operand.vmem [shape: f32[9,32,32], index: 4, kind: input, shape index: {}]
  %s5 = inlined_call_operand.vmem [shape: s8[3,9,32,32], index: 5, kind: input, shape index: {}]
  %s6 = inlined_call_operand.vmem [shape: f32[32,512], index: 6, kind: input, shape index: {}]
  %s7 = inlined_call_operand.vmem [shape: s8[3,32,512], index: 7, kind: input, shape index: {}]
  %s8 = inlined_call_operand.hbm [shape: f32[2,32], index: 8, kind: output, shape index: {}]
  %s9 = sld [smem:[#allocation0]]
  $region38: #{masked_common_conv_forward.1} parent=0
    _
  %s11 = ssub.s32 1, %s9
  %s12 = scalar_select 0, %s11, %s9
  %13 = sst [smem:[#allocation3]] %s0
  $region1: #{masked_common_conv_forward.1} parent=0
    #allocation4 [shape = 'u8[1024]{0}', space=vmem, size = 0x400, scoped, tag = 'output window, operand 0, single buffered']
    #allocation5 [shape = 's32[1]{0}', space=sflag, size = 0x4, scoped, tag = 'scoped memory for masked_common_conv_forward.1']
    %14 = vsyncpa [#allocation5], 0
    // Predicated region
    $region2: #{masked_common_conv_forward.1} parent=1 // pred_check
      _
    $region3: #{masked_common_conv_forward.1} parent=1 // pred_check_branch
      %16 = sbr.rel (0) target = $region5
    $region4: #{masked_common_conv_forward.1} parent=1 // pred_region
      _
    $region5: #{masked_common_conv_forward.1} parent=1 // pred_fallthru
      _
    // Predicated region
    $region6: #{masked_common_conv_forward.1} parent=1 // pred_check
      _
    $region7: #{masked_common_conv_forward.1} parent=1 // pred_check_branch
      %18 = sbr.rel (0) target = $region9
    $region8: #{masked_common_conv_forward.1} parent=1 // pred_region
      _
    $region9: #{masked_common_conv_forward.1} parent=1 // pred_fallthru
      _
    // Predicated region
    $region10: #{masked_common_conv_forward.1} parent=1 // pred_check
      _
    $region11: #{masked_common_conv_forward.1} parent=1 // pred_check_branch
      %20 = sbr.rel (0) target = $region13
    $region12: #{masked_common_conv_forward.1} parent=1 // pred_region
      %s21 = sld [smem:[#allocation3]]
      %p22 = scmp.lt.s32.totalorder %s21, 2
      %s23 = scalar_select %p22, %s21, 2
      %s24 = smul.addr %s23, 5
      %s25 = smul.addr %s24, 2
      %s26 = scalar_lea.vmem %s3, %s25
      %s27 = sld [smem:[#allocation3]]
    $region13: #{masked_common_conv_forward.1} parent=1 // pred_fallthru
      _
    // Predicated region
    $region14: #{masked_common_conv_forward.1} parent=1 // pred_check
      _
    $region15: #{masked_common_conv_forward.1} parent=1 // pred_check_branch
      %29 = sbr.rel (0) target = $region17
    $region16: #{masked_common_conv_forward.1} parent=1 // pred_region
      _
    $region17: #{masked_common_conv_forward.1} parent=1 // pred_fallthru
      _
    // Predicated region
    $region18: #{masked_common_conv_forward.1} parent=1 // pred_check
      _
    $region19: #{masked_common_conv_forward.1} parent=1 // pred_check_branch
      %31 = sbr.rel (0) target = $region21
    $region20: #{masked_common_conv_forward.1} parent=1 // pred_region
      %s32 = sld [smem:[#allocation3]]
      %p33 = scmp.lt.s32.totalorder %s32, 2
      %s34 = scalar_select %p33, %s32, 2
      %s35 = smul.addr %s34, 9
      %s36 = smul.addr %s35, 8
      %s37 = scalar_lea.vmem %s5, %s36
      %s38 = sld [smem:[#allocation3]]
    $region21: #{masked_common_conv_forward.1} parent=1 // pred_fallthru
      _
    // Predicated region
    $region22: #{masked_common_conv_forward.1} parent=1 // pred_check
      _
    $region23: #{masked_common_conv_forward.1} parent=1 // pred_check_branch
      %40 = sbr.rel (0) target = $region25
    $region24: #{masked_common_conv_forward.1} parent=1 // pred_region
      _
    $region25: #{masked_common_conv_forward.1} parent=1 // pred_fallthru
      _
    // Predicated region
    $region26: #{masked_common_conv_forward.1} parent=1 // pred_check
      _
    $region27: #{masked_common_conv_forward.1} parent=1 // pred_check_branch
      %42 = sbr.rel (0) target = $region29
    $region28: #{masked_common_conv_forward.1} parent=1 // pred_region
      %s43 = sld [smem:[#allocation3]]
      %p44 = scmp.lt.s32.totalorder %s43, 2
      %s45 = scalar_select %p44, %s43, 2
      %s46 = smul.addr %s45, 4
      %s47 = smul.addr %s46, 8
      %s48 = scalar_lea.vmem %s7, %s47
      %s49 = sld [smem:[#allocation3]]
    $region29: #{masked_common_conv_forward.1} parent=1 // pred_fallthru
      _
    %s50 = sld [smem:[#allocation3]]
    %p51 = scmp.lt.s32.totalorder %s50, 2
    %s52 = scalar_select %p51, %s50, 2
    %s53 = smul.addr %s52, 5
    %s54 = smul.addr %s53, 2
    %s55 = scalar_lea.vmem %s3, %s54
    %s56 = sld [smem:[#allocation3]]
    %p57 = scmp.lt.s32.totalorder %s56, 2
    %s58 = scalar_select %p57, %s56, 2
    %s59 = smul.addr %s58, 9
    %s60 = smul.addr %s59, 8
    %s61 = scalar_lea.vmem %s5, %s60
    %s62 = sld [smem:[#allocation3]]
    %p63 = scmp.lt.s32.totalorder %s62, 2
    %s64 = scalar_select %p63, %s62, 2
    %s65 = smul.addr %s64, 4
    %s66 = smul.addr %s65, 8
    %s67 = scalar_lea.vmem %s7, %s66
    %s68 = sld [smem:[#allocation3]]
    %p69 = scmp.lt.s32.totalorder %s68, 2
    %s70 = scalar_select %p69, %s68, 2
    %s71 = smul.addr %s70, 5
    %s72 = smul.addr %s71, 2
    %s73 = scalar_lea.vmem %s3, %s72
    %s74 = sld [smem:[#allocation3]]
    %s75 = sld [smem:[#allocation3]]
    %p76 = scmp.lt.s32.totalorder %s75, 2
    %s77 = scalar_select %p76, %s75, 2
    %s78 = smul.addr %s77, 9
    %s79 = smul.addr %s78, 8
    %s80 = scalar_lea.vmem %s5, %s79
    %s81 = sld [smem:[#allocation3]]
    %s82 = sld [smem:[#allocation3]]
    %p83 = scmp.lt.s32.totalorder %s82, 2
    %s84 = scalar_select %p83, %s82, 2
    %s85 = smul.addr %s84, 4
    %s86 = smul.addr %s85, 8
    %s87 = scalar_lea.vmem %s7, %s86
    %s88 = sld [smem:[#allocation3]]
    %v90 = vld [vmem:[%s2] sm:$0xff]
    %v91 = vld [vmem:[%s2 + $0x8] sm:$0xff]
    %v92 = vld [vmem:[%s2 + $0x10] sm:$0xff]
    %v93 = vld [vmem:[%s2 + $0x18] sm:$0xff]
    %v94 = vld [vmem:[%s2 + $0x20] sm:$0xf]
    %v95 = vld [vmem:[%s73] sm:$0x3]
    %v96 = vld [vmem:[%s73 + $0x2] sm:$0x3]
    %v97 = vld [vmem:[%s73 + $0x4] sm:$0x3]
    %v98 = vld [vmem:[%s73 + $0x6] sm:$0x3]
    %v99 = vld [vmem:[%s73 + $0x8] sm:$0x1]
    %v100 = vunpack.c.0.s8 %v95
    %v101 = vunpack.c.0.s8 %v96
    %v102 = vunpack.c.0.s8 %v97
    %v103 = vunpack.c.0.s8 %v98
    %v104 = vunpack.c.0.s8 %v99
    %v105 = vcvt.s32.f32 %v100
    %v106 = vcvt.s32.f32 %v101
    %v107 = vcvt.s32.f32 %v102
    %v108 = vcvt.s32.f32 %v103
    %v109 = vcvt.s32.f32 %v104
    %v110 = vmul.f32 %v90, %v105
    %v111 = vmul.f32 %v91, %v106
    %v112 = vmul.f32 %v92, %v107
    %v113 = vmul.f32 %v93, %v108
    %v114 = vmul.f32 %v94, %v109
    %v115 = vld [vmem:[%s1] sm:$0xff]
    %v116 = vld [vmem:[%s1 + $0x8] sm:$0xff]
    %v117 = vld [vmem:[%s1 + $0x10] sm:$0xff]
    %v118 = vld [vmem:[%s1 + $0x18] sm:$0xff]
    %v119 = vld [vmem:[%s1 + $0x20] sm:$0xff]
    %v120 = vld [vmem:[%s1 + $0x28] sm:$0xff]
    %v121 = vld [vmem:[%s1 + $0x30] sm:$0xff]
    %v122 = vld [vmem:[%s1 + $0x38] sm:$0xff]
    %v123 = vld [vmem:[%s1 + $0x40] sm:$0xff]
    %v124 = vld [vmem:[%s1 + $0x48] sm:$0xff]
    %v125 = vld [vmem:[%s1 + $0x50] sm:$0xff]
    %v126 = vld [vmem:[%s1 + $0x58] sm:$0xff]
    %v127 = vld [vmem:[%s1 + $0x60] sm:$0xff]
    %v128 = vld [vmem:[%s1 + $0x68] sm:$0xff]
    %v129 = vld [vmem:[%s1 + $0x70] sm:$0xff]
    %v130 = vld [vmem:[%s1 + $0x78] sm:$0xff]
    %v131 = vpack.c.bf16 %v116, %v115
    %v132 = vpack.c.bf16 %v118, %v117
    %v133 = vpack.c.bf16 %v120, %v119
    %v134 = vpack.c.bf16 %v122, %v121
    %v135 = vpack.c.bf16 %v124, %v123
    %v136 = vpack.c.bf16 %v126, %v125
    %v137 = vpack.c.bf16 %v128, %v127
    %v138 = vpack.c.bf16 %v130, %v129
    %v139 = vpack.c.bf16 %v111, %v110
    %v140 = vpack.c.bf16 %v113, %v112
    %v141 = vpack.c.bf16 %v114, %v114
    %vm142 = vcmask 293888
    %v144 = vsel %vm142, %v131, 0
    %v147 = vsel %vm142, %v132, 0
    %v150 = vsel %vm142, %v133, 0
    %v153 = vsel %vm142, %v134, 0
    %v156 = vsel %vm142, %v135, 0
    %v159 = vsel %vm142, %v136, 0
    %v162 = vsel %vm142, %v137, 0
    %v165 = vsel %vm142, %v138, 0
    %vm167 = vcmask 1041408
    %v169 = vsel %vm167, %v141, 0
    %171 = vmatprep.subr.bf16.mxu0 0
    %172 = vmatpush1.bf16.msra.mxu0 %v139
    %173 = vmatprep.subr.bf16.mxu0 0
    %174 = vmatpush1.bf16.msra.mxu0 %v140
    %175 = vmatprep.subr.bf16.mxu0 0
    %176 = vmatpush1.bf16.msra.mxu0 %v169
    %177 = vmatprep.subr.bf16.mxu0 0
    %178 = vmatpush1.bf16.msra.mxu0 0
    %179 = vmatprep.subr.bf16.mxu0 0
    %180 = vmatpush1.bf16.msra.mxu0 0
    %181 = vmatprep.subr.bf16.mxu0 0
    %182 = vmatpush1.bf16.msra.mxu0 0
    %183 = vmatprep.subr.bf16.mxu0 0
    %184 = vmatpush1.bf16.msra.mxu0 0
    %185 = vmatprep.subr.bf16.mxu0 0
    %186 = vmatpush1.bf16.msra.mxu0 0
    %187 = vmatprep.subr.bf16.mxu0 0
    %188 = vmatpush1.bf16.msra.mxu0 0
    %189 = vmatprep.subr.bf16.mxu0 0
    %190 = vmatpush1.bf16.msra.mxu0 0
    %191 = vmatprep.subr.bf16.mxu0 0
    %192 = vmatpush1.bf16.msra.mxu0 0
    %193 = vmatprep.subr.bf16.mxu0 0
    %194 = vmatpush1.bf16.msra.mxu0 0
    %195 = vmatprep.subr.bf16.mxu0 0
    %196 = vmatpush1.bf16.msra.mxu0 0
    %197 = vmatprep.subr.bf16.mxu0 0
    %198 = vmatpush1.bf16.msra.mxu0 0
    %199 = vmatprep.subr.bf16.mxu0 0
    %200 = vmatpush1.bf16.msra.mxu0 0
    %201 = vmatprep.subr.bf16.mxu0 0
    %202 = vmatpush1.bf16.msra.mxu0 0
    %203 = vmatprep.mubr.bf16.mxu0 0
    %204 = vmatmul.mubr.bf16.gmra.mrb[0].mxu0 %v144
    %v205 = vpop.f32.mrb[0].mxu0
    %v206 = vadd.f32 0.0, %v205
    %v207 = vpop.f32.mrb[0].mxu0
    %v208 = vpop.f32.mrb[0].mxu0
    %v209 = vadd.f32 0.0, %v208
    %v210 = vpop.f32.mrb[0].mxu0
    %211 = vmatprep.mubr.bf16.mxu0 0
    %212 = vmatmul.mubr.bf16.gmra.mrb[0].mxu0 %v147
    %v213 = vpop.f32.mrb[0].mxu0
    %v214 = vadd.f32 0.0, %v213
    %v215 = vpop.f32.mrb[0].mxu0
    %v216 = vpop.f32.mrb[0].mxu0
    %v217 = vadd.f32 0.0, %v216
    %v218 = vpop.f32.mrb[0].mxu0
    %219 = vmatprep.mubr.bf16.mxu0 0
    %220 = vmatmul.mubr.bf16.gmra.mrb[0].mxu0 %v150
    %v221 = vpop.f32.mrb[0].mxu0
    %v222 = vadd.f32 0.0, %v221
    %v223 = vpop.f32.mrb[0].mxu0
    %v224 = vpop.f32.mrb[0].mxu0
    %v225 = vadd.f32 0.0, %v224
    %v226 = vpop.f32.mrb[0].mxu0
    %227 = vmatprep.mubr.bf16.mxu0 0
    %228 = vmatmul.mubr.bf16.gmra.mrb[0].mxu0 %v153
    %v229 = vpop.f32.mrb[0].mxu0
    %v230 = vadd.f32 0.0, %v229
    %v231 = vpop.f32.mrb[0].mxu0
    %v232 = vpop.f32.mrb[0].mxu0
    %v233 = vadd.f32 0.0, %v232
    %v234 = vpop.f32.mrb[0].mxu0
    %235 = vmatprep.mubr.bf16.mxu0 0
    %236 = vmatmul.mubr.bf16.gmra.mrb[0].mxu0 %v156
    %v237 = vpop.f32.mrb[0].mxu0
    %v238 = vadd.f32 0.0, %v237
    %v239 = vpop.f32.mrb[0].mxu0
    %v240 = vpop.f32.mrb[0].mxu0
    %v241 = vadd.f32 0.0, %v240
    %v242 = vpop.f32.mrb[0].mxu0
    %243 = vmatprep.mubr.bf16.mxu0 0
    %244 = vmatmul.mubr.bf16.gmra.mrb[0].mxu0 %v159
    %v245 = vpop.f32.mrb[0].mxu0
    %v246 = vadd.f32 0.0, %v245
    %v247 = vpop.f32.mrb[0].mxu0
    %v248 = vpop.f32.mrb[0].mxu0
    %v249 = vadd.f32 0.0, %v248
    %v250 = vpop.f32.mrb[0].mxu0
    %251 = vmatprep.mubr.bf16.mxu0 0
    %252 = vmatmul.mubr.bf16.gmra.mrb[0].mxu0 %v162
    %v253 = vpop.f32.mrb[0].mxu0
    %v254 = vadd.f32 0.0, %v253
    %v255 = vpop.f32.mrb[0].mxu0
    %v256 = vpop.f32.mrb[0].mxu0
    %v257 = vadd.f32 0.0, %v256
    %v258 = vpop.f32.mrb[0].mxu0
    %259 = vmatprep.mubr.bf16.mxu0 0
    %260 = vmatmul.mubr.bf16.gmra.mrb[0].mxu0 %v165
    %v261 = vpop.f32.mrb[0].mxu0
    %v262 = vadd.f32 0.0, %v261
    %v263 = vpop.f32.mrb[0].mxu0
    %v264 = vpop.f32.mrb[0].mxu0
    %v265 = vadd.f32 0.0, %v264
    %v266 = vpop.f32.mrb[0].mxu0
    %267 = vdwg.mxu0
    %v268 = vmax.f32 %v206, 0.0
    %v269 = vmax.f32 %v209, 0.0
    %v270 = vmax.f32 %v214, 0.0
    %v271 = vmax.f32 %v217, 0.0
    %v272 = vmax.f32 %v222, 0.0
    %v273 = vmax.f32 %v225, 0.0
    %v274 = vmax.f32 %v230, 0.0
    %v275 = vmax.f32 %v233, 0.0
    %v276 = vmax.f32 %v238, 0.0
    %v277 = vmax.f32 %v241, 0.0
    %v278 = vmax.f32 %v246, 0.0
    %v279 = vmax.f32 %v249, 0.0
    %v280 = vmax.f32 %v254, 0.0
    %v281 = vmax.f32 %v257, 0.0
    %v282 = vmax.f32 %v262, 0.0
    %v283 = vmax.f32 %v265, 0.0
    %v284 = vlaneseq
    %v285 = vshrl.u32 %v284, 7
    %v286 = vadd.s32 %v285, 8
    %v287 = vadd.s32 %v285, 16
    %v288 = vadd.s32 %v285, 24
    %v289 = vlaneseq
    %v290 = vand.u32 %v289, 127
    %v291 = vshra.s32 %v285, 4
    %v292 = vshra.s32 %v286, 4
    %v293 = vshra.s32 %v287, 4
    %v294 = vshra.s32 %v288, 4
    %v295 = vshra.s32 %v290, 6
    %vm296 = vcmp.eq.s32.totalorder %v291, %v295
    %vm297 = vcmp.eq.s32.totalorder %v292, %v295
    %vm298 = vcmp.eq.s32.totalorder %v293, %v295
    %vm299 = vcmp.eq.s32.totalorder %v294, %v295
    %v300 = vand.u32 %v285, 15
    %v301 = vand.u32 %v286, 15
    %v302 = vand.u32 %v287, 15
    %v303 = vand.u32 %v288, 15
    %v304 = vshra.s32 %v300, 2
    %v305 = vshra.s32 %v301, 2
    %v306 = vshra.s32 %v302, 2
    %v307 = vshra.s32 %v303, 2
    %v308 = vand.u32 %v285, 3
    %v309 = vand.u32 %v286, 3
    %v310 = vand.u32 %v287, 3
    %v311 = vand.u32 %v288, 3
    %v312 = vand.u32 %v290, 63
    %v313 = vshra.s32 %v312, 3
    %v314 = vand.u32 %v290, 7
    %v315 = vld [vmem:[%s4] sm:$0xff]
    %v316 = vld [vmem:[%s4 + $0x8] sm:$0xff]
    %v317 = vld [vmem:[%s4 + $0x10] sm:$0xff]
    %v318 = vld [vmem:[%s4 + $0x18] sm:$0xff]
    %v319 = vld [vmem:[%s4 + $0x20] sm:$0xff]
    %v320 = vld [vmem:[%s4 + $0x28] sm:$0xff]
    %v321 = vld [vmem:[%s4 + $0x30] sm:$0xff]
    %v322 = vld [vmem:[%s4 + $0x38] sm:$0xff]
    %v323 = vld [vmem:[%s4 + $0x40] sm:$0xff]
    %v324 = vld [vmem:[%s4 + $0x48] sm:$0xff]
    %v325 = vld [vmem:[%s4 + $0x50] sm:$0xff]
    %v326 = vld [vmem:[%s4 + $0x58] sm:$0xff]
    %v327 = vld [vmem:[%s4 + $0x60] sm:$0xff]
    %v328 = vld [vmem:[%s4 + $0x68] sm:$0xff]
    %v329 = vld [vmem:[%s4 + $0x70] sm:$0xff]
    %v330 = vld [vmem:[%s4 + $0x78] sm:$0xff]
    %v331 = vld [vmem:[%s4 + $0x80] sm:$0xff]
    %v332 = vld [vmem:[%s4 + $0x88] sm:$0xff]
    %v333 = vld [vmem:[%s4 + $0x90] sm:$0xff]
    %v334 = vld [vmem:[%s4 + $0x98] sm:$0xff]
    %v335 = vld [vmem:[%s4 + $0xa0] sm:$0xff]
    %v336 = vld [vmem:[%s4 + $0xa8] sm:$0xff]
    %v337 = vld [vmem:[%s4 + $0xb0] sm:$0xff]
    %v338 = vld [vmem:[%s4 + $0xb8] sm:$0xff]
    %v339 = vld [vmem:[%s4 + $0xc0] sm:$0xff]
    %v340 = vld [vmem:[%s4 + $0xc8] sm:$0xff]
    %v341 = vld [vmem:[%s4 + $0xd0] sm:$0xff]
    %v342 = vld [vmem:[%s4 + $0xd8] sm:$0xff]
    %v343 = vld [vmem:[%s4 + $0xe0] sm:$0xff]
    %v344 = vld [vmem:[%s4 + $0xe8] sm:$0xff]
    %v345 = vld [vmem:[%s4 + $0xf0] sm:$0xff]
    %v346 = vld [vmem:[%s4 + $0xf8] sm:$0xff]
    %v347 = vld [vmem:[%s4 + $0x100] sm:$0xff]
    %v348 = vld [vmem:[%s4 + $0x108] sm:$0xff]
    %v349 = vld [vmem:[%s4 + $0x110] sm:$0xff]
    %v350 = vld [vmem:[%s4 + $0x118] sm:$0xff]
    %v351 = vld [vmem:[%s80] sm:$0xff]
    %v352 = vld [vmem:[%s80 + $0x8] sm:$0xff]
    %v353 = vld [vmem:[%s80 + $0x10] sm:$0xff]
    %v354 = vld [vmem:[%s80 + $0x18] sm:$0xff]
    %v355 = vld [vmem:[%s80 + $0x20] sm:$0xff]
    %v356 = vld [vmem:[%s80 + $0x28] sm:$0xff]
    %v357 = vld [vmem:[%s80 + $0x30] sm:$0xff]
    %v358 = vld [vmem:[%s80 + $0x38] sm:$0xff]
    %v359 = vld [vmem:[%s80 + $0x40] sm:$0xff]
    %v360 = vunpack.c.0.s8 %v351
    %v361 = vunpack.c.1.s8 %v351
    %v362 = vunpack.c.2.s8 %v351
    %v363 = vunpack.c.3.s8 %v351
    %v364 = vunpack.c.0.s8 %v352
    %v365 = vunpack.c.1.s8 %v352
    %v366 = vunpack.c.2.s8 %v352
    %v367 = vunpack.c.3.s8 %v352
    %v368 = vunpack.c.0.s8 %v353
    %v369 = vunpack.c.1.s8 %v353
    %v370 = vunpack.c.2.s8 %v353
    %v371 = vunpack.c.3.s8 %v353
    %v372 = vunpack.c.0.s8 %v354
    %v373 = vunpack.c.1.s8 %v354
    %v374 = vunpack.c.2.s8 %v354
    %v375 = vunpack.c.3.s8 %v354
    %v376 = vunpack.c.0.s8 %v355
    %v377 = vunpack.c.1.s8 %v355
    %v378 = vunpack.c.2.s8 %v355
    %v379 = vunpack.c.3.s8 %v355
    %v380 = vunpack.c.0.s8 %v356
    %v381 = vunpack.c.1.s8 %v356
    %v382 = vunpack.c.2.s8 %v356
    %v383 = vunpack.c.3.s8 %v356
    %v384 = vunpack.c.0.s8 %v357
    %v385 = vunpack.c.1.s8 %v357
    %v386 = vunpack.c.2.s8 %v357
    %v387 = vunpack.c.3.s8 %v357
    %v388 = vunpack.c.0.s8 %v358
    %v389 = vunpack.c.1.s8 %v358
    %v390 = vunpack.c.2.s8 %v358
    %v391 = vunpack.c.3.s8 %v358
    %v392 = vunpack.c.0.s8 %v359
    %v393 = vunpack.c.1.s8 %v359
    %v394 = vunpack.c.2.s8 %v359
    %v395 = vunpack.c.3.s8 %v359
    %v396 = vcvt.s32.f32 %v360
    %v397 = vcvt.s32.f32 %v361
    %v398 = vcvt.s32.f32 %v362
    %v399 = vcvt.s32.f32 %v363
    %v400 = vcvt.s32.f32 %v364
    %v401 = vcvt.s32.f32 %v365
    %v402 = vcvt.s32.f32 %v366
    %v403 = vcvt.s32.f32 %v367
    %v404 = vcvt.s32.f32 %v368
    %v405 = vcvt.s32.f32 %v369
    %v406 = vcvt.s32.f32 %v370
    %v407 = vcvt.s32.f32 %v371
    %v408 = vcvt.s32.f32 %v372
    %v409 = vcvt.s32.f32 %v373
    %v410 = vcvt.s32.f32 %v374
    %v411 = vcvt.s32.f32 %v375
    %v412 = vcvt.s32.f32 %v376
    %v413 = vcvt.s32.f32 %v377
    %v414 = vcvt.s32.f32 %v378
    %v415 = vcvt.s32.f32 %v379
    %v416 = vcvt.s32.f32 %v380
    %v417 = vcvt.s32.f32 %v381
    %v418 = vcvt.s32.f32 %v382
    %v419 = vcvt.s32.f32 %v383
    %v420 = vcvt.s32.f32 %v384
    %v421 = vcvt.s32.f32 %v385
    %v422 = vcvt.s32.f32 %v386
    %v423 = vcvt.s32.f32 %v387
    %v424 = vcvt.s32.f32 %v388
    %v425 = vcvt.s32.f32 %v389
    %v426 = vcvt.s32.f32 %v390
    %v427 = vcvt.s32.f32 %v391
    %v428 = vcvt.s32.f32 %v392
    %v429 = vcvt.s32.f32 %v393
    %v430 = vcvt.s32.f32 %v394
    %v431 = vcvt.s32.f32 %v395
    %v432 = vmul.f32 %v315, %v396
    %v433 = vmul.f32 %v316, %v397
    %v434 = vmul.f32 %v317, %v398
    %v435 = vmul.f32 %v318, %v399
    %v436 = vmul.f32 %v319, %v400
    %v437 = vmul.f32 %v320, %v401
    %v438 = vmul.f32 %v321, %v402
    %v439 = vmul.f32 %v322, %v403
    %v440 = vmul.f32 %v323, %v404
    %v441 = vmul.f32 %v324, %v405
    %v442 = vmul.f32 %v325, %v406
    %v443 = vmul.f32 %v326, %v407
    %v444 = vmul.f32 %v327, %v408
    %v445 = vmul.f32 %v328, %v409
    %v446 = vmul.f32 %v329, %v410
    %v447 = vmul.f32 %v330, %v411
    %v448 = vmul.f32 %v331, %v412
    %v449 = vmul.f32 %v332, %v413
    %v450 = vmul.f32 %v333, %v414
    %v451 = vmul.f32 %v334, %v415
    %v452 = vmul.f32 %v335, %v416
    %v453 = vmul.f32 %v336, %v417
    %v454 = vmul.f32 %v337, %v418
    %v455 = vmul.f32 %v338, %v419
    %v456 = vmul.f32 %v339, %v420
    %v457 = vmul.f32 %v340, %v421
    %v458 = vmul.f32 %v341, %v422
    %v459 = vmul.f32 %v342, %v423
    %v460 = vmul.f32 %v343, %v424
    %v461 = vmul.f32 %v344, %v425
    %v462 = vmul.f32 %v345, %v426
    %v463 = vmul.f32 %v346, %v427
    %v464 = vmul.f32 %v347, %v428
    %v465 = vmul.f32 %v348, %v429
    %v466 = vmul.f32 %v349, %v430
    %v467 = vmul.f32 %v350, %v431
    %v468 = vpack.c.bf16 %v433, %v432
    %v469 = vpack.c.bf16 %v435, %v434
    %v470 = vpack.c.bf16 %v437, %v436
    %v471 = vpack.c.bf16 %v439, %v438
    %v472 = vpack.c.bf16 %v441, %v440
    %v473 = vpack.c.bf16 %v443, %v442
    %v474 = vpack.c.bf16 %v445, %v444
    %v475 = vpack.c.bf16 %v447, %v446
    %v476 = vpack.c.bf16 %v449, %v448
    %v477 = vpack.c.bf16 %v451, %v450
    %v478 = vpack.c.bf16 %v453, %v452
    %v479 = vpack.c.bf16 %v455, %v454
    %v480 = vpack.c.bf16 %v457, %v456
    %v481 = vpack.c.bf16 %v459, %v458
    %v482 = vpack.c.bf16 %v461, %v460
    %v483 = vpack.c.bf16 %v463, %v462
    %v484 = vpack.c.bf16 %v465, %v464
    %v485 = vpack.c.bf16 %v467, %v466
    %v486 = vmul.u32 %v304, 2
    %v487 = vmul.u32 %v305, 2
    %v488 = vmul.u32 %v306, 2
    %v489 = vmul.u32 %v307, 2
    %v490 = vadd.s32 %v486, 4294967295
    %v491 = vadd.s32 %v487, 4294967295
    %v492 = vadd.s32 %v488, 4294967295
    %v493 = vadd.s32 %v489, 4294967295
    %vm494 = vcmp.eq.s32.totalorder %v313, %v490
    %vm495 = vcmp.eq.s32.totalorder %v313, %v491
    %vm496 = vcmp.eq.s32.totalorder %v313, %v492
    %vm497 = vcmp.eq.s32.totalorder %v313, %v493
    %vm498 = vmand %vm296, %vm494
    %vm499 = vmand %vm297, %vm495
    %vm500 = vmand %vm298, %vm496
    %vm501 = vmand %vm299, %vm497
    %v502 = vmul.u32 %v308, 2
    %v503 = vmul.u32 %v309, 2
    %v504 = vmul.u32 %v310, 2
    %v505 = vmul.u32 %v311, 2
    %v506 = vadd.s32 %v502, 4294967295
    %v507 = vadd.s32 %v503, 4294967295
    %v508 = vadd.s32 %v504, 4294967295
    %v509 = vadd.s32 %v505, 4294967295
    %vm510 = vcmp.eq.s32.totalorder %v314, %v506
    %vm511 = vcmp.eq.s32.totalorder %v314, %v507
    %vm512 = vcmp.eq.s32.totalorder %v314, %v508
    %vm513 = vcmp.eq.s32.totalorder %v314, %v509
    %vm514 = vmand %vm498, %vm510
    %vm515 = vmand %vm499, %vm511
    %vm516 = vmand %vm500, %vm512
    %vm517 = vmand %vm501, %vm513
    %v518 = vsel %vm514, 1.0, 0.0
    %v519 = vsel %vm515, 1.0, 0.0
    %v520 = vsel %vm516, 1.0, 0.0
    %v521 = vsel %vm517, 1.0, 0.0
    %522 = vmatprep.subr.mxu0 0.0
    %523 = vmatpush1.msra.mxu0 %v268
    %524 = vmatprep.subr.mxu0 0.0
    %525 = vmatpush1.msra.mxu0 %v269
    %526 = vmatprep.subr.mxu0 0.0
    %527 = vmatpush1.msra.mxu0 %v270
    %528 = vmatprep.subr.mxu0 0.0
    %529 = vmatpush1.msra.mxu0 %v271
    %530 = vmatprep.subr.mxu0 0.0
    %531 = vmatpush1.msra.mxu0 %v272
    %532 = vmatprep.subr.mxu0 0.0
    %533 = vmatpush1.msra.mxu0 %v273
    %534 = vmatprep.subr.mxu0 0.0
    %535 = vmatpush1.msra.mxu0 %v274
    %536 = vmatprep.subr.mxu0 0.0
    %537 = vmatpush1.msra.mxu0 %v275
    %538 = vmatprep.subr.mxu0 0.0
    %539 = vmatpush1.msra.mxu0 %v276
    %540 = vmatprep.subr.mxu0 0.0
    %541 = vmatpush1.msra.mxu0 %v277
    %542 = vmatprep.subr.mxu0 0.0
    %543 = vmatpush1.msra.mxu0 %v278
    %544 = vmatprep.subr.mxu0 0.0
    %545 = vmatpush1.msra.mxu0 %v279
    %546 = vmatprep.subr.mxu0 0.0
    %547 = vmatpush1.msra.mxu0 %v280
    %548 = vmatprep.subr.mxu0 0.0
    %549 = vmatpush1.msra.mxu0 %v281
    %550 = vmatprep.subr.mxu0 0.0
    %551 = vmatpush1.msra.mxu0 %v282
    %552 = vmatprep.subr.mxu0 0.0
    %553 = vmatpush1.msra.mxu0 %v283
    %554 = vmatprep.subr.mxu0 0.0
    %555 = vmatpush1.msra.mxu0 0.0
    %556 = vmatprep.subr.mxu0 0.0
    %557 = vmatpush1.msra.mxu0 0.0
    %558 = vmatprep.subr.mxu0 0.0
    %559 = vmatpush1.msra.mxu0 0.0
    %560 = vmatprep.subr.mxu0 0.0
    %561 = vmatpush1.msra.mxu0 0.0
    %562 = vmatprep.subr.mxu0 0.0
    %563 = vmatpush1.msra.mxu0 0.0
    %564 = vmatprep.subr.mxu0 0.0
    %565 = vmatpush1.msra.mxu0 0.0
    %566 = vmatprep.subr.mxu0 0.0
    %567 = vmatpush1.msra.mxu0 0.0
    %568 = vmatprep.subr.mxu0 0.0
    %569 = vmatpush1.msra.mxu0 0.0
    %570 = vmatprep.subr.mxu0 0.0
    %571 = vmatpush1.msra.mxu0 0.0
    %572 = vmatprep.subr.mxu0 0.0
    %573 = vmatpush1.msra.mxu0 0.0
    %574 = vmatprep.subr.mxu0 0.0
    %575 = vmatpush1.msra.mxu0 0.0
    %576 = vmatprep.subr.mxu0 0.0
    %577 = vmatpush1.msra.mxu0 0.0
    %578 = vmatprep.subr.mxu0 0.0
    %579 = vmatpush1.msra.mxu0 0.0
    %580 = vmatprep.subr.mxu0 0.0
    %581 = vmatpush1.msra.mxu0 0.0
    %582 = vmatprep.subr.mxu0 0.0
    %583 = vmatpush1.msra.mxu0 0.0
    %584 = vmatprep.subr.mxu0 0.0
    %585 = vmatpush1.msra.mxu0 0.0
    %586 = vmatprep.mubr.f32.mxu0 0.0
    %587 = vmatmul.mubr.f32.gmra.mrb[0].mxu0 %v518
    %v588 = vpop.f32.mrb[0].mxu0
    %v589 = vadd.f32 0.0, %v588
    %v590 = vpop.f32.mrb[0].mxu0
    %591 = vmatprep.mubr.f32.mxu0 0.0
    %592 = vmatmul.mubr.f32.gmra.mrb[0].mxu0 %v519
    %v593 = vpop.f32.mrb[0].mxu0
    %v594 = vadd.f32 0.0, %v593
    %v595 = vpop.f32.mrb[0].mxu0
    %596 = vmatprep.mubr.f32.mxu0 0.0
    %597 = vmatmul.mubr.f32.gmra.mrb[0].mxu0 %v520
    %v598 = vpop.f32.mrb[0].mxu0
    %v599 = vadd.f32 0.0, %v598
    %v600 = vpop.f32.mrb[0].mxu0
    %601 = vmatprep.mubr.f32.mxu0 0.0
    %602 = vmatmul.mubr.f32.gmra.mrb[0].mxu0 %v521
    %v603 = vpop.f32.mrb[0].mxu0
    %v604 = vadd.f32 0.0, %v603
    %v605 = vpop.f32.mrb[0].mxu0
    %606 = vdwg.mxu0
    %v607 = vpack.c.bf16 %v594, %v589
    %v608 = vpack.c.bf16 %v604, %v599
    %vm609 = vcmp.eq.s32.totalorder %v314, %v502
    %vm610 = vcmp.eq.s32.totalorder %v314, %v503
    %vm611 = vcmp.eq.s32.totalorder %v314, %v504
    %vm612 = vcmp.eq.s32.totalorder %v314, %v505
    %vm613 = vmand %vm498, %vm609
    %vm614 = vmand %vm499, %vm610
    %vm615 = vmand %vm500, %vm611
    %vm616 = vmand %vm501, %vm612
    %v617 = vsel %vm613, 1.0, 0.0
    %v618 = vsel %vm614, 1.0, 0.0
    %v619 = vsel %vm615, 1.0, 0.0
    %v620 = vsel %vm616, 1.0, 0.0
    %621 = vmatprep.subr.mxu0 0.0
    %622 = vmatpush1.msra.mxu0 %v268
    %623 = vmatprep.subr.mxu0 0.0
    %624 = vmatpush1.msra.mxu0 %v269
    %625 = vmatprep.subr.mxu0 0.0
    %626 = vmatpush1.msra.mxu0 %v270
    %627 = vmatprep.subr.mxu0 0.0
    %628 = vmatpush1.msra.mxu0 %v271
    %629 = vmatprep.subr.mxu0 0.0
    %630 = vmatpush1.msra.mxu0 %v272
    %631 = vmatprep.subr.mxu0 0.0
    %632 = vmatpush1.msra.mxu0 %v273
    %633 = vmatprep.subr.mxu0 0.0
    %634 = vmatpush1.msra.mxu0 %v274
    %635 = vmatprep.subr.mxu0 0.0
    %636 = vmatpush1.msra.mxu0 %v275
    %637 = vmatprep.subr.mxu0 0.0
    %638 = vmatpush1.msra.mxu0 %v276
    %639 = vmatprep.subr.mxu0 0.0
    %640 = vmatpush1.msra.mxu0 %v277
    %641 = vmatprep.subr.mxu0 0.0
    %642 = vmatpush1.msra.mxu0 %v278
    %643 = vmatprep.subr.mxu0 0.0
    %644 = vmatpush1.msra.mxu0 %v279
    %645 = vmatprep.subr.mxu0 0.0
    %646 = vmatpush1.msra.mxu0 %v280
    %647 = vmatprep.subr.mxu0 0.0
    %648 = vmatpush1.msra.mxu0 %v281
    %649 = vmatprep.subr.mxu0 0.0
    %650 = vmatpush1.msra.mxu0 %v282
    %651 = vmatprep.subr.mxu0 0.0
    %652 = vmatpush1.msra.mxu0 %v283
    %653 = vmatprep.subr.mxu0 0.0
    %654 = vmatpush1.msra.mxu0 0.0
    %655 = vmatprep.subr.mxu0 0.0
    %656 = vmatpush1.msra.mxu0 0.0
    %657 = vmatprep.subr.mxu0 0.0
    %658 = vmatpush1.msra.mxu0 0.0
    %659 = vmatprep.subr.mxu0 0.0
    %660 = vmatpush1.msra.mxu0 0.0
    %661 = vmatprep.subr.mxu0 0.0
    %662 = vmatpush1.msra.mxu0 0.0
    %663 = vmatprep.subr.mxu0 0.0
    %664 = vmatpush1.msra.mxu0 0.0
    %665 = vmatprep.subr.mxu0 0.0
    %666 = vmatpush1.msra.mxu0 0.0
    %667 = vmatprep.subr.mxu0 0.0
    %668 = vmatpush1.msra.mxu0 0.0
    %669 = vmatprep.subr.mxu0 0.0
    %670 = vmatpush1.msra.mxu0 0.0
    %671 = vmatprep.subr.mxu0 0.0
    %672 = vmatpush1.msra.mxu0 0.0
    %673 = vmatprep.subr.mxu0 0.0
    %674 = vmatpush1.msra.mxu0 0.0
    %675 = vmatprep.subr.mxu0 0.0
    %676 = vmatpush1.msra.mxu0 0.0
    %677 = vmatprep.subr.mxu0 0.0
    %678 = vmatpush1.msra.mxu0 0.0
    %679 = vmatprep.subr.mxu0 0.0
    %680 = vmatpush1.msra.mxu0 0.0
    %681 = vmatprep.subr.mxu0 0.0
    %682 = vmatpush1.msra.mxu0 0.0
    %683 = vmatprep.subr.mxu0 0.0
    %684 = vmatpush1.msra.mxu0 0.0
    %685 = vmatprep.mubr.f32.mxu0 0.0
    %686 = vmatmul.mubr.f32.gmra.mrb[0].mxu0 %v617
    %v687 = vpop.f32.mrb[0].mxu0
    %v688 = vadd.f32 0.0, %v687
    %v689 = vpop.f32.mrb[0].mxu0
    %690 = vmatprep.mubr.f32.mxu0 0.0
    %691 = vmatmul.mubr.f32.gmra.mrb[0].mxu0 %v618
    %v692 = vpop.f32.mrb[0].mxu0
    %v693 = vadd.f32 0.0, %v692
    %v694 = vpop.f32.mrb[0].mxu0
    %695 = vmatprep.mubr.f32.mxu0 0.0
    %696 = vmatmul.mubr.f32.gmra.mrb[0].mxu0 %v619
    %v697 = vpop.f32.mrb[0].mxu0
    %v698 = vadd.f32 0.0, %v697
    %v699 = vpop.f32.mrb[0].mxu0
    %700 = vmatprep.mubr.f32.mxu0 0.0
    %701 = vmatmul.mubr.f32.gmra.mrb[0].mxu0 %v620
    %v702 = vpop.f32.mrb[0].mxu0
    %v703 = vadd.f32 0.0, %v702
    %v704 = vpop.f32.mrb[0].mxu0
    %705 = vdwg.mxu0
    %v706 = vpack.c.bf16 %v693, %v688
    %v707 = vpack.c.bf16 %v703, %v698
    %vm708 = vcmask 261120
    %v710 = vsel %vm708, %v706, 0
    %v713 = vsel %vm708, %v707, 0
    %715 = vmatprep.subr.bf16.mxu0 0
    %716 = vmatpush1.bf16.msra.mxu0 %v470
    %717 = vmatprep.subr.bf16.mxu0 0
    %718 = vmatpush1.bf16.msra.mxu0 %v471
    %719 = vmatprep.subr.bf16.mxu0 0
    %720 = vmatpush1.bf16.msra.mxu0 0
    %721 = vmatprep.subr.bf16.mxu0 0
    %722 = vmatpush1.bf16.msra.mxu0 0
    %723 = vmatprep.subr.bf16.mxu0 0
    %724 = vmatpush1.bf16.msra.mxu0 0
    %725 = vmatprep.subr.bf16.mxu0 0
    %726 = vmatpush1.bf16.msra.mxu0 0
    %727 = vmatprep.subr.bf16.mxu0 0
    %728 = vmatpush1.bf16.msra.mxu0 0
    %729 = vmatprep.subr.bf16.mxu0 0
    %730 = vmatpush1.bf16.msra.mxu0 0
    %731 = vmatprep.subr.bf16.mxu0 0
    %732 = vmatpush1.bf16.msra.mxu0 0
    %733 = vmatprep.subr.bf16.mxu0 0
    %734 = vmatpush1.bf16.msra.mxu0 0
    %735 = vmatprep.subr.bf16.mxu0 0
    %736 = vmatpush1.bf16.msra.mxu0 0
    %737 = vmatprep.subr.bf16.mxu0 0
    %738 = vmatpush1.bf16.msra.mxu0 0
    %739 = vmatprep.subr.bf16.mxu0 0
    %740 = vmatpush1.bf16.msra.mxu0 0
    %741 = vmatprep.subr.bf16.mxu0 0
    %742 = vmatpush1.bf16.msra.mxu0 0
    %743 = vmatprep.subr.bf16.mxu0 0
    %744 = vmatpush1.bf16.msra.mxu0 0
    %745 = vmatprep.subr.bf16.mxu0 0
    %746 = vmatpush1.bf16.msra.mxu0 0
    %747 = vmatprep.mubr.bf16.mxu0 0
    %748 = vmatmul.mubr.bf16.gmra.mrb[0].mxu0 %v710
    %v749 = vpop.f32.mrb[0].mxu0
    %v750 = vadd.f32 0.0, %v749
    %v751 = vpop.f32.mrb[0].mxu0
    %v752 = vpop.f32.mrb[0].mxu0
    %v753 = vadd.f32 0.0, %v752
    %v754 = vpop.f32.mrb[0].mxu0
    %755 = vmatprep.mubr.bf16.mxu0 0
    %756 = vmatmul.mubr.bf16.gmra.mrb[0].mxu0 %v713
    %v757 = vpop.f32.mrb[0].mxu0
    %v758 = vadd.f32 0.0, %v757
    %v759 = vpop.f32.mrb[0].mxu0
    %v760 = vpop.f32.mrb[0].mxu0
    %v761 = vadd.f32 0.0, %v760
    %v762 = vpop.f32.mrb[0].mxu0
    %763 = vdwg.mxu0
    %v765 = vsel %vm708, %v607, 0
    %v768 = vsel %vm708, %v608, 0
    %770 = vmatprep.subr.bf16.mxu0 0
    %771 = vmatpush1.bf16.msra.mxu0 %v468
    %772 = vmatprep.subr.bf16.mxu0 0
    %773 = vmatpush1.bf16.msra.mxu0 %v469
    %774 = vmatprep.subr.bf16.mxu0 0
    %775 = vmatpush1.bf16.msra.mxu0 0
    %776 = vmatprep.subr.bf16.mxu0 0
    %777 = vmatpush1.bf16.msra.mxu0 0
    %778 = vmatprep.subr.bf16.mxu0 0
    %779 = vmatpush1.bf16.msra.mxu0 0
    %780 = vmatprep.subr.bf16.mxu0 0
    %781 = vmatpush1.bf16.msra.mxu0 0
    %782 = vmatprep.subr.bf16.mxu0 0
    %783 = vmatpush1.bf16.msra.mxu0 0
    %784 = vmatprep.subr.bf16.mxu0 0
    %785 = vmatpush1.bf16.msra.mxu0 0
    %786 = vmatprep.subr.bf16.mxu0 0
    %787 = vmatpush1.bf16.msra.mxu0 0
    %788 = vmatprep.subr.bf16.mxu0 0
    %789 = vmatpush1.bf16.msra.mxu0 0
    %790 = vmatprep.subr.bf16.mxu0 0
    %791 = vmatpush1.bf16.msra.mxu0 0
    %792 = vmatprep.subr.bf16.mxu0 0
    %793 = vmatpush1.bf16.msra.mxu0 0
    %794 = vmatprep.subr.bf16.mxu0 0
    %795 = vmatpush1.bf16.msra.mxu0 0
    %796 = vmatprep.subr.bf16.mxu0 0
    %797 = vmatpush1.bf16.msra.mxu0 0
    %798 = vmatprep.subr.bf16.mxu0 0
    %799 = vmatpush1.bf16.msra.mxu0 0
    %800 = vmatprep.subr.bf16.mxu0 0
    %801 = vmatpush1.bf16.msra.mxu0 0
    %802 = vmatprep.mubr.bf16.mxu0 0
    %803 = vmatmul.mubr.bf16.gmra.mrb[0].mxu0 %v765
    %v804 = vpop.f32.mrb[0].mxu0
    %v805 = vadd.f32 %v750, %v804
    %v806 = vpop.f32.mrb[0].mxu0
    %v807 = vpop.f32.mrb[0].mxu0
    %v808 = vadd.f32 %v753, %v807
    %v809 = vpop.f32.mrb[0].mxu0
    %810 = vmatprep.mubr.bf16.mxu0 0
    %811 = vmatmul.mubr.bf16.gmra.mrb[0].mxu0 %v768
    %v812 = vpop.f32.mrb[0].mxu0
    %v813 = vadd.f32 %v758, %v812
    %v814 = vpop.f32.mrb[0].mxu0
    %v815 = vpop.f32.mrb[0].mxu0
    %v816 = vadd.f32 %v761, %v815
    %v817 = vpop.f32.mrb[0].mxu0
    %818 = vdwg.mxu0
    %v819 = vadd.s32 %v502, 1
    %v820 = vadd.s32 %v503, 1
    %v821 = vadd.s32 %v504, 1
    %v822 = vadd.s32 %v505, 1
    %vm823 = vcmp.eq.s32.totalorder %v314, %v819
    %vm824 = vcmp.eq.s32.totalorder %v314, %v820
    %vm825 = vcmp.eq.s32.totalorder %v314, %v821
    %vm826 = vcmp.eq.s32.totalorder %v314, %v822
    %vm827 = vmand %vm498, %vm823
    %vm828 = vmand %vm499, %vm824
    %vm829 = vmand %vm500, %vm825
    %vm830 = vmand %vm501, %vm826
    %v831 = vsel %vm827, 1.0, 0.0
    %v832 = vsel %vm828, 1.0, 0.0
    %v833 = vsel %vm829, 1.0, 0.0
    %v834 = vsel %vm830, 1.0, 0.0
    %835 = vmatprep.subr.mxu0 0.0
    %836 = vmatpush1.msra.mxu0 %v268
    %837 = vmatprep.subr.mxu0 0.0
    %838 = vmatpush1.msra.mxu0 %v269
    %839 = vmatprep.subr.mxu0 0.0
    %840 = vmatpush1.msra.mxu0 %v270
    %841 = vmatprep.subr.mxu0 0.0
    %842 = vmatpush1.msra.mxu0 %v271
    %843 = vmatprep.subr.mxu0 0.0
    %844 = vmatpush1.msra.mxu0 %v272
    %845 = vmatprep.subr.mxu0 0.0
    %846 = vmatpush1.msra.mxu0 %v273
    %847 = vmatprep.subr.mxu0 0.0
    %848 = vmatpush1.msra.mxu0 %v274
    %849 = vmatprep.subr.mxu0 0.0
    %850 = vmatpush1.msra.mxu0 %v275
    %851 = vmatprep.subr.mxu0 0.0
    %852 = vmatpush1.msra.mxu0 %v276
    %853 = vmatprep.subr.mxu0 0.0
    %854 = vmatpush1.msra.mxu0 %v277
    %855 = vmatprep.subr.mxu0 0.0
    %856 = vmatpush1.msra.mxu0 %v278
    %857 = vmatprep.subr.mxu0 0.0
    %858 = vmatpush1.msra.mxu0 %v279
    %859 = vmatprep.subr.mxu0 0.0
    %860 = vmatpush1.msra.mxu0 %v280
    %861 = vmatprep.subr.mxu0 0.0
    %862 = vmatpush1.msra.mxu0 %v281
    %863 = vmatprep.subr.mxu0 0.0
    %864 = vmatpush1.msra.mxu0 %v282
    %865 = vmatprep.subr.mxu0 0.0
    %866 = vmatpush1.msra.mxu0 %v283
    %867 = vmatprep.subr.mxu0 0.0
    %868 = vmatpush1.msra.mxu0 0.0
    %869 = vmatprep.subr.mxu0 0.0
    %870 = vmatpush1.msra.mxu0 0.0
    %871 = vmatprep.subr.mxu0 0.0
    %872 = vmatpush1.msra.mxu0 0.0
    %873 = vmatprep.subr.mxu0 0.0
    %874 = vmatpush1.msra.mxu0 0.0
    %875 = vmatprep.subr.mxu0 0.0
    %876 = vmatpush1.msra.mxu0 0.0
    %877 = vmatprep.subr.mxu0 0.0
    %878 = vmatpush1.msra.mxu0 0.0
    %879 = vmatprep.subr.mxu0 0.0
    %880 = vmatpush1.msra.mxu0 0.0
    %881 = vmatprep.subr.mxu0 0.0
    %882 = vmatpush1.msra.mxu0 0.0
    %883 = vmatprep.subr.mxu0 0.0
    %884 = vmatpush1.msra.mxu0 0.0
    %885 = vmatprep.subr.mxu0 0.0
    %886 = vmatpush1.msra.mxu0 0.0
    %887 = vmatprep.subr.mxu0 0.0
    %888 = vmatpush1.msra.mxu0 0.0
    %889 = vmatprep.subr.mxu0 0.0
    %890 = vmatpush1.msra.mxu0 0.0
    %891 = vmatprep.subr.mxu0 0.0
    %892 = vmatpush1.msra.mxu0 0.0
    %893 = vmatprep.subr.mxu0 0.0
    %894 = vmatpush1.msra.mxu0 0.0
    %895 = vmatprep.subr.mxu0 0.0
    %896 = vmatpush1.msra.mxu0 0.0
    %897 = vmatprep.subr.mxu0 0.0
    %898 = vmatpush1.msra.mxu0 0.0
    %899 = vmatprep.mubr.f32.mxu0 0.0
    %900 = vmatmul.mubr.f32.gmra.mrb[0].mxu0 %v831
    %v901 = vpop.f32.mrb[0].mxu0
    %v902 = vadd.f32 0.0, %v901
    %v903 = vpop.f32.mrb[0].mxu0
    %904 = vmatprep.mubr.f32.mxu0 0.0
    %905 = vmatmul.mubr.f32.gmra.mrb[0].mxu0 %v832
    %v906 = vpop.f32.mrb[0].mxu0
    %v907 = vadd.f32 0.0, %v906
    %v908 = vpop.f32.mrb[0].mxu0
    %909 = vmatprep.mubr.f32.mxu0 0.0
    %910 = vmatmul.mubr.f32.gmra.mrb[0].mxu0 %v833
    %v911 = vpop.f32.mrb[0].mxu0
    %v912 = vadd.f32 0.0, %v911
    %v913 = vpop.f32.mrb[0].mxu0
    %914 = vmatprep.mubr.f32.mxu0 0.0
    %915 = vmatmul.mubr.f32.gmra.mrb[0].mxu0 %v834
    %v916 = vpop.f32.mrb[0].mxu0
    %v917 = vadd.f32 0.0, %v916
    %v918 = vpop.f32.mrb[0].mxu0
    %919 = vdwg.mxu0
    %v920 = vpack.c.bf16 %v907, %v902
    %v921 = vpack.c.bf16 %v917, %v912
    %v923 = vsel %vm708, %v920, 0
    %v926 = vsel %vm708, %v921, 0
    %928 = vmatprep.subr.bf16.mxu0 0
    %929 = vmatpush1.bf16.msra.mxu0 %v472
    %930 = vmatprep.subr.bf16.mxu0 0
    %931 = vmatpush1.bf16.msra.mxu0 %v473
    %932 = vmatprep.subr.bf16.mxu0 0
    %933 = vmatpush1.bf16.msra.mxu0 0
    %934 = vmatprep.subr.bf16.mxu0 0
    %935 = vmatpush1.bf16.msra.mxu0 0
    %936 = vmatprep.subr.bf16.mxu0 0
    %937 = vmatpush1.bf16.msra.mxu0 0
    %938 = vmatprep.subr.bf16.mxu0 0
    %939 = vmatpush1.bf16.msra.mxu0 0
    %940 = vmatprep.subr.bf16.mxu0 0
    %941 = vmatpush1.bf16.msra.mxu0 0
    %942 = vmatprep.subr.bf16.mxu0 0
    %943 = vmatpush1.bf16.msra.mxu0 0
    %944 = vmatprep.subr.bf16.mxu0 0
    %945 = vmatpush1.bf16.msra.mxu0 0
    %946 = vmatprep.subr.bf16.mxu0 0
    %947 = vmatpush1.bf16.msra.mxu0 0
    %948 = vmatprep.subr.bf16.mxu0 0
    %949 = vmatpush1.bf16.msra.mxu0 0
    %950 = vmatprep.subr.bf16.mxu0 0
    %951 = vmatpush1.bf16.msra.mxu0 0
    %952 = vmatprep.subr.bf16.mxu0 0
    %953 = vmatpush1.bf16.msra.mxu0 0
    %954 = vmatprep.subr.bf16.mxu0 0
    %955 = vmatpush1.bf16.msra.mxu0 0
    %956 = vmatprep.subr.bf16.mxu0 0
    %957 = vmatpush1.bf16.msra.mxu0 0
    %958 = vmatprep.subr.bf16.mxu0 0
    %959 = vmatpush1.bf16.msra.mxu0 0
    %960 = vmatprep.mubr.bf16.mxu0 0
    %961 = vmatmul.mubr.bf16.gmra.mrb[0].mxu0 %v923
    %v962 = vpop.f32.mrb[0].mxu0
    %v963 = vadd.f32 0.0, %v962
    %v964 = vpop.f32.mrb[0].mxu0
    %v965 = vpop.f32.mrb[0].mxu0
    %v966 = vadd.f32 0.0, %v965
    %v967 = vpop.f32.mrb[0].mxu0
    %968 = vmatprep.mubr.bf16.mxu0 0
    %969 = vmatmul.mubr.bf16.gmra.mrb[0].mxu0 %v926
    %v970 = vpop.f32.mrb[0].mxu0
    %v971 = vadd.f32 0.0, %v970
    %v972 = vpop.f32.mrb[0].mxu0
    %v973 = vpop.f32.mrb[0].mxu0
    %v974 = vadd.f32 0.0, %v973
    %v975 = vpop.f32.mrb[0].mxu0
    %976 = vdwg.mxu0
    %v977 = vadd.f32 %v805, %v963
    %v978 = vadd.f32 %v808, %v966
    %v979 = vadd.f32 %v813, %v971
    %v980 = vadd.f32 %v816, %v974
    %vm981 = vcmp.eq.s32.totalorder %v313, %v486
    %vm982 = vcmp.eq.s32.totalorder %v313, %v487
    %vm983 = vcmp.eq.s32.totalorder %v313, %v488
    %vm984 = vcmp.eq.s32.totalorder %v313, %v489
    %vm985 = vmand %vm296, %vm981
    %vm986 = vmand %vm297, %vm982
    %vm987 = vmand %vm298, %vm983
    %vm988 = vmand %vm299, %vm984
    %vm989 = vmand %vm985, %vm510
    %vm990 = vmand %vm986, %vm511
    %vm991 = vmand %vm987, %vm512
    %vm992 = vmand %vm988, %vm513
    %v993 = vsel %vm989, 1.0, 0.0
    %v994 = vsel %vm990, 1.0, 0.0
    %v995 = vsel %vm991, 1.0, 0.0
    %v996 = vsel %vm992, 1.0, 0.0
    %997 = vmatprep.subr.mxu0 0.0
    %998 = vmatpush1.msra.mxu0 %v268
    %999 = vmatprep.subr.mxu0 0.0
    %1000 = vmatpush1.msra.mxu0 %v269
    %1001 = vmatprep.subr.mxu0 0.0
    %1002 = vmatpush1.msra.mxu0 %v270
    %1003 = vmatprep.subr.mxu0 0.0
    %1004 = vmatpush1.msra.mxu0 %v271
    %1005 = vmatprep.subr.mxu0 0.0
    %1006 = vmatpush1.msra.mxu0 %v272
    %1007 = vmatprep.subr.mxu0 0.0
    %1008 = vmatpush1.msra.mxu0 %v273
    %1009 = vmatprep.subr.mxu0 0.0
    %1010 = vmatpush1.msra.mxu0 %v274
    %1011 = vmatprep.subr.mxu0 0.0
    %1012 = vmatpush1.msra.mxu0 %v275
    %1013 = vmatprep.subr.mxu0 0.0
    %1014 = vmatpush1.msra.mxu0 %v276
    %1015 = vmatprep.subr.mxu0 0.0
    %1016 = vmatpush1.msra.mxu0 %v277
    %1017 = vmatprep.subr.mxu0 0.0
    %1018 = vmatpush1.msra.mxu0 %v278
    %1019 = vmatprep.subr.mxu0 0.0
    %1020 = vmatpush1.msra.mxu0 %v279
    %1021 = vmatprep.subr.mxu0 0.0
    %1022 = vmatpush1.msra.mxu0 %v280
    %1023 = vmatprep.subr.mxu0 0.0
    %1024 = vmatpush1.msra.mxu0 %v281
    %1025 = vmatprep.subr.mxu0 0.0
    %1026 = vmatpush1.msra.mxu0 %v282
    %1027 = vmatprep.subr.mxu0 0.0
    %1028 = vmatpush1.msra.mxu0 %v283
    %1029 = vmatprep.subr.mxu0 0.0
    %1030 = vmatpush1.msra.mxu0 0.0
    %1031 = vmatprep.subr.mxu0 0.0
    %1032 = vmatpush1.msra.mxu0 0.0
    %1033 = vmatprep.subr.mxu0 0.0
    %1034 = vmatpush1.msra.mxu0 0.0
    %1035 = vmatprep.subr.mxu0 0.0
    %1036 = vmatpush1.msra.mxu0 0.0
    %1037 = vmatprep.subr.mxu0 0.0
    %1038 = vmatpush1.msra.mxu0 0.0
    %1039 = vmatprep.subr.mxu0 0.0
    %1040 = vmatpush1.msra.mxu0 0.0
    %1041 = vmatprep.subr.mxu0 0.0
    %1042 = vmatpush1.msra.mxu0 0.0
    %1043 = vmatprep.subr.mxu0 0.0
    %1044 = vmatpush1.msra.mxu0 0.0
    %1045 = vmatprep.subr.mxu0 0.0
    %1046 = vmatpush1.msra.mxu0 0.0
    %1047 = vmatprep.subr.mxu0 0.0
    %1048 = vmatpush1.msra.mxu0 0.0
    %1049 = vmatprep.subr.mxu0 0.0
    %1050 = vmatpush1.msra.mxu0 0.0
    %1051 = vmatprep.subr.mxu0 0.0
    %1052 = vmatpush1.msra.mxu0 0.0
    %1053 = vmatprep.subr.mxu0 0.0
    %1054 = vmatpush1.msra.mxu0 0.0
    %1055 = vmatprep.subr.mxu0 0.0
    %1056 = vmatpush1.msra.mxu0 0.0
    %1057 = vmatprep.subr.mxu0 0.0
    %1058 = vmatpush1.msra.mxu0 0.0
    %1059 = vmatprep.subr.mxu0 0.0
    %1060 = vmatpush1.msra.mxu0 0.0
    %1061 = vmatprep.mubr.f32.mxu0 0.0
    %1062 = vmatmul.mubr.f32.gmra.mrb[0].mxu0 %v993
    %v1063 = vpop.f32.mrb[0].mxu0
    %v1064 = vadd.f32 0.0, %v1063
    %v1065 = vpop.f32.mrb[0].mxu0
    %1066 = vmatprep.mubr.f32.mxu0 0.0
    %1067 = vmatmul.mubr.f32.gmra.mrb[0].mxu0 %v994
    %v1068 = vpop.f32.mrb[0].mxu0
    %v1069 = vadd.f32 0.0, %v1068
    %v1070 = vpop.f32.mrb[0].mxu0
    %1071 = vmatprep.mubr.f32.mxu0 0.0
    %1072 = vmatmul.mubr.f32.gmra.mrb[0].mxu0 %v995
    %v1073 = vpop.f32.mrb[0].mxu0
    %v1074 = vadd.f32 0.0, %v1073
    %v1075 = vpop.f32.mrb[0].mxu0
    %1076 = vmatprep.mubr.f32.mxu0 0.0
    %1077 = vmatmul.mubr.f32.gmra.mrb[0].mxu0 %v996
    %v1078 = vpop.f32.mrb[0].mxu0
    %v1079 = vadd.f32 0.0, %v1078
    %v1080 = vpop.f32.mrb[0].mxu0
    %1081 = vdwg.mxu0
    %v1082 = vpack.c.bf16 %v1069, %v1064
    %v1083 = vpack.c.bf16 %v1079, %v1074
    %v1085 = vsel %vm708, %v1082, 0
    %v1088 = vsel %vm708, %v1083, 0
    %1090 = vmatprep.subr.bf16.mxu0 0
    %1091 = vmatpush1.bf16.msra.mxu0 %v474
    %1092 = vmatprep.subr.bf16.mxu0 0
    %1093 = vmatpush1.bf16.msra.mxu0 %v475
    %1094 = vmatprep.subr.bf16.mxu0 0
    %1095 = vmatpush1.bf16.msra.mxu0 0
    %1096 = vmatprep.subr.bf16.mxu0 0
    %1097 = vmatpush1.bf16.msra.mxu0 0
    %1098 = vmatprep.subr.bf16.mxu0 0
    %1099 = vmatpush1.bf16.msra.mxu0 0
    %1100 = vmatprep.subr.bf16.mxu0 0
    %1101 = vmatpush1.bf16.msra.mxu0 0
    %1102 = vmatprep.subr.bf16.mxu0 0
    %1103 = vmatpush1.bf16.msra.mxu0 0
    %1104 = vmatprep.subr.bf16.mxu0 0
    %1105 = vmatpush1.bf16.msra.mxu0 0
    %1106 = vmatprep.subr.bf16.mxu0 0
    %1107 = vmatpush1.bf16.msra.mxu0 0
    %1108 = vmatprep.subr.bf16.mxu0 0
    %1109 = vmatpush1.bf16.msra.mxu0 0
    %1110 = vmatprep.subr.bf16.mxu0 0
    %1111 = vmatpush1.bf16.msra.mxu0 0
    %1112 = vmatprep.subr.bf16.mxu0 0
    %1113 = vmatpush1.bf16.msra.mxu0 0
    %1114 = vmatprep.subr.bf16.mxu0 0
    %1115 = vmatpush1.bf16.msra.mxu0 0
    %1116 = vmatprep.subr.bf16.mxu0 0
    %1117 = vmatpush1.bf16.msra.mxu0 0
    %1118 = vmatprep.subr.bf16.mxu0 0
    %1119 = vmatpush1.bf16.msra.mxu0 0
    %1120 = vmatprep.subr.bf16.mxu0 0
    %1121 = vmatpush1.bf16.msra.mxu0 0
    %1122 = vmatprep.mubr.bf16.mxu0 0
    %1123 = vmatmul.mubr.bf16.gmra.mrb[0].mxu0 %v1085
    %v1124 = vpop.f32.mrb[0].mxu0
    %v1125 = vadd.f32 0.0, %v1124
    %v1126 = vpop.f32.mrb[0].mxu0
    %v1127 = vpop.f32.mrb[0].mxu0
    %v1128 = vadd.f32 0.0, %v1127
    %v1129 = vpop.f32.mrb[0].mxu0
    %1130 = vmatprep.mubr.bf16.mxu0 0
    %1131 = vmatmul.mubr.bf16.gmra.mrb[0].mxu0 %v1088
    %v1132 = vpop.f32.mrb[0].mxu0
    %v1133 = vadd.f32 0.0, %v1132
    %v1134 = vpop.f32.mrb[0].mxu0
    %v1135 = vpop.f32.mrb[0].mxu0
    %v1136 = vadd.f32 0.0, %v1135
    %v1137 = vpop.f32.mrb[0].mxu0
    %1138 = vdwg.mxu0
    %v1139 = vadd.f32 %v977, %v1125
    %v1140 = vadd.f32 %v978, %v1128
    %v1141 = vadd.f32 %v979, %v1133
    %v1142 = vadd.f32 %v980, %v1136
    %vm1143 = vmand %vm985, %vm609
    %vm1144 = vmand %vm986, %vm610
    %vm1145 = vmand %vm987, %vm611
    %vm1146 = vmand %vm988, %vm612
    %v1147 = vsel %vm1143, 1.0, 0.0
    %v1148 = vsel %vm1144, 1.0, 0.0
    %v1149 = vsel %vm1145, 1.0, 0.0
    %v1150 = vsel %vm1146, 1.0, 0.0
    %1151 = vmatprep.subr.mxu0 0.0
    %1152 = vmatpush1.msra.mxu0 %v268
    %1153 = vmatprep.subr.mxu0 0.0
    %1154 = vmatpush1.msra.mxu0 %v269
    %1155 = vmatprep.subr.mxu0 0.0
    %1156 = vmatpush1.msra.mxu0 %v270
    %1157 = vmatprep.subr.mxu0 0.0
    %1158 = vmatpush1.msra.mxu0 %v271
    %1159 = vmatprep.subr.mxu0 0.0
    %1160 = vmatpush1.msra.mxu0 %v272
    %1161 = vmatprep.subr.mxu0 0.0
    %1162 = vmatpush1.msra.mxu0 %v273
    %1163 = vmatprep.subr.mxu0 0.0
    %1164 = vmatpush1.msra.mxu0 %v274
    %1165 = vmatprep.subr.mxu0 0.0
    %1166 = vmatpush1.msra.mxu0 %v275
    %1167 = vmatprep.subr.mxu0 0.0
    %1168 = vmatpush1.msra.mxu0 %v276
    %1169 = vmatprep.subr.mxu0 0.0
    %1170 = vmatpush1.msra.mxu0 %v277
    %1171 = vmatprep.subr.mxu0 0.0
    %1172 = vmatpush1.msra.mxu0 %v278
    %1173 = vmatprep.subr.mxu0 0.0
    %1174 = vmatpush1.msra.mxu0 %v279
    %1175 = vmatprep.subr.mxu0 0.0
    %1176 = vmatpush1.msra.mxu0 %v280
    %1177 = vmatprep.subr.mxu0 0.0
    %1178 = vmatpush1.msra.mxu0 %v281
    %1179 = vmatprep.subr.mxu0 0.0
    %1180 = vmatpush1.msra.mxu0 %v282
    %1181 = vmatprep.subr.mxu0 0.0
    %1182 = vmatpush1.msra.mxu0 %v283
    %1183 = vmatprep.subr.mxu0 0.0
    %1184 = vmatpush1.msra.mxu0 0.0
    %1185 = vmatprep.subr.mxu0 0.0
    %1186 = vmatpush1.msra.mxu0 0.0
    %1187 = vmatprep.subr.mxu0 0.0
    %1188 = vmatpush1.msra.mxu0 0.0
    %1189 = vmatprep.subr.mxu0 0.0
    %1190 = vmatpush1.msra.mxu0 0.0
    %1191 = vmatprep.subr.mxu0 0.0
    %1192 = vmatpush1.msra.mxu0 0.0
    %1193 = vmatprep.subr.mxu0 0.0
    %1194 = vmatpush1.msra.mxu0 0.0
    %1195 = vmatprep.subr.mxu0 0.0
    %1196 = vmatpush1.msra.mxu0 0.0
    %1197 = vmatprep.subr.mxu0 0.0
    %1198 = vmatpush1.msra.mxu0 0.0
    %1199 = vmatprep.subr.mxu0 0.0
    %1200 = vmatpush1.msra.mxu0 0.0
    %1201 = vmatprep.subr.mxu0 0.0
    %1202 = vmatpush1.msra.mxu0 0.0
    %1203 = vmatprep.subr.mxu0 0.0
    %1204 = vmatpush1.msra.mxu0 0.0
    %1205 = vmatprep.subr.mxu0 0.0
    %1206 = vmatpush1.msra.mxu0 0.0
    %1207 = vmatprep.subr.mxu0 0.0
    %1208 = vmatpush1.msra.mxu0 0.0
    %1209 = vmatprep.subr.mxu0 0.0
    %1210 = vmatpush1.msra.mxu0 0.0
    %1211 = vmatprep.subr.mxu0 0.0
    %1212 = vmatpush1.msra.mxu0 0.0
    %1213 = vmatprep.subr.mxu0 0.0
    %1214 = vmatpush1.msra.mxu0 0.0
    %1215 = vmatprep.mubr.f32.mxu0 0.0
    %1216 = vmatmul.mubr.f32.gmra.mrb[0].mxu0 %v1147
    %v1217 = vpop.f32.mrb[0].mxu0
    %v1218 = vadd.f32 0.0, %v1217
    %v1219 = vpop.f32.mrb[0].mxu0
    %1220 = vmatprep.mubr.f32.mxu0 0.0
    %1221 = vmatmul.mubr.f32.gmra.mrb[0].mxu0 %v1148
    %v1222 = vpop.f32.mrb[0].mxu0
    %v1223 = vadd.f32 0.0, %v1222
    %v1224 = vpop.f32.mrb[0].mxu0
    %1225 = vmatprep.mubr.f32.mxu0 0.0
    %1226 = vmatmul.mubr.f32.gmra.mrb[0].mxu0 %v1149
    %v1227 = vpop.f32.mrb[0].mxu0
    %v1228 = vadd.f32 0.0, %v1227
    %v1229 = vpop.f32.mrb[0].mxu0
    %1230 = vmatprep.mubr.f32.mxu0 0.0
    %1231 = vmatmul.mubr.f32.gmra.mrb[0].mxu0 %v1150
    %v1232 = vpop.f32.mrb[0].mxu0
    %v1233 = vadd.f32 0.0, %v1232
    %v1234 = vpop.f32.mrb[0].mxu0
    %1235 = vdwg.mxu0
    %v1236 = vpack.c.bf16 %v1223, %v1218
    %v1237 = vpack.c.bf16 %v1233, %v1228
    %v1239 = vsel %vm708, %v1236, 0
    %v1242 = vsel %vm708, %v1237, 0
    %1244 = vmatprep.subr.bf16.mxu0 0
    %1245 = vmatpush1.bf16.msra.mxu0 %v476
    %1246 = vmatprep.subr.bf16.mxu0 0
    %1247 = vmatpush1.bf16.msra.mxu0 %v477
    %1248 = vmatprep.subr.bf16.mxu0 0
    %1249 = vmatpush1.bf16.msra.mxu0 0
    %1250 = vmatprep.subr.bf16.mxu0 0
    %1251 = vmatpush1.bf16.msra.mxu0 0
    %1252 = vmatprep.subr.bf16.mxu0 0
    %1253 = vmatpush1.bf16.msra.mxu0 0
    %1254 = vmatprep.subr.bf16.mxu0 0
    %1255 = vmatpush1.bf16.msra.mxu0 0
    %1256 = vmatprep.subr.bf16.mxu0 0
    %1257 = vmatpush1.bf16.msra.mxu0 0
    %1258 = vmatprep.subr.bf16.mxu0 0
    %1259 = vmatpush1.bf16.msra.mxu0 0
    %1260 = vmatprep.subr.bf16.mxu0 0
    %1261 = vmatpush1.bf16.msra.mxu0 0
    %1262 = vmatprep.subr.bf16.mxu0 0
    %1263 = vmatpush1.bf16.msra.mxu0 0
    %1264 = vmatprep.subr.bf16.mxu0 0
    %1265 = vmatpush1.bf16.msra.mxu0 0
    %1266 = vmatprep.subr.bf16.mxu0 0
    %1267 = vmatpush1.bf16.msra.mxu0 0
    %1268 = vmatprep.subr.bf16.mxu0 0
    %1269 = vmatpush1.bf16.msra.mxu0 0
    %1270 = vmatprep.subr.bf16.mxu0 0
    %1271 = vmatpush1.bf16.msra.mxu0 0
    %1272 = vmatprep.subr.bf16.mxu0 0
    %1273 = vmatpush1.bf16.msra.mxu0 0
    %1274 = vmatprep.subr.bf16.mxu0 0
    %1275 = vmatpush1.bf16.msra.mxu0 0
    %1276 = vmatprep.mubr.bf16.mxu0 0
    %1277 = vmatmul.mubr.bf16.gmra.mrb[0].mxu0 %v1239
    %v1278 = vpop.f32.mrb[0].mxu0
    %v1279 = vadd.f32 0.0, %v1278
    %v1280 = vpop.f32.mrb[0].mxu0
    %v1281 = vpop.f32.mrb[0].mxu0
    %v1282 = vadd.f32 0.0, %v1281
    %v1283 = vpop.f32.mrb[0].mxu0
    %1284 = vmatprep.mubr.bf16.mxu0 0
    %1285 = vmatmul.mubr.bf16.gmra.mrb[0].mxu0 %v1242
    %v1286 = vpop.f32.mrb[0].mxu0
    %v1287 = vadd.f32 0.0, %v1286
    %v1288 = vpop.f32.mrb[0].mxu0
    %v1289 = vpop.f32.mrb[0].mxu0
    %v1290 = vadd.f32 0.0, %v1289
    %v1291 = vpop.f32.mrb[0].mxu0
    %1292 = vdwg.mxu0
    %v1293 = vadd.f32 %v1139, %v1279
    %v1294 = vadd.f32 %v1140, %v1282
    %v1295 = vadd.f32 %v1141, %v1287
    %v1296 = vadd.f32 %v1142, %v1290
    %vm1297 = vmand %vm985, %vm823
    %vm1298 = vmand %vm986, %vm824
    %vm1299 = vmand %vm987, %vm825
    %vm1300 = vmand %vm988, %vm826
    %v1301 = vsel %vm1297, 1.0, 0.0
    %v1302 = vsel %vm1298, 1.0, 0.0
    %v1303 = vsel %vm1299, 1.0, 0.0
    %v1304 = vsel %vm1300, 1.0, 0.0
    %1305 = vmatprep.subr.mxu0 0.0
    %1306 = vmatpush1.msra.mxu0 %v268
    %1307 = vmatprep.subr.mxu0 0.0
    %1308 = vmatpush1.msra.mxu0 %v269
    %1309 = vmatprep.subr.mxu0 0.0
    %1310 = vmatpush1.msra.mxu0 %v270
    %1311 = vmatprep.subr.mxu0 0.0
    %1312 = vmatpush1.msra.mxu0 %v271
    %1313 = vmatprep.subr.mxu0 0.0
    %1314 = vmatpush1.msra.mxu0 %v272
    %1315 = vmatprep.subr.mxu0 0.0
    %1316 = vmatpush1.msra.mxu0 %v273
    %1317 = vmatprep.subr.mxu0 0.0
    %1318 = vmatpush1.msra.mxu0 %v274
    %1319 = vmatprep.subr.mxu0 0.0
    %1320 = vmatpush1.msra.mxu0 %v275
    %1321 = vmatprep.subr.mxu0 0.0
    %1322 = vmatpush1.msra.mxu0 %v276
    %1323 = vmatprep.subr.mxu0 0.0
    %1324 = vmatpush1.msra.mxu0 %v277
    %1325 = vmatprep.subr.mxu0 0.0
    %1326 = vmatpush1.msra.mxu0 %v278
    %1327 = vmatprep.subr.mxu0 0.0
    %1328 = vmatpush1.msra.mxu0 %v279
    %1329 = vmatprep.subr.mxu0 0.0
    %1330 = vmatpush1.msra.mxu0 %v280
    %1331 = vmatprep.subr.mxu0 0.0
    %1332 = vmatpush1.msra.mxu0 %v281
    %1333 = vmatprep.subr.mxu0 0.0
    %1334 = vmatpush1.msra.mxu0 %v282
    %1335 = vmatprep.subr.mxu0 0.0
    %1336 = vmatpush1.msra.mxu0 %v283
    %1337 = vmatprep.subr.mxu0 0.0
    %1338 = vmatpush1.msra.mxu0 0.0
    %1339 = vmatprep.subr.mxu0 0.0
    %1340 = vmatpush1.msra.mxu0 0.0
    %1341 = vmatprep.subr.mxu0 0.0
    %1342 = vmatpush1.msra.mxu0 0.0
    %1343 = vmatprep.subr.mxu0 0.0
    %1344 = vmatpush1.msra.mxu0 0.0
    %1345 = vmatprep.subr.mxu0 0.0
    %1346 = vmatpush1.msra.mxu0 0.0
    %1347 = vmatprep.subr.mxu0 0.0
    %1348 = vmatpush1.msra.mxu0 0.0
    %1349 = vmatprep.subr.mxu0 0.0
    %1350 = vmatpush1.msra.mxu0 0.0
    %1351 = vmatprep.subr.mxu0 0.0
    %1352 = vmatpush1.msra.mxu0 0.0
    %1353 = vmatprep.subr.mxu0 0.0
    %1354 = vmatpush1.msra.mxu0 0.0
    %1355 = vmatprep.subr.mxu0 0.0
    %1356 = vmatpush1.msra.mxu0 0.0
    %1357 = vmatprep.subr.mxu0 0.0
    %1358 = vmatpush1.msra.mxu0 0.0
    %1359 = vmatprep.subr.mxu0 0.0
    %1360 = vmatpush1.msra.mxu0 0.0
    %1361 = vmatprep.subr.mxu0 0.0
    %1362 = vmatpush1.msra.mxu0 0.0
    %1363 = vmatprep.subr.mxu0 0.0
    %1364 = vmatpush1.msra.mxu0 0.0
    %1365 = vmatprep.subr.mxu0 0.0
    %1366 = vmatpush1.msra.mxu0 0.0
    %1367 = vmatprep.subr.mxu0 0.0
    %1368 = vmatpush1.msra.mxu0 0.0
    %1369 = vmatprep.mubr.f32.mxu0 0.0
    %1370 = vmatmul.mubr.f32.gmra.mrb[0].mxu0 %v1301
    %v1371 = vpop.f32.mrb[0].mxu0
    %v1372 = vadd.f32 0.0, %v1371
    %v1373 = vpop.f32.mrb[0].mxu0
    %1374 = vmatprep.mubr.f32.mxu0 0.0
    %1375 = vmatmul.mubr.f32.gmra.mrb[0].mxu0 %v1302
    %v1376 = vpop.f32.mrb[0].mxu0
    %v1377 = vadd.f32 0.0, %v1376
    %v1378 = vpop.f32.mrb[0].mxu0
    %1379 = vmatprep.mubr.f32.mxu0 0.0
    %1380 = vmatmul.mubr.f32.gmra.mrb[0].mxu0 %v1303
    %v1381 = vpop.f32.mrb[0].mxu0
    %v1382 = vadd.f32 0.0, %v1381
    %v1383 = vpop.f32.mrb[0].mxu0
    %1384 = vmatprep.mubr.f32.mxu0 0.0
    %1385 = vmatmul.mubr.f32.gmra.mrb[0].mxu0 %v1304
    %v1386 = vpop.f32.mrb[0].mxu0
    %v1387 = vadd.f32 0.0, %v1386
    %v1388 = vpop.f32.mrb[0].mxu0
    %1389 = vdwg.mxu0
    %v1390 = vpack.c.bf16 %v1377, %v1372
    %v1391 = vpack.c.bf16 %v1387, %v1382
    %v1393 = vsel %vm708, %v1390, 0
    %v1396 = vsel %vm708, %v1391, 0
    %1398 = vmatprep.subr.bf16.mxu0 0
    %1399 = vmatpush1.bf16.msra.mxu0 %v478
    %1400 = vmatprep.subr.bf16.mxu0 0
    %1401 = vmatpush1.bf16.msra.mxu0 %v479
    %1402 = vmatprep.subr.bf16.mxu0 0
    %1403 = vmatpush1.bf16.msra.mxu0 0
    %1404 = vmatprep.subr.bf16.mxu0 0
    %1405 = vmatpush1.bf16.msra.mxu0 0
    %1406 = vmatprep.subr.bf16.mxu0 0
    %1407 = vmatpush1.bf16.msra.mxu0 0
    %1408 = vmatprep.subr.bf16.mxu0 0
    %1409 = vmatpush1.bf16.msra.mxu0 0
    %1410 = vmatprep.subr.bf16.mxu0 0
    %1411 = vmatpush1.bf16.msra.mxu0 0
    %1412 = vmatprep.subr.bf16.mxu0 0
    %1413 = vmatpush1.bf16.msra.mxu0 0
    %1414 = vmatprep.subr.bf16.mxu0 0
    %1415 = vmatpush1.bf16.msra.mxu0 0
    %1416 = vmatprep.subr.bf16.mxu0 0
    %1417 = vmatpush1.bf16.msra.mxu0 0
    %1418 = vmatprep.subr.bf16.mxu0 0
    %1419 = vmatpush1.bf16.msra.mxu0 0
    %1420 = vmatprep.subr.bf16.mxu0 0
    %1421 = vmatpush1.bf16.msra.mxu0 0
    %1422 = vmatprep.subr.bf16.mxu0 0
    %1423 = vmatpush1.bf16.msra.mxu0 0
    %1424 = vmatprep.subr.bf16.mxu0 0
    %1425 = vmatpush1.bf16.msra.mxu0 0
    %1426 = vmatprep.subr.bf16.mxu0 0
    %1427 = vmatpush1.bf16.msra.mxu0 0
    %1428 = vmatprep.subr.bf16.mxu0 0
    %1429 = vmatpush1.bf16.msra.mxu0 0
    %1430 = vmatprep.mubr.bf16.mxu0 0
    %1431 = vmatmul.mubr.bf16.gmra.mrb[0].mxu0 %v1393
    %v1432 = vpop.f32.mrb[0].mxu0
    %v1433 = vadd.f32 0.0, %v1432
    %v1434 = vpop.f32.mrb[0].mxu0
    %v1435 = vpop.f32.mrb[0].mxu0
    %v1436 = vadd.f32 0.0, %v1435
    %v1437 = vpop.f32.mrb[0].mxu0
    %1438 = vmatprep.mubr.bf16.mxu0 0
    %1439 = vmatmul.mubr.bf16.gmra.mrb[0].mxu0 %v1396
    %v1440 = vpop.f32.mrb[0].mxu0
    %v1441 = vadd.f32 0.0, %v1440
    %v1442 = vpop.f32.mrb[0].mxu0
    %v1443 = vpop.f32.mrb[0].mxu0
    %v1444 = vadd.f32 0.0, %v1443
    %v1445 = vpop.f32.mrb[0].mxu0
    %1446 = vdwg.mxu0
    %v1447 = vadd.f32 %v1293, %v1433
    %v1448 = vadd.f32 %v1294, %v1436
    %v1449 = vadd.f32 %v1295, %v1441
    %v1450 = vadd.f32 %v1296, %v1444
    %v1451 = vadd.s32 %v486, 1
    %v1452 = vadd.s32 %v487, 1
    %v1453 = vadd.s32 %v488, 1
    %v1454 = vadd.s32 %v489, 1
    %vm1455 = vcmp.eq.s32.totalorder %v313, %v1451
    %vm1456 = vcmp.eq.s32.totalorder %v313, %v1452
    %vm1457 = vcmp.eq.s32.totalorder %v313, %v1453
    %vm1458 = vcmp.eq.s32.totalorder %v313, %v1454
    %vm1459 = vmand %vm296, %vm1455
    %vm1460 = vmand %vm297, %vm1456
    %vm1461 = vmand %vm298, %vm1457
    %vm1462 = vmand %vm299, %vm1458
    %vm1463 = vmand %vm1459, %vm510
    %vm1464 = vmand %vm1460, %vm511
    %vm1465 = vmand %vm1461, %vm512
    %vm1466 = vmand %vm1462, %vm513
    %v1467 = vsel %vm1463, 1.0, 0.0
    %v1468 = vsel %vm1464, 1.0, 0.0
    %v1469 = vsel %vm1465, 1.0, 0.0
    %v1470 = vsel %vm1466, 1.0, 0.0
    %1471 = vmatprep.subr.mxu0 0.0
    %1472 = vmatpush1.msra.mxu0 %v268
    %1473 = vmatprep.subr.mxu0 0.0
    %1474 = vmatpush1.msra.mxu0 %v269
    %1475 = vmatprep.subr.mxu0 0.0
    %1476 = vmatpush1.msra.mxu0 %v270
    %1477 = vmatprep.subr.mxu0 0.0
    %1478 = vmatpush1.msra.mxu0 %v271
    %1479 = vmatprep.subr.mxu0 0.0
    %1480 = vmatpush1.msra.mxu0 %v272
    %1481 = vmatprep.subr.mxu0 0.0
    %1482 = vmatpush1.msra.mxu0 %v273
    %1483 = vmatprep.subr.mxu0 0.0
    %1484 = vmatpush1.msra.mxu0 %v274
    %1485 = vmatprep.subr.mxu0 0.0
    %1486 = vmatpush1.msra.mxu0 %v275
    %1487 = vmatprep.subr.mxu0 0.0
    %1488 = vmatpush1.msra.mxu0 %v276
    %1489 = vmatprep.subr.mxu0 0.0
    %1490 = vmatpush1.msra.mxu0 %v277
    %1491 = vmatprep.subr.mxu0 0.0
    %1492 = vmatpush1.msra.mxu0 %v278
    %1493 = vmatprep.subr.mxu0 0.0
    %1494 = vmatpush1.msra.mxu0 %v279
    %1495 = vmatprep.subr.mxu0 0.0
    %1496 = vmatpush1.msra.mxu0 %v280
    %1497 = vmatprep.subr.mxu0 0.0
    %1498 = vmatpush1.msra.mxu0 %v281
    %1499 = vmatprep.subr.mxu0 0.0
    %1500 = vmatpush1.msra.mxu0 %v282
    %1501 = vmatprep.subr.mxu0 0.0
    %1502 = vmatpush1.msra.mxu0 %v283
    %1503 = vmatprep.subr.mxu0 0.0
    %1504 = vmatpush1.msra.mxu0 0.0
    %1505 = vmatprep.subr.mxu0 0.0
    %1506 = vmatpush1.msra.mxu0 0.0
    %1507 = vmatprep.subr.mxu0 0.0
    %1508 = vmatpush1.msra.mxu0 0.0
    %1509 = vmatprep.subr.mxu0 0.0
    %1510 = vmatpush1.msra.mxu0 0.0
    %1511 = vmatprep.subr.mxu0 0.0
    %1512 = vmatpush1.msra.mxu0 0.0
    %1513 = vmatprep.subr.mxu0 0.0
    %1514 = vmatpush1.msra.mxu0 0.0
    %1515 = vmatprep.subr.mxu0 0.0
    %1516 = vmatpush1.msra.mxu0 0.0
    %1517 = vmatprep.subr.mxu0 0.0
    %1518 = vmatpush1.msra.mxu0 0.0
    %1519 = vmatprep.subr.mxu0 0.0
    %1520 = vmatpush1.msra.mxu0 0.0
    %1521 = vmatprep.subr.mxu0 0.0
    %1522 = vmatpush1.msra.mxu0 0.0
    %1523 = vmatprep.subr.mxu0 0.0
    %1524 = vmatpush1.msra.mxu0 0.0
    %1525 = vmatprep.subr.mxu0 0.0
    %1526 = vmatpush1.msra.mxu0 0.0
    %1527 = vmatprep.subr.mxu0 0.0
    %1528 = vmatpush1.msra.mxu0 0.0
    %1529 = vmatprep.subr.mxu0 0.0
    %1530 = vmatpush1.msra.mxu0 0.0
    %1531 = vmatprep.subr.mxu0 0.0
    %1532 = vmatpush1.msra.mxu0 0.0
    %1533 = vmatprep.subr.mxu0 0.0
    %1534 = vmatpush1.msra.mxu0 0.0
    %1535 = vmatprep.mubr.f32.mxu0 0.0
    %1536 = vmatmul.mubr.f32.gmra.mrb[0].mxu0 %v1467
    %v1537 = vpop.f32.mrb[0].mxu0
    %v1538 = vadd.f32 0.0, %v1537
    %v1539 = vpop.f32.mrb[0].mxu0
    %1540 = vmatprep.mubr.f32.mxu0 0.0
    %1541 = vmatmul.mubr.f32.gmra.mrb[0].mxu0 %v1468
    %v1542 = vpop.f32.mrb[0].mxu0
    %v1543 = vadd.f32 0.0, %v1542
    %v1544 = vpop.f32.mrb[0].mxu0
    %1545 = vmatprep.mubr.f32.mxu0 0.0
    %1546 = vmatmul.mubr.f32.gmra.mrb[0].mxu0 %v1469
    %v1547 = vpop.f32.mrb[0].mxu0
    %v1548 = vadd.f32 0.0, %v1547
    %v1549 = vpop.f32.mrb[0].mxu0
    %1550 = vmatprep.mubr.f32.mxu0 0.0
    %1551 = vmatmul.mubr.f32.gmra.mrb[0].mxu0 %v1470
    %v1552 = vpop.f32.mrb[0].mxu0
    %v1553 = vadd.f32 0.0, %v1552
    %v1554 = vpop.f32.mrb[0].mxu0
    %1555 = vdwg.mxu0
    %v1556 = vpack.c.bf16 %v1543, %v1538
    %v1557 = vpack.c.bf16 %v1553, %v1548
    %v1559 = vsel %vm708, %v1556, 0
    %v1562 = vsel %vm708, %v1557, 0
    %1564 = vmatprep.subr.bf16.mxu0 0
    %1565 = vmatpush1.bf16.msra.mxu0 %v480
    %1566 = vmatprep.subr.bf16.mxu0 0
    %1567 = vmatpush1.bf16.msra.mxu0 %v481
    %1568 = vmatprep.subr.bf16.mxu0 0
    %1569 = vmatpush1.bf16.msra.mxu0 0
    %1570 = vmatprep.subr.bf16.mxu0 0
    %1571 = vmatpush1.bf16.msra.mxu0 0
    %1572 = vmatprep.subr.bf16.mxu0 0
    %1573 = vmatpush1.bf16.msra.mxu0 0
    %1574 = vmatprep.subr.bf16.mxu0 0
    %1575 = vmatpush1.bf16.msra.mxu0 0
    %1576 = vmatprep.subr.bf16.mxu0 0
    %1577 = vmatpush1.bf16.msra.mxu0 0
    %1578 = vmatprep.subr.bf16.mxu0 0
    %1579 = vmatpush1.bf16.msra.mxu0 0
    %1580 = vmatprep.subr.bf16.mxu0 0
    %1581 = vmatpush1.bf16.msra.mxu0 0
    %1582 = vmatprep.subr.bf16.mxu0 0
    %1583 = vmatpush1.bf16.msra.mxu0 0
    %1584 = vmatprep.subr.bf16.mxu0 0
    %1585 = vmatpush1.bf16.msra.mxu0 0
    %1586 = vmatprep.subr.bf16.mxu0 0
    %1587 = vmatpush1.bf16.msra.mxu0 0
    %1588 = vmatprep.subr.bf16.mxu0 0
    %1589 = vmatpush1.bf16.msra.mxu0 0
    %1590 = vmatprep.subr.bf16.mxu0 0
    %1591 = vmatpush1.bf16.msra.mxu0 0
    %1592 = vmatprep.subr.bf16.mxu0 0
    %1593 = vmatpush1.bf16.msra.mxu0 0
    %1594 = vmatprep.subr.bf16.mxu0 0
    %1595 = vmatpush1.bf16.msra.mxu0 0
    %1596 = vmatprep.mubr.bf16.mxu0 0
    %1597 = vmatmul.mubr.bf16.gmra.mrb[0].mxu0 %v1559
    %v1598 = vpop.f32.mrb[0].mxu0
    %v1599 = vadd.f32 0.0, %v1598
    %v1600 = vpop.f32.mrb[0].mxu0
    %v1601 = vpop.f32.mrb[0].mxu0
    %v1602 = vadd.f32 0.0, %v1601
    %v1603 = vpop.f32.mrb[0].mxu0
    %1604 = vmatprep.mubr.bf16.mxu0 0
    %1605 = vmatmul.mubr.bf16.gmra.mrb[0].mxu0 %v1562
    %v1606 = vpop.f32.mrb[0].mxu0
    %v1607 = vadd.f32 0.0, %v1606
    %v1608 = vpop.f32.mrb[0].mxu0
    %v1609 = vpop.f32.mrb[0].mxu0
    %v1610 = vadd.f32 0.0, %v1609
    %v1611 = vpop.f32.mrb[0].mxu0
    %1612 = vdwg.mxu0
    %v1613 = vadd.f32 %v1447, %v1599
    %v1614 = vadd.f32 %v1448, %v1602
    %v1615 = vadd.f32 %v1449, %v1607
    %v1616 = vadd.f32 %v1450, %v1610
    %vm1617 = vmand %vm1459, %vm609
    %vm1618 = vmand %vm1460, %vm610
    %vm1619 = vmand %vm1461, %vm611
    %vm1620 = vmand %vm1462, %vm612
    %v1621 = vsel %vm1617, 1.0, 0.0
    %v1622 = vsel %vm1618, 1.0, 0.0
    %v1623 = vsel %vm1619, 1.0, 0.0
    %v1624 = vsel %vm1620, 1.0, 0.0
    %1625 = vmatprep.subr.mxu0 0.0
    %1626 = vmatpush1.msra.mxu0 %v268
    %1627 = vmatprep.subr.mxu0 0.0
    %1628 = vmatpush1.msra.mxu0 %v269
    %1629 = vmatprep.subr.mxu0 0.0
    %1630 = vmatpush1.msra.mxu0 %v270
    %1631 = vmatprep.subr.mxu0 0.0
    %1632 = vmatpush1.msra.mxu0 %v271
    %1633 = vmatprep.subr.mxu0 0.0
    %1634 = vmatpush1.msra.mxu0 %v272
    %1635 = vmatprep.subr.mxu0 0.0
    %1636 = vmatpush1.msra.mxu0 %v273
    %1637 = vmatprep.subr.mxu0 0.0
    %1638 = vmatpush1.msra.mxu0 %v274
    %1639 = vmatprep.subr.mxu0 0.0
    %1640 = vmatpush1.msra.mxu0 %v275
    %1641 = vmatprep.subr.mxu0 0.0
    %1642 = vmatpush1.msra.mxu0 %v276
    %1643 = vmatprep.subr.mxu0 0.0
    %1644 = vmatpush1.msra.mxu0 %v277
    %1645 = vmatprep.subr.mxu0 0.0
    %1646 = vmatpush1.msra.mxu0 %v278
    %1647 = vmatprep.subr.mxu0 0.0
    %1648 = vmatpush1.msra.mxu0 %v279
    %1649 = vmatprep.subr.mxu0 0.0
    %1650 = vmatpush1.msra.mxu0 %v280
    %1651 = vmatprep.subr.mxu0 0.0
    %1652 = vmatpush1.msra.mxu0 %v281
    %1653 = vmatprep.subr.mxu0 0.0
    %1654 = vmatpush1.msra.mxu0 %v282
    %1655 = vmatprep.subr.mxu0 0.0
    %1656 = vmatpush1.msra.mxu0 %v283
    %1657 = vmatprep.subr.mxu0 0.0
    %1658 = vmatpush1.msra.mxu0 0.0
    %1659 = vmatprep.subr.mxu0 0.0
    %1660 = vmatpush1.msra.mxu0 0.0
    %1661 = vmatprep.subr.mxu0 0.0
    %1662 = vmatpush1.msra.mxu0 0.0
    %1663 = vmatprep.subr.mxu0 0.0
    %1664 = vmatpush1.msra.mxu0 0.0
    %1665 = vmatprep.subr.mxu0 0.0
    %1666 = vmatpush1.msra.mxu0 0.0
    %1667 = vmatprep.subr.mxu0 0.0
    %1668 = vmatpush1.msra.mxu0 0.0
    %1669 = vmatprep.subr.mxu0 0.0
    %1670 = vmatpush1.msra.mxu0 0.0
    %1671 = vmatprep.subr.mxu0 0.0
    %1672 = vmatpush1.msra.mxu0 0.0
    %1673 = vmatprep.subr.mxu0 0.0
    %1674 = vmatpush1.msra.mxu0 0.0
    %1675 = vmatprep.subr.mxu0 0.0
    %1676 = vmatpush1.msra.mxu0 0.0
    %1677 = vmatprep.subr.mxu0 0.0
    %1678 = vmatpush1.msra.mxu0 0.0
    %1679 = vmatprep.subr.mxu0 0.0
    %1680 = vmatpush1.msra.mxu0 0.0
    %1681 = vmatprep.subr.mxu0 0.0
    %1682 = vmatpush1.msra.mxu0 0.0
    %1683 = vmatprep.subr.mxu0 0.0
    %1684 = vmatpush1.msra.mxu0 0.0
    %1685 = vmatprep.subr.mxu0 0.0
    %1686 = vmatpush1.msra.mxu0 0.0
    %1687 = vmatprep.subr.mxu0 0.0
    %1688 = vmatpush1.msra.mxu0 0.0
    %1689 = vmatprep.mubr.f32.mxu0 0.0
    %1690 = vmatmul.mubr.f32.gmra.mrb[0].mxu0 %v1621
    %v1691 = vpop.f32.mrb[0].mxu0
    %v1692 = vadd.f32 0.0, %v1691
    %v1693 = vpop.f32.mrb[0].mxu0
    %1694 = vmatprep.mubr.f32.mxu0 0.0
    %1695 = vmatmul.mubr.f32.gmra.mrb[0].mxu0 %v1622
    %v1696 = vpop.f32.mrb[0].mxu0
    %v1697 = vadd.f32 0.0, %v1696
    %v1698 = vpop.f32.mrb[0].mxu0
    %1699 = vmatprep.mubr.f32.mxu0 0.0
    %1700 = vmatmul.mubr.f32.gmra.mrb[0].mxu0 %v1623
    %v1701 = vpop.f32.mrb[0].mxu0
    %v1702 = vadd.f32 0.0, %v1701
    %v1703 = vpop.f32.mrb[0].mxu0
    %1704 = vmatprep.mubr.f32.mxu0 0.0
    %1705 = vmatmul.mubr.f32.gmra.mrb[0].mxu0 %v1624
    %v1706 = vpop.f32.mrb[0].mxu0
    %v1707 = vadd.f32 0.0, %v1706
    %v1708 = vpop.f32.mrb[0].mxu0
    %1709 = vdwg.mxu0
    %v1710 = vpack.c.bf16 %v1697, %v1692
    %v1711 = vpack.c.bf16 %v1707, %v1702
    %v1713 = vsel %vm708, %v1710, 0
    %v1716 = vsel %vm708, %v1711, 0
    %1718 = vmatprep.subr.bf16.mxu0 0
    %1719 = vmatpush1.bf16.msra.mxu0 %v482
    %1720 = vmatprep.subr.bf16.mxu0 0
    %1721 = vmatpush1.bf16.msra.mxu0 %v483
    %1722 = vmatprep.subr.bf16.mxu0 0
    %1723 = vmatpush1.bf16.msra.mxu0 0
    %1724 = vmatprep.subr.bf16.mxu0 0
    %1725 = vmatpush1.bf16.msra.mxu0 0
    %1726 = vmatprep.subr.bf16.mxu0 0
    %1727 = vmatpush1.bf16.msra.mxu0 0
    %1728 = vmatprep.subr.bf16.mxu0 0
    %1729 = vmatpush1.bf16.msra.mxu0 0
    %1730 = vmatprep.subr.bf16.mxu0 0
    %1731 = vmatpush1.bf16.msra.mxu0 0
    %1732 = vmatprep.subr.bf16.mxu0 0
    %1733 = vmatpush1.bf16.msra.mxu0 0
    %1734 = vmatprep.subr.bf16.mxu0 0
    %1735 = vmatpush1.bf16.msra.mxu0 0
    %1736 = vmatprep.subr.bf16.mxu0 0
    %1737 = vmatpush1.bf16.msra.mxu0 0
    %1738 = vmatprep.subr.bf16.mxu0 0
    %1739 = vmatpush1.bf16.msra.mxu0 0
    %1740 = vmatprep.subr.bf16.mxu0 0
    %1741 = vmatpush1.bf16.msra.mxu0 0
    %1742 = vmatprep.subr.bf16.mxu0 0
    %1743 = vmatpush1.bf16.msra.mxu0 0
    %1744 = vmatprep.subr.bf16.mxu0 0
    %1745 = vmatpush1.bf16.msra.mxu0 0
    %1746 = vmatprep.subr.bf16.mxu0 0
    %1747 = vmatpush1.bf16.msra.mxu0 0
    %1748 = vmatprep.subr.bf16.mxu0 0
    %1749 = vmatpush1.bf16.msra.mxu0 0
    %1750 = vmatprep.mubr.bf16.mxu0 0
    %1751 = vmatmul.mubr.bf16.gmra.mrb[0].mxu0 %v1713
    %v1752 = vpop.f32.mrb[0].mxu0
    %v1753 = vadd.f32 0.0, %v1752
    %v1754 = vpop.f32.mrb[0].mxu0
    %v1755 = vpop.f32.mrb[0].mxu0
    %v1756 = vadd.f32 0.0, %v1755
    %v1757 = vpop.f32.mrb[0].mxu0
    %1758 = vmatprep.mubr.bf16.mxu0 0
    %1759 = vmatmul.mubr.bf16.gmra.mrb[0].mxu0 %v1716
    %v1760 = vpop.f32.mrb[0].mxu0
    %v1761 = vadd.f32 0.0, %v1760
    %v1762 = vpop.f32.mrb[0].mxu0
    %v1763 = vpop.f32.mrb[0].mxu0
    %v1764 = vadd.f32 0.0, %v1763
    %v1765 = vpop.f32.mrb[0].mxu0
    %1766 = vdwg.mxu0
    %v1767 = vadd.f32 %v1613, %v1753
    %v1768 = vadd.f32 %v1614, %v1756
    %v1769 = vadd.f32 %v1615, %v1761
    %v1770 = vadd.f32 %v1616, %v1764
    %vm1771 = vmand %vm1459, %vm823
    %vm1772 = vmand %vm1460, %vm824
    %vm1773 = vmand %vm1461, %vm825
    %vm1774 = vmand %vm1462, %vm826
    %v1775 = vsel %vm1771, 1.0, 0.0
    %v1776 = vsel %vm1772, 1.0, 0.0
    %v1777 = vsel %vm1773, 1.0, 0.0
    %v1778 = vsel %vm1774, 1.0, 0.0
    %1779 = vmatprep.subr.mxu0 0.0
    %1780 = vmatpush1.msra.mxu0 %v268
    %1781 = vmatprep.subr.mxu0 0.0
    %1782 = vmatpush1.msra.mxu0 %v269
    %1783 = vmatprep.subr.mxu0 0.0
    %1784 = vmatpush1.msra.mxu0 %v270
    %1785 = vmatprep.subr.mxu0 0.0
    %1786 = vmatpush1.msra.mxu0 %v271
    %1787 = vmatprep.subr.mxu0 0.0
    %1788 = vmatpush1.msra.mxu0 %v272
    %1789 = vmatprep.subr.mxu0 0.0
    %1790 = vmatpush1.msra.mxu0 %v273
    %1791 = vmatprep.subr.mxu0 0.0
    %1792 = vmatpush1.msra.mxu0 %v274
    %1793 = vmatprep.subr.mxu0 0.0
    %1794 = vmatpush1.msra.mxu0 %v275
    %1795 = vmatprep.subr.mxu0 0.0
    %1796 = vmatpush1.msra.mxu0 %v276
    %1797 = vmatprep.subr.mxu0 0.0
    %1798 = vmatpush1.msra.mxu0 %v277
    %1799 = vmatprep.subr.mxu0 0.0
    %1800 = vmatpush1.msra.mxu0 %v278
    %1801 = vmatprep.subr.mxu0 0.0
    %1802 = vmatpush1.msra.mxu0 %v279
    %1803 = vmatprep.subr.mxu0 0.0
    %1804 = vmatpush1.msra.mxu0 %v280
    %1805 = vmatprep.subr.mxu0 0.0
    %1806 = vmatpush1.msra.mxu0 %v281
    %1807 = vmatprep.subr.mxu0 0.0
    %1808 = vmatpush1.msra.mxu0 %v282
    %1809 = vmatprep.subr.mxu0 0.0
    %1810 = vmatpush1.msra.mxu0 %v283
    %1811 = vmatprep.subr.mxu0 0.0
    %1812 = vmatpush1.msra.mxu0 0.0
    %1813 = vmatprep.subr.mxu0 0.0
    %1814 = vmatpush1.msra.mxu0 0.0
    %1815 = vmatprep.subr.mxu0 0.0
    %1816 = vmatpush1.msra.mxu0 0.0
    %1817 = vmatprep.subr.mxu0 0.0
    %1818 = vmatpush1.msra.mxu0 0.0
    %1819 = vmatprep.subr.mxu0 0.0
    %1820 = vmatpush1.msra.mxu0 0.0
    %1821 = vmatprep.subr.mxu0 0.0
    %1822 = vmatpush1.msra.mxu0 0.0
    %1823 = vmatprep.subr.mxu0 0.0
    %1824 = vmatpush1.msra.mxu0 0.0
    %1825 = vmatprep.subr.mxu0 0.0
    %1826 = vmatpush1.msra.mxu0 0.0
    %1827 = vmatprep.subr.mxu0 0.0
    %1828 = vmatpush1.msra.mxu0 0.0
    %1829 = vmatprep.subr.mxu0 0.0
    %1830 = vmatpush1.msra.mxu0 0.0
    %1831 = vmatprep.subr.mxu0 0.0
    %1832 = vmatpush1.msra.mxu0 0.0
    %1833 = vmatprep.subr.mxu0 0.0
    %1834 = vmatpush1.msra.mxu0 0.0
    %1835 = vmatprep.subr.mxu0 0.0
    %1836 = vmatpush1.msra.mxu0 0.0
    %1837 = vmatprep.subr.mxu0 0.0
    %1838 = vmatpush1.msra.mxu0 0.0
    %1839 = vmatprep.subr.mxu0 0.0
    %1840 = vmatpush1.msra.mxu0 0.0
    %1841 = vmatprep.subr.mxu0 0.0
    %1842 = vmatpush1.msra.mxu0 0.0
    %1843 = vmatprep.mubr.f32.mxu0 0.0
    %1844 = vmatmul.mubr.f32.gmra.mrb[0].mxu0 %v1775
    %v1845 = vpop.f32.mrb[0].mxu0
    %v1846 = vadd.f32 0.0, %v1845
    %v1847 = vpop.f32.mrb[0].mxu0
    %1848 = vmatprep.mubr.f32.mxu0 0.0
    %1849 = vmatmul.mubr.f32.gmra.mrb[0].mxu0 %v1776
    %v1850 = vpop.f32.mrb[0].mxu0
    %v1851 = vadd.f32 0.0, %v1850
    %v1852 = vpop.f32.mrb[0].mxu0
    %1853 = vmatprep.mubr.f32.mxu0 0.0
    %1854 = vmatmul.mubr.f32.gmra.mrb[0].mxu0 %v1777
    %v1855 = vpop.f32.mrb[0].mxu0
    %v1856 = vadd.f32 0.0, %v1855
    %v1857 = vpop.f32.mrb[0].mxu0
    %1858 = vmatprep.mubr.f32.mxu0 0.0
    %1859 = vmatmul.mubr.f32.gmra.mrb[0].mxu0 %v1778
    %v1860 = vpop.f32.mrb[0].mxu0
    %v1861 = vadd.f32 0.0, %v1860
    %v1862 = vpop.f32.mrb[0].mxu0
    %1863 = vdwg.mxu0
    %v1864 = vpack.c.bf16 %v1851, %v1846
    %v1865 = vpack.c.bf16 %v1861, %v1856
    %v1867 = vsel %vm708, %v1864, 0
    %v1870 = vsel %vm708, %v1865, 0
    %1872 = vmatprep.subr.bf16.mxu0 0
    %1873 = vmatpush1.bf16.msra.mxu0 %v484
    %1874 = vmatprep.subr.bf16.mxu0 0
    %1875 = vmatpush1.bf16.msra.mxu0 %v485
    %1876 = vmatprep.subr.bf16.mxu0 0
    %1877 = vmatpush1.bf16.msra.mxu0 0
    %1878 = vmatprep.subr.bf16.mxu0 0
    %1879 = vmatpush1.bf16.msra.mxu0 0
    %1880 = vmatprep.subr.bf16.mxu0 0
    %1881 = vmatpush1.bf16.msra.mxu0 0
    %1882 = vmatprep.subr.bf16.mxu0 0
    %1883 = vmatpush1.bf16.msra.mxu0 0
    %1884 = vmatprep.subr.bf16.mxu0 0
    %1885 = vmatpush1.bf16.msra.mxu0 0
    %1886 = vmatprep.subr.bf16.mxu0 0
    %1887 = vmatpush1.bf16.msra.mxu0 0
    %1888 = vmatprep.subr.bf16.mxu0 0
    %1889 = vmatpush1.bf16.msra.mxu0 0
    %1890 = vmatprep.subr.bf16.mxu0 0
    %1891 = vmatpush1.bf16.msra.mxu0 0
    %1892 = vmatprep.subr.bf16.mxu0 0
    %1893 = vmatpush1.bf16.msra.mxu0 0
    %1894 = vmatprep.subr.bf16.mxu0 0
    %1895 = vmatpush1.bf16.msra.mxu0 0
    %1896 = vmatprep.subr.bf16.mxu0 0
    %1897 = vmatpush1.bf16.msra.mxu0 0
    %1898 = vmatprep.subr.bf16.mxu0 0
    %1899 = vmatpush1.bf16.msra.mxu0 0
    %1900 = vmatprep.subr.bf16.mxu0 0
    %1901 = vmatpush1.bf16.msra.mxu0 0
    %1902 = vmatprep.subr.bf16.mxu0 0
    %1903 = vmatpush1.bf16.msra.mxu0 0
    %1904 = vmatprep.mubr.bf16.mxu0 0
    %1905 = vmatmul.mubr.bf16.gmra.mrb[0].mxu0 %v1867
    %v1906 = vpop.f32.mrb[0].mxu0
    %v1907 = vadd.f32 0.0, %v1906
    %v1908 = vpop.f32.mrb[0].mxu0
    %v1909 = vpop.f32.mrb[0].mxu0
    %v1910 = vadd.f32 0.0, %v1909
    %v1911 = vpop.f32.mrb[0].mxu0
    %1912 = vmatprep.mubr.bf16.mxu0 0
    %1913 = vmatmul.mubr.bf16.gmra.mrb[0].mxu0 %v1870
    %v1914 = vpop.f32.mrb[0].mxu0
    %v1915 = vadd.f32 0.0, %v1914
    %v1916 = vpop.f32.mrb[0].mxu0
    %v1917 = vpop.f32.mrb[0].mxu0
    %v1918 = vadd.f32 0.0, %v1917
    %v1919 = vpop.f32.mrb[0].mxu0
    %1920 = vdwg.mxu0
    %v1921 = vadd.f32 %v1767, %v1907
    %v1922 = vadd.f32 %v1768, %v1910
    %v1923 = vadd.f32 %v1769, %v1915
    %v1924 = vadd.f32 %v1770, %v1918
    %v1925 = vmax.f32 %v1921, 0.0
    %v1926 = vmax.f32 %v1922, 0.0
    %v1927 = vmax.f32 %v1923, 0.0
    %v1928 = vmax.f32 %v1924, 0.0
    %v1929 = vld [vmem:[%s6] sm:$0xff]
    %v1930 = vld [vmem:[%s6 + $0x8] sm:$0xff]
    %v1931 = vld [vmem:[%s6 + $0x10] sm:$0xff]
    %v1932 = vld [vmem:[%s6 + $0x18] sm:$0xff]
    %v1933 = vld [vmem:[%s6 + $0x20] sm:$0xff]
    %v1934 = vld [vmem:[%s6 + $0x28] sm:$0xff]
    %v1935 = vld [vmem:[%s6 + $0x30] sm:$0xff]
    %v1936 = vld [vmem:[%s6 + $0x38] sm:$0xff]
    %v1937 = vld [vmem:[%s6 + $0x40] sm:$0xff]
    %v1938 = vld [vmem:[%s6 + $0x48] sm:$0xff]
    %v1939 = vld [vmem:[%s6 + $0x50] sm:$0xff]
    %v1940 = vld [vmem:[%s6 + $0x58] sm:$0xff]
    %v1941 = vld [vmem:[%s6 + $0x60] sm:$0xff]
    %v1942 = vld [vmem:[%s6 + $0x68] sm:$0xff]
    %v1943 = vld [vmem:[%s6 + $0x70] sm:$0xff]
    %v1944 = vld [vmem:[%s6 + $0x78] sm:$0xff]
    %v1945 = vld [vmem:[%s87] sm:$0xff]
    %v1946 = vld [vmem:[%s87 + $0x8] sm:$0xff]
    %v1947 = vld [vmem:[%s87 + $0x10] sm:$0xff]
    %v1948 = vld [vmem:[%s87 + $0x18] sm:$0xff]
    %v1949 = vunpack.c.0.s8 %v1945
    %v1950 = vunpack.c.0.s8 %v1946
    %v1951 = vunpack.c.0.s8 %v1947
    %v1952 = vunpack.c.0.s8 %v1948
    %v1953 = vunpack.c.1.s8 %v1945
    %v1954 = vunpack.c.1.s8 %v1946
    %v1955 = vunpack.c.1.s8 %v1947
    %v1956 = vunpack.c.1.s8 %v1948
    %v1957 = vunpack.c.2.s8 %v1945
    %v1958 = vunpack.c.2.s8 %v1946
    %v1959 = vunpack.c.2.s8 %v1947
    %v1960 = vunpack.c.2.s8 %v1948
    %v1961 = vunpack.c.3.s8 %v1945
    %v1962 = vunpack.c.3.s8 %v1946
    %v1963 = vunpack.c.3.s8 %v1947
    %v1964 = vunpack.c.3.s8 %v1948
    %v1965 = vcvt.s32.f32 %v1949
    %v1966 = vcvt.s32.f32 %v1950
    %v1967 = vcvt.s32.f32 %v1951
    %v1968 = vcvt.s32.f32 %v1952
    %v1969 = vcvt.s32.f32 %v1953
    %v1970 = vcvt.s32.f32 %v1954
    %v1971 = vcvt.s32.f32 %v1955
    %v1972 = vcvt.s32.f32 %v1956
    %v1973 = vcvt.s32.f32 %v1957
    %v1974 = vcvt.s32.f32 %v1958
    %v1975 = vcvt.s32.f32 %v1959
    %v1976 = vcvt.s32.f32 %v1960
    %v1977 = vcvt.s32.f32 %v1961
    %v1978 = vcvt.s32.f32 %v1962
    %v1979 = vcvt.s32.f32 %v1963
    %v1980 = vcvt.s32.f32 %v1964
    %v1981 = vmul.f32 %v1929, %v1965
    %v1982 = vmul.f32 %v1930, %v1966
    %v1983 = vmul.f32 %v1931, %v1967
    %v1984 = vmul.f32 %v1932, %v1968
    %v1985 = vmul.f32 %v1933, %v1969
    %v1986 = vmul.f32 %v1934, %v1970
    %v1987 = vmul.f32 %v1935, %v1971
    %v1988 = vmul.f32 %v1936, %v1972
    %v1989 = vmul.f32 %v1937, %v1973
    %v1990 = vmul.f32 %v1938, %v1974
    %v1991 = vmul.f32 %v1939, %v1975
    %v1992 = vmul.f32 %v1940, %v1976
    %v1993 = vmul.f32 %v1941, %v1977
    %v1994 = vmul.f32 %v1942, %v1978
    %v1995 = vmul.f32 %v1943, %v1979
    %v1996 = vmul.f32 %v1944, %v1980
    %v1997 = vpack.c.bf16 %v1985, %v1981
    %v1998 = vpack.c.bf16 %v1986, %v1982
    %v1999 = vpack.c.bf16 %v1987, %v1983
    %v2000 = vpack.c.bf16 %v1988, %v1984
    %v2001 = vpack.c.bf16 %v1993, %v1989
    %v2002 = vpack.c.bf16 %v1994, %v1990
    %v2003 = vpack.c.bf16 %v1995, %v1991
    %v2004 = vpack.c.bf16 %v1996, %v1992
    %v2005 = vpack.c.bf16 %v1926, %v1925
    %v2006 = vpack.c.bf16 %v1928, %v1927
    %v2008 = vsel %vm708, %v2005, 0
    %v2011 = vsel %vm708, %v2006, 0
    %2013 = vmatprep.subr.bf16.mxu0 %v1998
    %2014 = vmatpush1.bf16.msra.mxu0 %v1997
    %2015 = vmatprep.subr.bf16.mxu0 %v2002
    %2016 = vmatpush1.bf16.msra.mxu0 %v2001
    %2017 = vmatprep.subr.bf16.mxu0 0
    %2018 = vmatpush1.bf16.msra.mxu0 0
    %2019 = vmatprep.subr.bf16.mxu0 0
    %2020 = vmatpush1.bf16.msra.mxu0 0
    %2021 = vmatprep.subr.bf16.mxu0 0
    %2022 = vmatpush1.bf16.msra.mxu0 0
    %2023 = vmatprep.subr.bf16.mxu0 0
    %2024 = vmatpush1.bf16.msra.mxu0 0
    %2025 = vmatprep.subr.bf16.mxu0 0
    %2026 = vmatpush1.bf16.msra.mxu0 0
    %2027 = vmatprep.subr.bf16.mxu0 0
    %2028 = vmatpush1.bf16.msra.mxu0 0
    %2029 = vmatprep.subr.bf16.mxu0 0
    %2030 = vmatpush1.bf16.msra.mxu0 0
    %2031 = vmatprep.subr.bf16.mxu0 0
    %2032 = vmatpush1.bf16.msra.mxu0 0
    %2033 = vmatprep.subr.bf16.mxu0 0
    %2034 = vmatpush1.bf16.msra.mxu0 0
    %2035 = vmatprep.subr.bf16.mxu0 0
    %2036 = vmatpush1.bf16.msra.mxu0 0
    %2037 = vmatprep.subr.bf16.mxu0 0
    %2038 = vmatpush1.bf16.msra.mxu0 0
    %2039 = vmatprep.subr.bf16.mxu0 0
    %2040 = vmatpush1.bf16.msra.mxu0 0
    %2041 = vmatprep.subr.bf16.mxu0 0
    %2042 = vmatpush1.bf16.msra.mxu0 0
    %2043 = vmatprep.subr.bf16.mxu0 0
    %2044 = vmatpush1.bf16.msra.mxu0 0
    %2045 = vmatprep.mubr.bf16.mxu0 0
    %2046 = vmatmul.mubr.bf16.gmra.mrb[0].mxu0 %v2008
    %v2047 = vpop.f32.mrb[0].mxu0
    %v2048 = vadd.f32 0.0, %v2047
    %v2049 = vpop.f32.mrb[0].mxu0
    %v2050 = vadd.f32 0.0, %v2049
    %v2051 = vpop.f32.mrb[0].mxu0
    %v2052 = vadd.f32 0.0, %v2051
    %v2053 = vpop.f32.mrb[0].mxu0
    %v2054 = vadd.f32 0.0, %v2053
    %2055 = vmatprep.mubr.bf16.mxu0 0
    %2056 = vmatmul.mubr.bf16.gmra.mrb[0].mxu0 %v2011
    %v2057 = vpop.f32.mrb[0].mxu0
    %v2058 = vadd.f32 0.0, %v2057
    %v2059 = vpop.f32.mrb[0].mxu0
    %v2060 = vadd.f32 0.0, %v2059
    %v2061 = vpop.f32.mrb[0].mxu0
    %v2062 = vadd.f32 0.0, %v2061
    %v2063 = vpop.f32.mrb[0].mxu0
    %v2064 = vadd.f32 0.0, %v2063
    %2065 = vdwg.mxu0
    %2066 = vmatprep.subr.bf16.mxu0 %v2000
    %2067 = vmatpush1.bf16.msra.mxu0 %v1999
    %2068 = vmatprep.subr.bf16.mxu0 %v2004
    %2069 = vmatpush1.bf16.msra.mxu0 %v2003
    %2070 = vmatprep.subr.bf16.mxu0 0
    %2071 = vmatpush1.bf16.msra.mxu0 0
    %2072 = vmatprep.subr.bf16.mxu0 0
    %2073 = vmatpush1.bf16.msra.mxu0 0
    %2074 = vmatprep.subr.bf16.mxu0 0
    %2075 = vmatpush1.bf16.msra.mxu0 0
    %2076 = vmatprep.subr.bf16.mxu0 0
    %2077 = vmatpush1.bf16.msra.mxu0 0
    %2078 = vmatprep.subr.bf16.mxu0 0
    %2079 = vmatpush1.bf16.msra.mxu0 0
    %2080 = vmatprep.subr.bf16.mxu0 0
    %2081 = vmatpush1.bf16.msra.mxu0 0
    %2082 = vmatprep.subr.bf16.mxu0 0
    %2083 = vmatpush1.bf16.msra.mxu0 0
    %2084 = vmatprep.subr.bf16.mxu0 0
    %2085 = vmatpush1.bf16.msra.mxu0 0
    %2086 = vmatprep.subr.bf16.mxu0 0
    %2087 = vmatpush1.bf16.msra.mxu0 0
    %2088 = vmatprep.subr.bf16.mxu0 0
    %2089 = vmatpush1.bf16.msra.mxu0 0
    %2090 = vmatprep.subr.bf16.mxu0 0
    %2091 = vmatpush1.bf16.msra.mxu0 0
    %2092 = vmatprep.subr.bf16.mxu0 0
    %2093 = vmatpush1.bf16.msra.mxu0 0
    %2094 = vmatprep.subr.bf16.mxu0 0
    %2095 = vmatpush1.bf16.msra.mxu0 0
    %2096 = vmatprep.subr.bf16.mxu0 0
    %2097 = vmatpush1.bf16.msra.mxu0 0
    %2098 = vmatprep.mubr.bf16.mxu0 0
    %2099 = vmatmul.mubr.bf16.gmra.mrb[0].mxu0 %v2008
    %v2100 = vpop.f32.mrb[0].mxu0
    %v2101 = vadd.f32 0.0, %v2100
    %v2102 = vpop.f32.mrb[0].mxu0
    %v2103 = vadd.f32 0.0, %v2102
    %v2104 = vpop.f32.mrb[0].mxu0
    %v2105 = vadd.f32 0.0, %v2104
    %v2106 = vpop.f32.mrb[0].mxu0
    %v2107 = vadd.f32 0.0, %v2106
    %2108 = vmatprep.mubr.bf16.mxu0 0
    %2109 = vmatmul.mubr.bf16.gmra.mrb[0].mxu0 %v2011
    %v2110 = vpop.f32.mrb[0].mxu0
    %v2111 = vadd.f32 0.0, %v2110
    %v2112 = vpop.f32.mrb[0].mxu0
    %v2113 = vadd.f32 0.0, %v2112
    %v2114 = vpop.f32.mrb[0].mxu0
    %v2115 = vadd.f32 0.0, %v2114
    %v2116 = vpop.f32.mrb[0].mxu0
    %v2117 = vadd.f32 0.0, %v2116
    %2118 = vdwg.mxu0
    %v2119 = vadd.s32 %v290, 128
    %v2120 = vadd.s32 %v290, 256
    %v2121 = vadd.s32 %v290, 384
    %v2122 = vshra.s32 %v290, 5
    %v2123 = vshra.s32 %v2119, 5
    %v2124 = vshra.s32 %v2120, 5
    %v2125 = vshra.s32 %v2121, 5
    %vm2126 = vcmp.eq.s32.totalorder %v300, %v2122
    %vm2127 = vcmp.eq.s32.totalorder %v300, %v2123
    %vm2128 = vcmp.eq.s32.totalorder %v300, %v2124
    %vm2129 = vcmp.eq.s32.totalorder %v300, %v2125
    %vm2130 = vcmp.eq.s32.totalorder %v301, %v2122
    %vm2131 = vcmp.eq.s32.totalorder %v301, %v2123
    %vm2132 = vcmp.eq.s32.totalorder %v301, %v2124
    %vm2133 = vcmp.eq.s32.totalorder %v301, %v2125
    %vm2134 = vcmp.eq.s32.totalorder %v302, %v2122
    %vm2135 = vcmp.eq.s32.totalorder %v302, %v2123
    %vm2136 = vcmp.eq.s32.totalorder %v302, %v2124
    %vm2137 = vcmp.eq.s32.totalorder %v302, %v2125
    %vm2138 = vcmp.eq.s32.totalorder %v303, %v2122
    %vm2139 = vcmp.eq.s32.totalorder %v303, %v2123
    %vm2140 = vcmp.eq.s32.totalorder %v303, %v2124
    %vm2141 = vcmp.eq.s32.totalorder %v303, %v2125
    %v2142 = vsel %vm2126, %v2048, 0.0
    %v2143 = vsel %vm2127, %v2050, 0.0
    %v2144 = vsel %vm2128, %v2101, 0.0
    %v2145 = vsel %vm2129, %v2103, 0.0
    %v2146 = vsel %vm2130, %v2052, 0.0
    %v2147 = vsel %vm2131, %v2054, 0.0
    %v2148 = vsel %vm2132, %v2105, 0.0
    %v2149 = vsel %vm2133, %v2107, 0.0
    %v2150 = vsel %vm2134, %v2058, 0.0
    %v2151 = vsel %vm2135, %v2060, 0.0
    %v2152 = vsel %vm2136, %v2111, 0.0
    %v2153 = vsel %vm2137, %v2113, 0.0
    %v2154 = vsel %vm2138, %v2062, 0.0
    %v2155 = vsel %vm2139, %v2064, 0.0
    %v2156 = vsel %vm2140, %v2115, 0.0
    %v2157 = vsel %vm2141, %v2117, 0.0
    %v2158 = vadd.s32 %v285, 32
    %v2159 = vadd.s32 %v285, 40
    %v2160 = vadd.s32 %v285, 48
    %v2161 = vadd.s32 %v285, 56
    %v2162 = vadd.s32 %v285, 64
    %v2163 = vadd.s32 %v285, 72
    %v2164 = vadd.s32 %v285, 80
    %v2165 = vadd.s32 %v285, 88
    %v2166 = vadd.s32 %v285, 96
    %v2167 = vadd.s32 %v285, 104
    %v2168 = vadd.s32 %v285, 112
    %v2169 = vadd.s32 %v285, 120
    %v2170 = vadd.s32 %v285, 128
    %v2171 = vadd.s32 %v285, 136
    %v2172 = vadd.s32 %v285, 144
    %v2173 = vadd.s32 %v285, 152
    %v2174 = vadd.s32 %v285, 160
    %v2175 = vadd.s32 %v285, 168
    %v2176 = vadd.s32 %v285, 176
    %v2177 = vadd.s32 %v285, 184
    %v2178 = vadd.s32 %v285, 192
    %v2179 = vadd.s32 %v285, 200
    %v2180 = vadd.s32 %v285, 208
    %v2181 = vadd.s32 %v285, 216
    %v2182 = vadd.s32 %v285, 224
    %v2183 = vadd.s32 %v285, 232
    %v2184 = vadd.s32 %v285, 240
    %v2185 = vadd.s32 %v285, 248
    %v2186 = vadd.s32 %v285, 256
    %v2187 = vadd.s32 %v285, 264
    %v2188 = vadd.s32 %v285, 272
    %v2189 = vadd.s32 %v285, 280
    %v2190 = vadd.s32 %v285, 288
    %v2191 = vadd.s32 %v285, 296
    %v2192 = vadd.s32 %v285, 304
    %v2193 = vadd.s32 %v285, 312
    %v2194 = vadd.s32 %v285, 320
    %v2195 = vadd.s32 %v285, 328
    %v2196 = vadd.s32 %v285, 336
    %v2197 = vadd.s32 %v285, 344
    %v2198 = vadd.s32 %v285, 352
    %v2199 = vadd.s32 %v285, 360
    %v2200 = vadd.s32 %v285, 368
    %v2201 = vadd.s32 %v285, 376
    %v2202 = vadd.s32 %v285, 384
    %v2203 = vadd.s32 %v285, 392
    %v2204 = vadd.s32 %v285, 400
    %v2205 = vadd.s32 %v285, 408
    %v2206 = vadd.s32 %v285, 416
    %v2207 = vadd.s32 %v285, 424
    %v2208 = vadd.s32 %v285, 432
    %v2209 = vadd.s32 %v285, 440
    %v2210 = vadd.s32 %v285, 448
    %v2211 = vadd.s32 %v285, 456
    %v2212 = vadd.s32 %v285, 464
    %v2213 = vadd.s32 %v285, 472
    %v2214 = vadd.s32 %v285, 480
    %v2215 = vadd.s32 %v285, 488
    %v2216 = vadd.s32 %v285, 496
    %v2217 = vadd.s32 %v285, 504
    %v2218 = vand.u32 %v285, 31
    %v2219 = vand.u32 %v286, 31
    %v2220 = vand.u32 %v287, 31
    %v2221 = vand.u32 %v288, 31
    %v2222 = vand.u32 %v2158, 31
    %v2223 = vand.u32 %v2159, 31
    %v2224 = vand.u32 %v2160, 31
    %v2225 = vand.u32 %v2161, 31
    %v2226 = vand.u32 %v2162, 31
    %v2227 = vand.u32 %v2163, 31
    %v2228 = vand.u32 %v2164, 31
    %v2229 = vand.u32 %v2165, 31
    %v2230 = vand.u32 %v2166, 31
    %v2231 = vand.u32 %v2167, 31
    %v2232 = vand.u32 %v2168, 31
    %v2233 = vand.u32 %v2169, 31
    %v2234 = vand.u32 %v2170, 31
    %v2235 = vand.u32 %v2171, 31
    %v2236 = vand.u32 %v2172, 31
    %v2237 = vand.u32 %v2173, 31
    %v2238 = vand.u32 %v2174, 31
    %v2239 = vand.u32 %v2175, 31
    %v2240 = vand.u32 %v2176, 31
    %v2241 = vand.u32 %v2177, 31
    %v2242 = vand.u32 %v2178, 31
    %v2243 = vand.u32 %v2179, 31
    %v2244 = vand.u32 %v2180, 31
    %v2245 = vand.u32 %v2181, 31
    %v2246 = vand.u32 %v2182, 31
    %v2247 = vand.u32 %v2183, 31
    %v2248 = vand.u32 %v2184, 31
    %v2249 = vand.u32 %v2185, 31
    %v2250 = vand.u32 %v2186, 31
    %v2251 = vand.u32 %v2187, 31
    %v2252 = vand.u32 %v2188, 31
    %v2253 = vand.u32 %v2189, 31
    %v2254 = vand.u32 %v2190, 31
    %v2255 = vand.u32 %v2191, 31
    %v2256 = vand.u32 %v2192, 31
    %v2257 = vand.u32 %v2193, 31
    %v2258 = vand.u32 %v2194, 31
    %v2259 = vand.u32 %v2195, 31
    %v2260 = vand.u32 %v2196, 31
    %v2261 = vand.u32 %v2197, 31
    %v2262 = vand.u32 %v2198, 31
    %v2263 = vand.u32 %v2199, 31
    %v2264 = vand.u32 %v2200, 31
    %v2265 = vand.u32 %v2201, 31
    %v2266 = vand.u32 %v2202, 31
    %v2267 = vand.u32 %v2203, 31
    %v2268 = vand.u32 %v2204, 31
    %v2269 = vand.u32 %v2205, 31
    %v2270 = vand.u32 %v2206, 31
    %v2271 = vand.u32 %v2207, 31
    %v2272 = vand.u32 %v2208, 31
    %v2273 = vand.u32 %v2209, 31
    %v2274 = vand.u32 %v2210, 31
    %v2275 = vand.u32 %v2211, 31
    %v2276 = vand.u32 %v2212, 31
    %v2277 = vand.u32 %v2213, 31
    %v2278 = vand.u32 %v2214, 31
    %v2279 = vand.u32 %v2215, 31
    %v2280 = vand.u32 %v2216, 31
    %v2281 = vand.u32 %v2217, 31
    %vm2282 = vcmp.eq.s32.totalorder %v2218, %v290
    %vm2283 = vcmp.eq.s32.totalorder %v2219, %v290
    %vm2284 = vcmp.eq.s32.totalorder %v2220, %v290
    %vm2285 = vcmp.eq.s32.totalorder %v2221, %v290
    %vm2286 = vcmp.eq.s32.totalorder %v2222, %v290
    %vm2287 = vcmp.eq.s32.totalorder %v2223, %v290
    %vm2288 = vcmp.eq.s32.totalorder %v2224, %v290
    %vm2289 = vcmp.eq.s32.totalorder %v2225, %v290
    %vm2290 = vcmp.eq.s32.totalorder %v2226, %v290
    %vm2291 = vcmp.eq.s32.totalorder %v2227, %v290
    %vm2292 = vcmp.eq.s32.totalorder %v2228, %v290
    %vm2293 = vcmp.eq.s32.totalorder %v2229, %v290
    %vm2294 = vcmp.eq.s32.totalorder %v2230, %v290
    %vm2295 = vcmp.eq.s32.totalorder %v2231, %v290
    %vm2296 = vcmp.eq.s32.totalorder %v2232, %v290
    %vm2297 = vcmp.eq.s32.totalorder %v2233, %v290
    %vm2298 = vcmp.eq.s32.totalorder %v2234, %v290
    %vm2299 = vcmp.eq.s32.totalorder %v2235, %v290
    %vm2300 = vcmp.eq.s32.totalorder %v2236, %v290
    %vm2301 = vcmp.eq.s32.totalorder %v2237, %v290
    %vm2302 = vcmp.eq.s32.totalorder %v2238, %v290
    %vm2303 = vcmp.eq.s32.totalorder %v2239, %v290
    %vm2304 = vcmp.eq.s32.totalorder %v2240, %v290
    %vm2305 = vcmp.eq.s32.totalorder %v2241, %v290
    %vm2306 = vcmp.eq.s32.totalorder %v2242, %v290
    %vm2307 = vcmp.eq.s32.totalorder %v2243, %v290
    %vm2308 = vcmp.eq.s32.totalorder %v2244, %v290
    %vm2309 = vcmp.eq.s32.totalorder %v2245, %v290
    %vm2310 = vcmp.eq.s32.totalorder %v2246, %v290
    %vm2311 = vcmp.eq.s32.totalorder %v2247, %v290
    %vm2312 = vcmp.eq.s32.totalorder %v2248, %v290
    %vm2313 = vcmp.eq.s32.totalorder %v2249, %v290
    %vm2314 = vcmp.eq.s32.totalorder %v2250, %v290
    %vm2315 = vcmp.eq.s32.totalorder %v2251, %v290
    %vm2316 = vcmp.eq.s32.totalorder %v2252, %v290
    %vm2317 = vcmp.eq.s32.totalorder %v2253, %v290
    %vm2318 = vcmp.eq.s32.totalorder %v2254, %v290
    %vm2319 = vcmp.eq.s32.totalorder %v2255, %v290
    %vm2320 = vcmp.eq.s32.totalorder %v2256, %v290
    %vm2321 = vcmp.eq.s32.totalorder %v2257, %v290
    %vm2322 = vcmp.eq.s32.totalorder %v2258, %v290
    %vm2323 = vcmp.eq.s32.totalorder %v2259, %v290
    %vm2324 = vcmp.eq.s32.totalorder %v2260, %v290
    %vm2325 = vcmp.eq.s32.totalorder %v2261, %v290
    %vm2326 = vcmp.eq.s32.totalorder %v2262, %v290
    %vm2327 = vcmp.eq.s32.totalorder %v2263, %v290
    %vm2328 = vcmp.eq.s32.totalorder %v2264, %v290
    %vm2329 = vcmp.eq.s32.totalorder %v2265, %v290
    %vm2330 = vcmp.eq.s32.totalorder %v2266, %v290
    %vm2331 = vcmp.eq.s32.totalorder %v2267, %v290
    %vm2332 = vcmp.eq.s32.totalorder %v2268, %v290
    %vm2333 = vcmp.eq.s32.totalorder %v2269, %v290
    %vm2334 = vcmp.eq.s32.totalorder %v2270, %v290
    %vm2335 = vcmp.eq.s32.totalorder %v2271, %v290
    %vm2336 = vcmp.eq.s32.totalorder %v2272, %v290
    %vm2337 = vcmp.eq.s32.totalorder %v2273, %v290
    %vm2338 = vcmp.eq.s32.totalorder %v2274, %v290
    %vm2339 = vcmp.eq.s32.totalorder %v2275, %v290
    %vm2340 = vcmp.eq.s32.totalorder %v2276, %v290
    %vm2341 = vcmp.eq.s32.totalorder %v2277, %v290
    %vm2342 = vcmp.eq.s32.totalorder %v2278, %v290
    %vm2343 = vcmp.eq.s32.totalorder %v2279, %v290
    %vm2344 = vcmp.eq.s32.totalorder %v2280, %v290
    %vm2345 = vcmp.eq.s32.totalorder %v2281, %v290
    %v2346 = vsel %vm2282, 1.0, 0.0
    %v2347 = vsel %vm2283, 1.0, 0.0
    %v2348 = vsel %vm2284, 1.0, 0.0
    %v2349 = vsel %vm2285, 1.0, 0.0
    %v2350 = vsel %vm2286, 1.0, 0.0
    %v2351 = vsel %vm2287, 1.0, 0.0
    %v2352 = vsel %vm2288, 1.0, 0.0
    %v2353 = vsel %vm2289, 1.0, 0.0
    %v2354 = vsel %vm2290, 1.0, 0.0
    %v2355 = vsel %vm2291, 1.0, 0.0
    %v2356 = vsel %vm2292, 1.0, 0.0
    %v2357 = vsel %vm2293, 1.0, 0.0
    %v2358 = vsel %vm2294, 1.0, 0.0
    %v2359 = vsel %vm2295, 1.0, 0.0
    %v2360 = vsel %vm2296, 1.0, 0.0
    %v2361 = vsel %vm2297, 1.0, 0.0
    %v2362 = vsel %vm2298, 1.0, 0.0
    %v2363 = vsel %vm2299, 1.0, 0.0
    %v2364 = vsel %vm2300, 1.0, 0.0
    %v2365 = vsel %vm2301, 1.0, 0.0
    %v2366 = vsel %vm2302, 1.0, 0.0
    %v2367 = vsel %vm2303, 1.0, 0.0
    %v2368 = vsel %vm2304, 1.0, 0.0
    %v2369 = vsel %vm2305, 1.0, 0.0
    %v2370 = vsel %vm2306, 1.0, 0.0
    %v2371 = vsel %vm2307, 1.0, 0.0
    %v2372 = vsel %vm2308, 1.0, 0.0
    %v2373 = vsel %vm2309, 1.0, 0.0
    %v2374 = vsel %vm2310, 1.0, 0.0
    %v2375 = vsel %vm2311, 1.0, 0.0
    %v2376 = vsel %vm2312, 1.0, 0.0
    %v2377 = vsel %vm2313, 1.0, 0.0
    %v2378 = vsel %vm2314, 1.0, 0.0
    %v2379 = vsel %vm2315, 1.0, 0.0
    %v2380 = vsel %vm2316, 1.0, 0.0
    %v2381 = vsel %vm2317, 1.0, 0.0
    %v2382 = vsel %vm2318, 1.0, 0.0
    %v2383 = vsel %vm2319, 1.0, 0.0
    %v2384 = vsel %vm2320, 1.0, 0.0
    %v2385 = vsel %vm2321, 1.0, 0.0
    %v2386 = vsel %vm2322, 1.0, 0.0
    %v2387 = vsel %vm2323, 1.0, 0.0
    %v2388 = vsel %vm2324, 1.0, 0.0
    %v2389 = vsel %vm2325, 1.0, 0.0
    %v2390 = vsel %vm2326, 1.0, 0.0
    %v2391 = vsel %vm2327, 1.0, 0.0
    %v2392 = vsel %vm2328, 1.0, 0.0
    %v2393 = vsel %vm2329, 1.0, 0.0
    %v2394 = vsel %vm2330, 1.0, 0.0
    %v2395 = vsel %vm2331, 1.0, 0.0
    %v2396 = vsel %vm2332, 1.0, 0.0
    %v2397 = vsel %vm2333, 1.0, 0.0
    %v2398 = vsel %vm2334, 1.0, 0.0
    %v2399 = vsel %vm2335, 1.0, 0.0
    %v2400 = vsel %vm2336, 1.0, 0.0
    %v2401 = vsel %vm2337, 1.0, 0.0
    %v2402 = vsel %vm2338, 1.0, 0.0
    %v2403 = vsel %vm2339, 1.0, 0.0
    %v2404 = vsel %vm2340, 1.0, 0.0
    %v2405 = vsel %vm2341, 1.0, 0.0
    %v2406 = vsel %vm2342, 1.0, 0.0
    %v2407 = vsel %vm2343, 1.0, 0.0
    %v2408 = vsel %vm2344, 1.0, 0.0
    %v2409 = vsel %vm2345, 1.0, 0.0
    %2410 = vmatprep.subr.mxu0 0.0
    %2411 = vmatpush1.msra.mxu0 %v2346
    %2412 = vmatprep.subr.mxu0 0.0
    %2413 = vmatpush1.msra.mxu0 %v2347
    %2414 = vmatprep.subr.mxu0 0.0
    %2415 = vmatpush1.msra.mxu0 %v2348
    %2416 = vmatprep.subr.mxu0 0.0
    %2417 = vmatpush1.msra.mxu0 %v2349
    %2418 = vmatprep.subr.mxu0 0.0
    %2419 = vmatpush1.msra.mxu0 %v2350
    %2420 = vmatprep.subr.mxu0 0.0
    %2421 = vmatpush1.msra.mxu0 %v2351
    %2422 = vmatprep.subr.mxu0 0.0
    %2423 = vmatpush1.msra.mxu0 %v2352
    %2424 = vmatprep.subr.mxu0 0.0
    %2425 = vmatpush1.msra.mxu0 %v2353
    %2426 = vmatprep.subr.mxu0 0.0
    %2427 = vmatpush1.msra.mxu0 %v2354
    %2428 = vmatprep.subr.mxu0 0.0
    %2429 = vmatpush1.msra.mxu0 %v2355
    %2430 = vmatprep.subr.mxu0 0.0
    %2431 = vmatpush1.msra.mxu0 %v2356
    %2432 = vmatprep.subr.mxu0 0.0
    %2433 = vmatpush1.msra.mxu0 %v2357
    %2434 = vmatprep.subr.mxu0 0.0
    %2435 = vmatpush1.msra.mxu0 %v2358
    %2436 = vmatprep.subr.mxu0 0.0
    %2437 = vmatpush1.msra.mxu0 %v2359
    %2438 = vmatprep.subr.mxu0 0.0
    %2439 = vmatpush1.msra.mxu0 %v2360
    %2440 = vmatprep.subr.mxu0 0.0
    %2441 = vmatpush1.msra.mxu0 %v2361
    %2442 = vmatprep.subr.mxu0 0.0
    %2443 = vmatpush1.msra.mxu0 %v2362
    %2444 = vmatprep.subr.mxu0 0.0
    %2445 = vmatpush1.msra.mxu0 %v2363
    %2446 = vmatprep.subr.mxu0 0.0
    %2447 = vmatpush1.msra.mxu0 %v2364
    %2448 = vmatprep.subr.mxu0 0.0
    %2449 = vmatpush1.msra.mxu0 %v2365
    %2450 = vmatprep.subr.mxu0 0.0
    %2451 = vmatpush1.msra.mxu0 %v2366
    %2452 = vmatprep.subr.mxu0 0.0
    %2453 = vmatpush1.msra.mxu0 %v2367
    %2454 = vmatprep.subr.mxu0 0.0
    %2455 = vmatpush1.msra.mxu0 %v2368
    %2456 = vmatprep.subr.mxu0 0.0
    %2457 = vmatpush1.msra.mxu0 %v2369
    %2458 = vmatprep.subr.mxu0 0.0
    %2459 = vmatpush1.msra.mxu0 %v2370
    %2460 = vmatprep.subr.mxu0 0.0
    %2461 = vmatpush1.msra.mxu0 %v2371
    %2462 = vmatprep.subr.mxu0 0.0
    %2463 = vmatpush1.msra.mxu0 %v2372
    %2464 = vmatprep.subr.mxu0 0.0
    %2465 = vmatpush1.msra.mxu0 %v2373
    %2466 = vmatprep.subr.mxu0 0.0
    %2467 = vmatpush1.msra.mxu0 %v2374
    %2468 = vmatprep.subr.mxu0 0.0
    %2469 = vmatpush1.msra.mxu0 %v2375
    %2470 = vmatprep.subr.mxu0 0.0
    %2471 = vmatpush1.msra.mxu0 %v2376
    %2472 = vmatprep.subr.mxu0 0.0
    %2473 = vmatpush1.msra.mxu0 %v2377
    %2474 = vmatprep.mubr.f32.mxu0 %v2143
    %2475 = vmatmul.mubr.f32.gmra.mrb[0].mxu0 %v2142
    %v2476 = vpop.f32.mrb[0].mxu0
    %v2477 = vadd.f32 0.0, %v2476
    %v2478 = vpop.f32.mrb[0].mxu0
    %2479 = vmatprep.mubr.f32.mxu0 %v2147
    %2480 = vmatmul.mubr.f32.gmra.mrb[0].mxu0 %v2146
    %v2481 = vpop.f32.mrb[0].mxu0
    %v2482 = vadd.f32 0.0, %v2481
    %v2483 = vpop.f32.mrb[0].mxu0
    %2484 = vmatprep.mubr.f32.mxu0 %v2151
    %2485 = vmatmul.mubr.f32.gmra.mrb[0].mxu0 %v2150
    %v2486 = vpop.f32.mrb[0].mxu0
    %v2487 = vadd.f32 0.0, %v2486
    %v2488 = vpop.f32.mrb[0].mxu0
    %2489 = vmatprep.mubr.f32.mxu0 %v2155
    %2490 = vmatmul.mubr.f32.gmra.mrb[0].mxu0 %v2154
    %v2491 = vpop.f32.mrb[0].mxu0
    %v2492 = vadd.f32 0.0, %v2491
    %v2493 = vpop.f32.mrb[0].mxu0
    %2494 = vdwg.mxu0
    %2495 = vmatprep.subr.mxu0 0.0
    %2496 = vmatpush1.msra.mxu0 %v2378
    %2497 = vmatprep.subr.mxu0 0.0
    %2498 = vmatpush1.msra.mxu0 %v2379
    %2499 = vmatprep.subr.mxu0 0.0
    %2500 = vmatpush1.msra.mxu0 %v2380
    %2501 = vmatprep.subr.mxu0 0.0
    %2502 = vmatpush1.msra.mxu0 %v2381
    %2503 = vmatprep.subr.mxu0 0.0
    %2504 = vmatpush1.msra.mxu0 %v2382
    %2505 = vmatprep.subr.mxu0 0.0
    %2506 = vmatpush1.msra.mxu0 %v2383
    %2507 = vmatprep.subr.mxu0 0.0
    %2508 = vmatpush1.msra.mxu0 %v2384
    %2509 = vmatprep.subr.mxu0 0.0
    %2510 = vmatpush1.msra.mxu0 %v2385
    %2511 = vmatprep.subr.mxu0 0.0
    %2512 = vmatpush1.msra.mxu0 %v2386
    %2513 = vmatprep.subr.mxu0 0.0
    %2514 = vmatpush1.msra.mxu0 %v2387
    %2515 = vmatprep.subr.mxu0 0.0
    %2516 = vmatpush1.msra.mxu0 %v2388
    %2517 = vmatprep.subr.mxu0 0.0
    %2518 = vmatpush1.msra.mxu0 %v2389
    %2519 = vmatprep.subr.mxu0 0.0
    %2520 = vmatpush1.msra.mxu0 %v2390
    %2521 = vmatprep.subr.mxu0 0.0
    %2522 = vmatpush1.msra.mxu0 %v2391
    %2523 = vmatprep.subr.mxu0 0.0
    %2524 = vmatpush1.msra.mxu0 %v2392
    %2525 = vmatprep.subr.mxu0 0.0
    %2526 = vmatpush1.msra.mxu0 %v2393
    %2527 = vmatprep.subr.mxu0 0.0
    %2528 = vmatpush1.msra.mxu0 %v2394
    %2529 = vmatprep.subr.mxu0 0.0
    %2530 = vmatpush1.msra.mxu0 %v2395
    %2531 = vmatprep.subr.mxu0 0.0
    %2532 = vmatpush1.msra.mxu0 %v2396
    %2533 = vmatprep.subr.mxu0 0.0
    %2534 = vmatpush1.msra.mxu0 %v2397
    %2535 = vmatprep.subr.mxu0 0.0
    %2536 = vmatpush1.msra.mxu0 %v2398
    %2537 = vmatprep.subr.mxu0 0.0
    %2538 = vmatpush1.msra.mxu0 %v2399
    %2539 = vmatprep.subr.mxu0 0.0
    %2540 = vmatpush1.msra.mxu0 %v2400
    %2541 = vmatprep.subr.mxu0 0.0
    %2542 = vmatpush1.msra.mxu0 %v2401
    %2543 = vmatprep.subr.mxu0 0.0
    %2544 = vmatpush1.msra.mxu0 %v2402
    %2545 = vmatprep.subr.mxu0 0.0
    %2546 = vmatpush1.msra.mxu0 %v2403
    %2547 = vmatprep.subr.mxu0 0.0
    %2548 = vmatpush1.msra.mxu0 %v2404
    %2549 = vmatprep.subr.mxu0 0.0
    %2550 = vmatpush1.msra.mxu0 %v2405
    %2551 = vmatprep.subr.mxu0 0.0
    %2552 = vmatpush1.msra.mxu0 %v2406
    %2553 = vmatprep.subr.mxu0 0.0
    %2554 = vmatpush1.msra.mxu0 %v2407
    %2555 = vmatprep.subr.mxu0 0.0
    %2556 = vmatpush1.msra.mxu0 %v2408
    %2557 = vmatprep.subr.mxu0 0.0
    %2558 = vmatpush1.msra.mxu0 %v2409
    %2559 = vmatprep.mubr.f32.mxu0 %v2145
    %2560 = vmatmul.mubr.f32.gmra.mrb[0].mxu0 %v2144
    %v2561 = vpop.f32.mrb[0].mxu0
    %v2562 = vadd.f32 %v2477, %v2561
    %v2563 = vpop.f32.mrb[0].mxu0
    %2564 = vmatprep.mubr.f32.mxu0 %v2149
    %2565 = vmatmul.mubr.f32.gmra.mrb[0].mxu0 %v2148
    %v2566 = vpop.f32.mrb[0].mxu0
    %v2567 = vadd.f32 %v2482, %v2566
    %v2568 = vpop.f32.mrb[0].mxu0
    %2569 = vmatprep.mubr.f32.mxu0 %v2153
    %2570 = vmatmul.mubr.f32.gmra.mrb[0].mxu0 %v2152
    %v2571 = vpop.f32.mrb[0].mxu0
    %v2572 = vadd.f32 %v2487, %v2571
    %v2573 = vpop.f32.mrb[0].mxu0
    %2574 = vmatprep.mubr.f32.mxu0 %v2157
    %2575 = vmatmul.mubr.f32.gmra.mrb[0].mxu0 %v2156
    %v2576 = vpop.f32.mrb[0].mxu0
    %v2577 = vadd.f32 %v2492, %v2576
    %v2578 = vpop.f32.mrb[0].mxu0
    %2579 = vdwg.mxu0
    %v2580 = vshra.s32 %v290, 4
    %vm2581 = vcmp.eq.s32.totalorder %v285, %v2580
    %v2582 = vsel %vm2581, 1.0, 0.0
    %v2584 = vsel %vm708, %v2582, 0
    %2586 = vmatprep.subr.mxu0 0.0
    %2587 = vmatpush1.msra.mxu0 %v2562
    %2588 = vmatprep.subr.mxu0 0.0
    %2589 = vmatpush1.msra.mxu0 %v2567
    %2590 = vmatprep.subr.mxu0 0.0
    %2591 = vmatpush1.msra.mxu0 %v2572
    %2592 = vmatprep.subr.mxu0 0.0
    %2593 = vmatpush1.msra.mxu0 %v2577
    %2594 = vmatprep.subr.mxu0 0.0
    %2595 = vmatpush1.msra.mxu0 0.0
    %2596 = vmatprep.subr.mxu0 0.0
    %2597 = vmatpush1.msra.mxu0 0.0
    %2598 = vmatprep.subr.mxu0 0.0
    %2599 = vmatpush1.msra.mxu0 0.0
    %2600 = vmatprep.subr.mxu0 0.0
    %2601 = vmatpush1.msra.mxu0 0.0
    %2602 = vmatprep.subr.mxu0 0.0
    %2603 = vmatpush1.msra.mxu0 0.0
    %2604 = vmatprep.subr.mxu0 0.0
    %2605 = vmatpush1.msra.mxu0 0.0
    %2606 = vmatprep.subr.mxu0 0.0
    %2607 = vmatpush1.msra.mxu0 0.0
    %2608 = vmatprep.subr.mxu0 0.0
    %2609 = vmatpush1.msra.mxu0 0.0
    %2610 = vmatprep.subr.mxu0 0.0
    %2611 = vmatpush1.msra.mxu0 0.0
    %2612 = vmatprep.subr.mxu0 0.0
    %2613 = vmatpush1.msra.mxu0 0.0
    %2614 = vmatprep.subr.mxu0 0.0
    %2615 = vmatpush1.msra.mxu0 0.0
    %2616 = vmatprep.subr.mxu0 0.0
    %2617 = vmatpush1.msra.mxu0 0.0
    %2618 = vmatprep.subr.mxu0 0.0
    %2619 = vmatpush1.msra.mxu0 0.0
    %2620 = vmatprep.subr.mxu0 0.0
    %2621 = vmatpush1.msra.mxu0 0.0
    %2622 = vmatprep.subr.mxu0 0.0
    %2623 = vmatpush1.msra.mxu0 0.0
    %2624 = vmatprep.subr.mxu0 0.0
    %2625 = vmatpush1.msra.mxu0 0.0
    %2626 = vmatprep.subr.mxu0 0.0
    %2627 = vmatpush1.msra.mxu0 0.0
    %2628 = vmatprep.subr.mxu0 0.0
    %2629 = vmatpush1.msra.mxu0 0.0
    %2630 = vmatprep.subr.mxu0 0.0
    %2631 = vmatpush1.msra.mxu0 0.0
    %2632 = vmatprep.subr.mxu0 0.0
    %2633 = vmatpush1.msra.mxu0 0.0
    %2634 = vmatprep.subr.mxu0 0.0
    %2635 = vmatpush1.msra.mxu0 0.0
    %2636 = vmatprep.subr.mxu0 0.0
    %2637 = vmatpush1.msra.mxu0 0.0
    %2638 = vmatprep.subr.mxu0 0.0
    %2639 = vmatpush1.msra.mxu0 0.0
    %2640 = vmatprep.subr.mxu0 0.0
    %2641 = vmatpush1.msra.mxu0 0.0
    %2642 = vmatprep.subr.mxu0 0.0
    %2643 = vmatpush1.msra.mxu0 0.0
    %2644 = vmatprep.subr.mxu0 0.0
    %2645 = vmatpush1.msra.mxu0 0.0
    %2646 = vmatprep.subr.mxu0 0.0
    %2647 = vmatpush1.msra.mxu0 0.0
    %2648 = vmatprep.subr.mxu0 0.0
    %2649 = vmatpush1.msra.mxu0 0.0
    %2650 = vmatprep.mubr.f32.mxu0 0.0
    %2651 = vmatmul.mubr.f32.gmra.mrb[0].mxu0 %v2584
    %v2652 = vpop.f32.mrb[0].mxu0
    %v2653 = vadd.f32 0.0, %v2652
    %v2654 = vpop.f32.mrb[0].mxu0
    %2655 = vdwg.mxu0
    %vm2656 = vcmask 254976
    %2657 = vst.msk [vmem:[#allocation4] sm:$0x3] %vm2656, %v2653
    // Predicated region
    $region30: #{masked_common_conv_forward.1} parent=1 // pred_check
      _
    $region31: #{masked_common_conv_forward.1} parent=1 // pred_check_branch
      %2659 = sbr.rel (0) target = $region33
    $region32: #{masked_common_conv_forward.1} parent=1 // pred_region
      %s2661 = ssub.s32 32, 32
      %2662 = vsyncadd [#allocation5], %s2661
      %s2664 = sshll.u32 [#allocation4], 4
      %s2665 = int_to_ptr.vmem [resolvable:$true] %s2664
      %2667 = dma.vmem_to_hbm [thread:$0]  %s2665, 32, %s8, [#allocation5]
    $region33: #{masked_common_conv_forward.1} parent=1 // pred_fallthru
      _
    // Predicated region
    $region34: #{masked_common_conv_forward.1} parent=1 // pred_check
      _
    $region35: #{masked_common_conv_forward.1} parent=1 // pred_check_branch
      %2669 = sbr.rel (0) target = $region37
    $region36: #{masked_common_conv_forward.1} parent=1 // pred_region
      %2670 = dma.done [#allocation5], 32
    $region37: #{masked_common_conv_forward.1} parent=1 // pred_fallthru
      _
    %2671 = vsyncpa [#allocation5], 1

</llo_original>
